<compile_context>
chip_gen: v6e
topology: v6e:2x2x1
jax: 0.10.0
libtpu: 0.0.40
codegen_flags: <defaults>
</compile_context>

<pallas_src>
import math

import jax
import jax.numpy as jnp
from jax.experimental import pallas as pl
from jax.experimental.pallas import tpu as pltpu


_SELU_ALPHA = 1.6732632423543772848170429916717
_SELU_SCALE = 1.0507009873554804934193349852946


def _selu(x):
    return _SELU_SCALE * jnp.where(
        x > 0, x, _SELU_ALPHA * (jnp.exp(jnp.minimum(x, 0.0)) - 1.0))


# ---------------------------------------------------------------------------
# Fused Pallas kernel: encoder GRU + decoder GRU + dense head (one batch tile)
# ---------------------------------------------------------------------------

def fsnet_kernel(xcat_ref,                                    # (T, TB, 6H)
                 wx_e_ref, bx_e_ref, whh_e_ref, bhn_e_ref,    # encoder params
                 wih_d_ref, bx_d_ref, whh_d_ref, bhn_d_ref,   # decoder params
                 w1_ref, b1_ref, w2_ref, b2_ref,              # dense head
                 out_ref):                                    # (TB, num_class)
    f32 = jnp.float32
    TB = out_ref.shape[0]
    H2 = whh_e_ref.shape[0]          # 2 * hidden  (both directions, lane-concat)
    H6 = whh_e_ref.shape[1]          # 6 * hidden  (3 gates fused along lanes)
    H4 = H6 - H2                     # width of the fused r|z block
    T = xcat_ref.shape[0]

    # ---------------- encoder (bidirectional GRU, input_size = 1) -----------
    # Hoisted input projection for every step / direction / gate at once.
    # Pure VPU (K == 1 per direction): gx = x_broadcast * w + b.
    # r/z hh-biases are already folded into bx.
    gx = (xcat_ref[...] * wx_e_ref[...][None, :, :]
          + bx_e_ref[...][None, :, :])                        # (T, TB, 6H)
    gx_rz, gx_n = gx[:, :, :H4], gx[:, :, H4:]

    whh = whh_e_ref[...]                                      # (2H, 6H) fused gates
    bhn = jnp.broadcast_to(bhn_e_ref[...], (TB, H2))          # hoisted broadcast

    h = jnp.zeros((TB, H2), f32)
    for t in range(T):                                        # fully unrolled
        gh = jnp.dot(h, whh, preferred_element_type=f32)      # ONE MXU op / step
        rz = jax.nn.sigmoid(gx_rz[t] + gh[:, :H4])
        r, z = rz[:, :H2], rz[:, H2:]
        n = jnp.tanh(gx_n[t] + r * (gh[:, H4:] + bhn))
        h = (1.0 - z) * n + z * h
    ze = h                      # (TB, 2H) == h_n.permute(1,0,2).reshape(B, -1)

    # ---------------- decoder (bidirectional GRU, constant input ze) --------
    # Decoder input is the same ze at every step for both directions, so its
    # entire input projection is one hoisted matmul.
    gx = (jnp.dot(ze, wih_d_ref[...], preferred_element_type=f32)
          + bx_d_ref[...])                                    # (TB, 6H)
    gx_rz, gx_n = gx[:, :H4], gx[:, H4:]

    whh = whh_d_ref[...]
    bhn = jnp.broadcast_to(bhn_d_ref[...], (TB, H2))

    h = jnp.zeros((TB, H2), f32)
    for _ in range(T):                                        # fully unrolled
        gh = jnp.dot(h, whh, preferred_element_type=f32)
        rz = jax.nn.sigmoid(gx_rz + gh[:, :H4])
        r, z = rz[:, :H2], rz[:, H2:]
        n = jnp.tanh(gx_n + r * (gh[:, H4:] + bhn))
        h = (1.0 - z) * n + z * h
    zd = h

    # ---------------- dense head ---------------------------------------------
    # z = [ze, zd, ze*zd, |ze-zd|] -> four matmul blocks, no lane concatenate.
    h1 = (jnp.dot(ze, w1_ref[0], preferred_element_type=f32)
          + jnp.dot(zd, w1_ref[1], preferred_element_type=f32)
          + jnp.dot(ze * zd, w1_ref[2], preferred_element_type=f32)
          + jnp.dot(jnp.abs(ze - zd), w1_ref[3], preferred_element_type=f32)
          + b1_ref[...])
    h1 = _selu(h1)
    out_ref[...] = _selu(jnp.dot(h1, w2_ref[...], preferred_element_type=f32)
                         + b2_ref[...])


# ---------------------------------------------------------------------------
# Parameter init (PyTorch layout) and re-layout into the fused-kernel format
# ---------------------------------------------------------------------------

def init_bigru_pytorch(key, input_size, hidden):
    """PyTorch nn.GRU(bidirectional=True, num_layers=1) parameter layout."""
    k = 1.0 / math.sqrt(hidden)
    dirs = []
    for _ in range(2):
        key, k0, k1, k2, k3 = jax.random.split(key, 5)
        dirs.append({
            "w_ih": jax.random.uniform(k0, (3 * hidden, input_size), jnp.float32, -k, k),
            "w_hh": jax.random.uniform(k1, (3 * hidden, hidden), jnp.float32, -k, k),
            "b_ih": jax.random.uniform(k2, (3 * hidden,), jnp.float32, -k, k),
            "b_hh": jax.random.uniform(k3, (3 * hidden,), jnp.float32, -k, k),
        })
    return dirs, key


def init_linear_pytorch(key, in_f, out_f):
    k = 1.0 / math.sqrt(in_f)
    key, kw, kb = jax.random.split(key, 3)
    w = jax.random.uniform(kw, (out_f, in_f), jnp.float32, -k, k)
    b = jax.random.uniform(kb, (out_f,), jnp.float32, -k, k)
    return (w, b), key


def _block_diag(a, b):
    ra, ca = a.shape
    rb, cb = b.shape
    return jnp.concatenate(
        [jnp.concatenate([a, jnp.zeros((ra, cb), a.dtype)], axis=1),
         jnp.concatenate([jnp.zeros((rb, ca), b.dtype), b], axis=1)], axis=0)


def pack_bigru_fused(dirs, hidden, input_is_scalar):
    """Re-lay a PyTorch bidirectional single-layer GRU into the fused layout.

    Lane layout (6H lanes): [r_fwd | r_bwd | z_fwd | z_bwd | n_fwd | n_bwd].
    Recurrent weights are per-gate block-diagonal over the two directions and
    all 3 gates are concatenated along lanes -> whh is (2H, 6H) and one matmul
    per step serves both directions and all gates.
    """
    H = hidden
    fwd, bwd = dirs

    def gw(mat, g):                 # (3H, X) -> per-gate, transposed (X, H)
        return mat[g * H:(g + 1) * H, :].T

    def gb(vec, g):
        return vec[g * H:(g + 1) * H]

    wih, whh, bx = [], [], []
    for g in range(3):              # PyTorch gate order: r, z, n
        wif, wib = gw(fwd["w_ih"], g), gw(bwd["w_ih"], g)     # (in, H) each
        if input_is_scalar:
            wih.append(jnp.concatenate([wif[0], wib[0]]))     # (2H,) row vector
        else:
            wih.append(jnp.concatenate([wif, wib], axis=1))   # (in, 2H)
        whh.append(_block_diag(gw(fwd["w_hh"], g), gw(bwd["w_hh"], g)))
        bi = jnp.concatenate([gb(fwd["b_ih"], g), gb(bwd["b_ih"], g)])
        bh = jnp.concatenate([gb(fwd["b_hh"], g), gb(bwd["b_hh"], g)])
        # r/z: fold hh-bias into the hoisted input projection;
        # n: hh-bias must stay inside the r*(...) term (PyTorch GRU semantics).
        bx.append(bi + bh if g < 2 else bi)
    bhn = jnp.concatenate([gb(fwd["b_hh"], 2), gb(bwd["b_hh"], 2)])

    packed = {
        "whh": jnp.concatenate(whh, axis=1),                  # (2H, 6H)
        "bx": jnp.concatenate(bx)[None, :],                   # (1, 6H)
        "bhn": bhn[None, :],                                  # (1, 2H)
    }
    if input_is_scalar:
        packed["wx"] = jnp.concatenate(wih)[None, :]          # (1, 6H)
    else:
        packed["wih"] = jnp.concatenate(wih, axis=1)          # (2H, 6H)
    return packed


def pack_dense(lin1, lin2, hidden):
    (w1, b1), (w2, b2) = lin1, lin2
    h2 = 2 * hidden
    w1t = w1.T                                     # (8H, 64)
    return {
        "w1": w1t.reshape(4, h2, w1t.shape[1]),    # blocks: ze, zd, ze*zd, |ze-zd|
        "b1": b1[None, :],                         # (1, 64)
        "w2": w2.T,                                # (64, C)
        "b2": b2[None, :],                         # (1, C)
    }


# ---------------------------------------------------------------------------
# Forward wrapper
# ---------------------------------------------------------------------------

def fsnet_forward(inputs, params, *, batch_tile=8):
    """inputs: (B, sequence_len) values, as in FSNet.forward.

    The reference model feeds raw values cast to float (inputs.unsqueeze(2)
    .float()) into the encoder GRU — there is NO embedding lookup in forward().
    """
    B, T = inputs.shape
    enc, dec = params["enc"], params["dec"]
    H2, H6 = enc["whh"].shape                   # 2*hidden, 6*hidden
    H = H2 // 2
    C = params["w2"].shape[1]

    # Pad the batch to whole, sublane-aligned batch tiles (grid over tiles).
    n_tiles = pl.cdiv(B, batch_tile)
    B_pad = n_tiles * batch_tile
    x = inputs.astype(jnp.float32)
    if B_pad != B:
        x = jnp.pad(x, ((0, B_pad - B), (0, 0)))

    # Layout plumbing (stays in XLA): broadcast the forward / time-reversed
    # scalar input streams over the per-gate lanes -> (T, B_pad, 6H).
    xf = x.T                                           # (T, B_pad), time-major
    pair = jnp.stack([xf, xf[::-1]], axis=-1)          # (T, B_pad, 2)
    xcat = jnp.tile(jnp.repeat(pair, H, axis=-1), (1, 1, 3))   # (T, B_pad, 6H)

    def full(shape):
        return pl.BlockSpec(shape, lambda i, _n=len(shape): (0,) * _n)

    weights = (enc["wx"], enc["bx"], enc["whh"], enc["bhn"],
               dec["wih"], dec["bx"], dec["whh"], dec["bhn"],
               params["w1"], params["b1"], params["w2"], params["b2"])
    flops = B_pad * (2 * T * 2 * H2 * H6          # enc+dec recurrent matmuls
                     + 2 * H2 * H6                # decoder input projection
                     + 2 * (4 * H2 * 64 + 64 * C))
    transcendentals = B_pad * (2 * T * H6 + 64 + C)
    bytes_accessed = 4 * (xcat.size + B_pad * C + sum(w.size for w in weights))

    out = pl.pallas_call(
        fsnet_kernel,
        out_shape=jax.ShapeDtypeStruct((B_pad, C), jnp.float32),
        grid=(n_tiles,),
        in_specs=[
            pl.BlockSpec((T, batch_tile, H6), lambda i: (0, i, 0)),   # xcat
            full((1, H6)), full((1, H6)), full((H2, H6)), full((1, H2)),   # enc
            full((H2, H6)), full((1, H6)), full((H2, H6)), full((1, H2)),  # dec
            full((4, H2, 64)), full((1, 64)), full((64, C)), full((1, C)),  # head
        ],
        out_specs=pl.BlockSpec((batch_tile, C), lambda i: (i, 0)),
        compiler_params=pltpu.CompilerParams(
            dimension_semantics=("parallel",)),
        cost_estimate=pl.CostEstimate(
            flops=int(flops),
            transcendentals=int(transcendentals),
            bytes_accessed=int(bytes_accessed)),
    )(xcat,
      enc["wx"], enc["bx"], enc["whh"], enc["bhn"],
      dec["wih"], dec["bx"], dec["whh"], dec["bhn"],
      params["w1"], params["b1"], params["w2"], params["b2"])
    return out[:B]


# ---------------------------------------------------------------------------
# main
# ---------------------------------------------------------------------------

if __name__ == "__main__":
    cfg = {
        "vocab_size": 16,
        "emb_dim": 8,
        "hidden_size": 32,
        "num_layers": 1,       # fused kernel implements the configured L=1 case
        "num_direction": 2,    # bidirectional, as in the PyTorch module config
        "num_class": 4,
        "sequence_len": 8,
    }
    assert cfg["num_layers"] == 1 and cfg["num_direction"] == 2
    # TODO(synk): num_layers > 1 GRU stacking is not implemented in the fused
    # kernel (the reference configuration uses num_layers=1).
    B = 2
    H, T = cfg["hidden_size"], cfg["sequence_len"]

    key = jax.random.PRNGKey(0)
    enc_pt, key = init_bigru_pytorch(key, 1, H)
    dec_pt, key = init_bigru_pytorch(key, 2 * H, H)
    lin1, key = init_linear_pytorch(key, 2 * 4 * H, 64)
    lin2, key = init_linear_pytorch(key, 64, cfg["num_class"])
    # TODO(synk): self.reconstruct (Linear) is defined in __init__ but never
    # used in forward(); omitted.

    params = {
        "enc": pack_bigru_fused(enc_pt, H, input_is_scalar=True),
        "dec": pack_bigru_fused(dec_pt, H, input_is_scalar=False),
        **pack_dense(lin1, lin2, H),
    }

    key, kx = jax.random.split(key)
    x = jax.random.randint(kx, (B, T), 0, cfg["vocab_size"]).astype(jnp.int32)

    fwd = jax.jit(lambda xb: fsnet_forward(xb, params, batch_tile=8))
    out = jax.block_until_ready(fwd(x))
    assert out.shape == (B, cfg["num_class"]), out.shape
    assert bool(jnp.all(jnp.isfinite(out)))
    print("KERNEL_OK")
</pallas_src>

<mosaic_0001>
module attributes {stable_mosaic.version = 11 : i64} {
  func.func @fsnet_kernel(%arg0: i32, %arg1: memref<8x8x192xf32, #tpu.memory_space<vmem>>, %arg2: memref<1x192xf32, #tpu.memory_space<vmem>>, %arg3: memref<1x192xf32, #tpu.memory_space<vmem>>, %arg4: memref<64x192xf32, #tpu.memory_space<vmem>>, %arg5: memref<1x64xf32, #tpu.memory_space<vmem>>, %arg6: memref<64x192xf32, #tpu.memory_space<vmem>>, %arg7: memref<1x192xf32, #tpu.memory_space<vmem>>, %arg8: memref<64x192xf32, #tpu.memory_space<vmem>>, %arg9: memref<1x64xf32, #tpu.memory_space<vmem>>, %arg10: memref<4x64x64xf32, #tpu.memory_space<vmem>>, %arg11: memref<1x64xf32, #tpu.memory_space<vmem>>, %arg12: memref<64x4xf32, #tpu.memory_space<vmem>>, %arg13: memref<1x4xf32, #tpu.memory_space<vmem>>, %arg14: memref<8x4xf32, #tpu.memory_space<vmem>>) attributes {dimension_semantics = [#tpu.dimension_semantics<parallel>], iteration_bounds = array<i64: 1>, scalar_prefetch = 0 : i64, scratch_operands = 0 : i64, tpu.core_type = #tpu.core_type<tc>, window_params = [{transform_indices = @transform_0, window_bounds = array<i64: 8, 8, 192>}, {pipeline_mode = #tpu.pipeline_mode<synchronous>, transform_indices = @transform_1, window_bounds = array<i64: 1, 192>}, {pipeline_mode = #tpu.pipeline_mode<synchronous>, transform_indices = @transform_2, window_bounds = array<i64: 1, 192>}, {pipeline_mode = #tpu.pipeline_mode<synchronous>, transform_indices = @transform_3, window_bounds = array<i64: 64, 192>}, {pipeline_mode = #tpu.pipeline_mode<synchronous>, transform_indices = @transform_4, window_bounds = array<i64: 1, 64>}, {pipeline_mode = #tpu.pipeline_mode<synchronous>, transform_indices = @transform_5, window_bounds = array<i64: 64, 192>}, {pipeline_mode = #tpu.pipeline_mode<synchronous>, transform_indices = @transform_6, window_bounds = array<i64: 1, 192>}, {pipeline_mode = #tpu.pipeline_mode<synchronous>, transform_indices = @transform_7, window_bounds = array<i64: 64, 192>}, {pipeline_mode = #tpu.pipeline_mode<synchronous>, transform_indices = @transform_8, window_bounds = array<i64: 1, 64>}, {pipeline_mode = #tpu.pipeline_mode<synchronous>, transform_indices = @transform_9, window_bounds = array<i64: 4, 64, 64>}, {pipeline_mode = #tpu.pipeline_mode<synchronous>, transform_indices = @transform_10, window_bounds = array<i64: 1, 64>}, {pipeline_mode = #tpu.pipeline_mode<synchronous>, transform_indices = @transform_11, window_bounds = array<i64: 64, 4>}, {pipeline_mode = #tpu.pipeline_mode<synchronous>, transform_indices = @transform_12, window_bounds = array<i64: 1, 4>}, {transform_indices = @transform_13, window_bounds = array<i64: 8, 4>}]} {
    %c0 = arith.constant 0 : index
    %c0_0 = arith.constant 0 : index
    %c0_1 = arith.constant 0 : index
    %0 = vector.load %arg1[%c0, %c0_0, %c0_1] : memref<8x8x192xf32, #tpu.memory_space<vmem>>, vector<8x8x192xf32>
    %c0_2 = arith.constant 0 : index
    %c0_3 = arith.constant 0 : index
    %1 = vector.load %arg2[%c0_2, %c0_3] : memref<1x192xf32, #tpu.memory_space<vmem>>, vector<1x192xf32>
    %2 = vector.shape_cast %1 : vector<1x192xf32> to vector<1x1x192xf32>
    %3 = vector.broadcast %2 : vector<1x1x192xf32> to vector<8x8x192xf32>
    %4 = arith.mulf %0, %3 : vector<8x8x192xf32>
    %c0_4 = arith.constant 0 : index
    %c0_5 = arith.constant 0 : index
    %5 = vector.load %arg3[%c0_4, %c0_5] : memref<1x192xf32, #tpu.memory_space<vmem>>, vector<1x192xf32>
    %6 = vector.shape_cast %5 : vector<1x192xf32> to vector<1x1x192xf32>
    %7 = vector.broadcast %6 : vector<1x1x192xf32> to vector<8x8x192xf32>
    %8 = arith.addf %4, %7 : vector<8x8x192xf32>
    %9 = vector.extract_strided_slice %8 {offsets = [0, 0, 0], sizes = [8, 8, 128], strides = [1, 1, 1]} : vector<8x8x192xf32> to vector<8x8x128xf32>
    %10 = vector.extract_strided_slice %8 {offsets = [0, 0, 128], sizes = [8, 8, 64], strides = [1, 1, 1]} : vector<8x8x192xf32> to vector<8x8x64xf32>
    %c0_6 = arith.constant 0 : index
    %c0_7 = arith.constant 0 : index
    %11 = vector.load %arg4[%c0_6, %c0_7] : memref<64x192xf32, #tpu.memory_space<vmem>>, vector<64x192xf32>
    %c0_8 = arith.constant 0 : index
    %c0_9 = arith.constant 0 : index
    %12 = vector.load %arg5[%c0_8, %c0_9] : memref<1x64xf32, #tpu.memory_space<vmem>>, vector<1x64xf32>
    %13 = vector.shape_cast %12 : vector<1x64xf32> to vector<1x64xf32>
    %14 = vector.broadcast %13 : vector<1x64xf32> to vector<8x64xf32>
    %cst = arith.constant 0.000000e+00 : f32
    %15 = vector.broadcast %cst : f32 to vector<8x64xf32>
    %cst_10 = arith.constant dense<0.000000e+00> : vector<8x192xf32>
    %16 = tpu.matmul %15, %11, %cst_10 {dimension_numbers = #tpu.dot_dimension_numbers<[1], [0], [0], [1], [0, 0, 1, 1], [], []>} : vector<8x64xf32>, vector<64x192xf32>, vector<8x192xf32> -> vector<8x192xf32>
    %17 = vector.extract_strided_slice %9 {offsets = [0, 0, 0], sizes = [1, 8, 128], strides = [1, 1, 1]} : vector<8x8x128xf32> to vector<1x8x128xf32>
    %18 = vector.shape_cast %17 : vector<1x8x128xf32> to vector<8x128xf32>
    %19 = vector.extract_strided_slice %16 {offsets = [0, 0], sizes = [8, 128], strides = [1, 1]} : vector<8x192xf32> to vector<8x128xf32>
    %20 = arith.addf %18, %19 : vector<8x128xf32>
    %21 = arith.negf %20 : vector<8x128xf32>
    %22 = math.exp %21 : vector<8x128xf32>
    %cst_11 = arith.constant 1.000000e+00 : f32
    %23 = vector.broadcast %cst_11 : f32 to vector<8x128xf32>
    %24 = arith.addf %23, %22 : vector<8x128xf32>
    %25 = arith.divf %23, %24 : vector<8x128xf32>
    %26 = vector.extract_strided_slice %25 {offsets = [0, 0], sizes = [8, 64], strides = [1, 1]} : vector<8x128xf32> to vector<8x64xf32>
    %27 = vector.extract_strided_slice %25 {offsets = [0, 64], sizes = [8, 64], strides = [1, 1]} : vector<8x128xf32> to vector<8x64xf32>
    %28 = vector.extract_strided_slice %10 {offsets = [0, 0, 0], sizes = [1, 8, 64], strides = [1, 1, 1]} : vector<8x8x64xf32> to vector<1x8x64xf32>
    %29 = vector.shape_cast %28 : vector<1x8x64xf32> to vector<8x64xf32>
    %30 = vector.extract_strided_slice %16 {offsets = [0, 128], sizes = [8, 64], strides = [1, 1]} : vector<8x192xf32> to vector<8x64xf32>
    %31 = arith.addf %30, %14 : vector<8x64xf32>
    %32 = arith.mulf %26, %31 : vector<8x64xf32>
    %33 = arith.addf %29, %32 : vector<8x64xf32>
    %34 = math.tanh %33 : vector<8x64xf32>
    %cst_12 = arith.constant 1.000000e+00 : f32
    %35 = vector.broadcast %cst_12 : f32 to vector<8x64xf32>
    %36 = arith.subf %35, %27 : vector<8x64xf32>
    %37 = arith.mulf %36, %34 : vector<8x64xf32>
    %38 = arith.mulf %27, %15 : vector<8x64xf32>
    %39 = arith.addf %37, %38 : vector<8x64xf32>
    %cst_13 = arith.constant dense<0.000000e+00> : vector<8x192xf32>
    %40 = tpu.matmul %39, %11, %cst_13 {dimension_numbers = #tpu.dot_dimension_numbers<[1], [0], [0], [1], [0, 0, 1, 1], [], []>} : vector<8x64xf32>, vector<64x192xf32>, vector<8x192xf32> -> vector<8x192xf32>
    %41 = vector.extract_strided_slice %9 {offsets = [1, 0, 0], sizes = [1, 8, 128], strides = [1, 1, 1]} : vector<8x8x128xf32> to vector<1x8x128xf32>
    %42 = vector.shape_cast %41 : vector<1x8x128xf32> to vector<8x128xf32>
    %43 = vector.extract_strided_slice %40 {offsets = [0, 0], sizes = [8, 128], strides = [1, 1]} : vector<8x192xf32> to vector<8x128xf32>
    %44 = arith.addf %42, %43 : vector<8x128xf32>
    %45 = arith.negf %44 : vector<8x128xf32>
    %46 = math.exp %45 : vector<8x128xf32>
    %cst_14 = arith.constant 1.000000e+00 : f32
    %47 = vector.broadcast %cst_14 : f32 to vector<8x128xf32>
    %48 = arith.addf %47, %46 : vector<8x128xf32>
    %49 = arith.divf %47, %48 : vector<8x128xf32>
    %50 = vector.extract_strided_slice %49 {offsets = [0, 0], sizes = [8, 64], strides = [1, 1]} : vector<8x128xf32> to vector<8x64xf32>
    %51 = vector.extract_strided_slice %49 {offsets = [0, 64], sizes = [8, 64], strides = [1, 1]} : vector<8x128xf32> to vector<8x64xf32>
    %52 = vector.extract_strided_slice %10 {offsets = [1, 0, 0], sizes = [1, 8, 64], strides = [1, 1, 1]} : vector<8x8x64xf32> to vector<1x8x64xf32>
    %53 = vector.shape_cast %52 : vector<1x8x64xf32> to vector<8x64xf32>
    %54 = vector.extract_strided_slice %40 {offsets = [0, 128], sizes = [8, 64], strides = [1, 1]} : vector<8x192xf32> to vector<8x64xf32>
    %55 = arith.addf %54, %14 : vector<8x64xf32>
    %56 = arith.mulf %50, %55 : vector<8x64xf32>
    %57 = arith.addf %53, %56 : vector<8x64xf32>
    %58 = math.tanh %57 : vector<8x64xf32>
    %cst_15 = arith.constant 1.000000e+00 : f32
    %59 = vector.broadcast %cst_15 : f32 to vector<8x64xf32>
    %60 = arith.subf %59, %51 : vector<8x64xf32>
    %61 = arith.mulf %60, %58 : vector<8x64xf32>
    %62 = arith.mulf %51, %39 : vector<8x64xf32>
    %63 = arith.addf %61, %62 : vector<8x64xf32>
    %cst_16 = arith.constant dense<0.000000e+00> : vector<8x192xf32>
    %64 = tpu.matmul %63, %11, %cst_16 {dimension_numbers = #tpu.dot_dimension_numbers<[1], [0], [0], [1], [0, 0, 1, 1], [], []>} : vector<8x64xf32>, vector<64x192xf32>, vector<8x192xf32> -> vector<8x192xf32>
    %65 = vector.extract_strided_slice %9 {offsets = [2, 0, 0], sizes = [1, 8, 128], strides = [1, 1, 1]} : vector<8x8x128xf32> to vector<1x8x128xf32>
    %66 = vector.shape_cast %65 : vector<1x8x128xf32> to vector<8x128xf32>
    %67 = vector.extract_strided_slice %64 {offsets = [0, 0], sizes = [8, 128], strides = [1, 1]} : vector<8x192xf32> to vector<8x128xf32>
    %68 = arith.addf %66, %67 : vector<8x128xf32>
    %69 = arith.negf %68 : vector<8x128xf32>
    %70 = math.exp %69 : vector<8x128xf32>
    %cst_17 = arith.constant 1.000000e+00 : f32
    %71 = vector.broadcast %cst_17 : f32 to vector<8x128xf32>
    %72 = arith.addf %71, %70 : vector<8x128xf32>
    %73 = arith.divf %71, %72 : vector<8x128xf32>
    %74 = vector.extract_strided_slice %73 {offsets = [0, 0], sizes = [8, 64], strides = [1, 1]} : vector<8x128xf32> to vector<8x64xf32>
    %75 = vector.extract_strided_slice %73 {offsets = [0, 64], sizes = [8, 64], strides = [1, 1]} : vector<8x128xf32> to vector<8x64xf32>
    %76 = vector.extract_strided_slice %10 {offsets = [2, 0, 0], sizes = [1, 8, 64], strides = [1, 1, 1]} : vector<8x8x64xf32> to vector<1x8x64xf32>
    %77 = vector.shape_cast %76 : vector<1x8x64xf32> to vector<8x64xf32>
    %78 = vector.extract_strided_slice %64 {offsets = [0, 128], sizes = [8, 64], strides = [1, 1]} : vector<8x192xf32> to vector<8x64xf32>
    %79 = arith.addf %78, %14 : vector<8x64xf32>
    %80 = arith.mulf %74, %79 : vector<8x64xf32>
    %81 = arith.addf %77, %80 : vector<8x64xf32>
    %82 = math.tanh %81 : vector<8x64xf32>
    %cst_18 = arith.constant 1.000000e+00 : f32
    %83 = vector.broadcast %cst_18 : f32 to vector<8x64xf32>
    %84 = arith.subf %83, %75 : vector<8x64xf32>
    %85 = arith.mulf %84, %82 : vector<8x64xf32>
    %86 = arith.mulf %75, %63 : vector<8x64xf32>
    %87 = arith.addf %85, %86 : vector<8x64xf32>
    %cst_19 = arith.constant dense<0.000000e+00> : vector<8x192xf32>
    %88 = tpu.matmul %87, %11, %cst_19 {dimension_numbers = #tpu.dot_dimension_numbers<[1], [0], [0], [1], [0, 0, 1, 1], [], []>} : vector<8x64xf32>, vector<64x192xf32>, vector<8x192xf32> -> vector<8x192xf32>
    %89 = vector.extract_strided_slice %9 {offsets = [3, 0, 0], sizes = [1, 8, 128], strides = [1, 1, 1]} : vector<8x8x128xf32> to vector<1x8x128xf32>
    %90 = vector.shape_cast %89 : vector<1x8x128xf32> to vector<8x128xf32>
    %91 = vector.extract_strided_slice %88 {offsets = [0, 0], sizes = [8, 128], strides = [1, 1]} : vector<8x192xf32> to vector<8x128xf32>
    %92 = arith.addf %90, %91 : vector<8x128xf32>
    %93 = arith.negf %92 : vector<8x128xf32>
    %94 = math.exp %93 : vector<8x128xf32>
    %cst_20 = arith.constant 1.000000e+00 : f32
    %95 = vector.broadcast %cst_20 : f32 to vector<8x128xf32>
    %96 = arith.addf %95, %94 : vector<8x128xf32>
    %97 = arith.divf %95, %96 : vector<8x128xf32>
    %98 = vector.extract_strided_slice %97 {offsets = [0, 0], sizes = [8, 64], strides = [1, 1]} : vector<8x128xf32> to vector<8x64xf32>
    %99 = vector.extract_strided_slice %97 {offsets = [0, 64], sizes = [8, 64], strides = [1, 1]} : vector<8x128xf32> to vector<8x64xf32>
    %100 = vector.extract_strided_slice %10 {offsets = [3, 0, 0], sizes = [1, 8, 64], strides = [1, 1, 1]} : vector<8x8x64xf32> to vector<1x8x64xf32>
    %101 = vector.shape_cast %100 : vector<1x8x64xf32> to vector<8x64xf32>
    %102 = vector.extract_strided_slice %88 {offsets = [0, 128], sizes = [8, 64], strides = [1, 1]} : vector<8x192xf32> to vector<8x64xf32>
    %103 = arith.addf %102, %14 : vector<8x64xf32>
    %104 = arith.mulf %98, %103 : vector<8x64xf32>
    %105 = arith.addf %101, %104 : vector<8x64xf32>
    %106 = math.tanh %105 : vector<8x64xf32>
    %cst_21 = arith.constant 1.000000e+00 : f32
    %107 = vector.broadcast %cst_21 : f32 to vector<8x64xf32>
    %108 = arith.subf %107, %99 : vector<8x64xf32>
    %109 = arith.mulf %108, %106 : vector<8x64xf32>
    %110 = arith.mulf %99, %87 : vector<8x64xf32>
    %111 = arith.addf %109, %110 : vector<8x64xf32>
    %cst_22 = arith.constant dense<0.000000e+00> : vector<8x192xf32>
    %112 = tpu.matmul %111, %11, %cst_22 {dimension_numbers = #tpu.dot_dimension_numbers<[1], [0], [0], [1], [0, 0, 1, 1], [], []>} : vector<8x64xf32>, vector<64x192xf32>, vector<8x192xf32> -> vector<8x192xf32>
    %113 = vector.extract_strided_slice %9 {offsets = [4, 0, 0], sizes = [1, 8, 128], strides = [1, 1, 1]} : vector<8x8x128xf32> to vector<1x8x128xf32>
    %114 = vector.shape_cast %113 : vector<1x8x128xf32> to vector<8x128xf32>
    %115 = vector.extract_strided_slice %112 {offsets = [0, 0], sizes = [8, 128], strides = [1, 1]} : vector<8x192xf32> to vector<8x128xf32>
    %116 = arith.addf %114, %115 : vector<8x128xf32>
    %117 = arith.negf %116 : vector<8x128xf32>
    %118 = math.exp %117 : vector<8x128xf32>
    %cst_23 = arith.constant 1.000000e+00 : f32
    %119 = vector.broadcast %cst_23 : f32 to vector<8x128xf32>
    %120 = arith.addf %119, %118 : vector<8x128xf32>
    %121 = arith.divf %119, %120 : vector<8x128xf32>
    %122 = vector.extract_strided_slice %121 {offsets = [0, 0], sizes = [8, 64], strides = [1, 1]} : vector<8x128xf32> to vector<8x64xf32>
    %123 = vector.extract_strided_slice %121 {offsets = [0, 64], sizes = [8, 64], strides = [1, 1]} : vector<8x128xf32> to vector<8x64xf32>
    %124 = vector.extract_strided_slice %10 {offsets = [4, 0, 0], sizes = [1, 8, 64], strides = [1, 1, 1]} : vector<8x8x64xf32> to vector<1x8x64xf32>
    %125 = vector.shape_cast %124 : vector<1x8x64xf32> to vector<8x64xf32>
    %126 = vector.extract_strided_slice %112 {offsets = [0, 128], sizes = [8, 64], strides = [1, 1]} : vector<8x192xf32> to vector<8x64xf32>
    %127 = arith.addf %126, %14 : vector<8x64xf32>
    %128 = arith.mulf %122, %127 : vector<8x64xf32>
    %129 = arith.addf %125, %128 : vector<8x64xf32>
    %130 = math.tanh %129 : vector<8x64xf32>
    %cst_24 = arith.constant 1.000000e+00 : f32
    %131 = vector.broadcast %cst_24 : f32 to vector<8x64xf32>
    %132 = arith.subf %131, %123 : vector<8x64xf32>
    %133 = arith.mulf %132, %130 : vector<8x64xf32>
    %134 = arith.mulf %123, %111 : vector<8x64xf32>
    %135 = arith.addf %133, %134 : vector<8x64xf32>
    %cst_25 = arith.constant dense<0.000000e+00> : vector<8x192xf32>
    %136 = tpu.matmul %135, %11, %cst_25 {dimension_numbers = #tpu.dot_dimension_numbers<[1], [0], [0], [1], [0, 0, 1, 1], [], []>} : vector<8x64xf32>, vector<64x192xf32>, vector<8x192xf32> -> vector<8x192xf32>
    %137 = vector.extract_strided_slice %9 {offsets = [5, 0, 0], sizes = [1, 8, 128], strides = [1, 1, 1]} : vector<8x8x128xf32> to vector<1x8x128xf32>
    %138 = vector.shape_cast %137 : vector<1x8x128xf32> to vector<8x128xf32>
    %139 = vector.extract_strided_slice %136 {offsets = [0, 0], sizes = [8, 128], strides = [1, 1]} : vector<8x192xf32> to vector<8x128xf32>
    %140 = arith.addf %138, %139 : vector<8x128xf32>
    %141 = arith.negf %140 : vector<8x128xf32>
    %142 = math.exp %141 : vector<8x128xf32>
    %cst_26 = arith.constant 1.000000e+00 : f32
    %143 = vector.broadcast %cst_26 : f32 to vector<8x128xf32>
    %144 = arith.addf %143, %142 : vector<8x128xf32>
    %145 = arith.divf %143, %144 : vector<8x128xf32>
    %146 = vector.extract_strided_slice %145 {offsets = [0, 0], sizes = [8, 64], strides = [1, 1]} : vector<8x128xf32> to vector<8x64xf32>
    %147 = vector.extract_strided_slice %145 {offsets = [0, 64], sizes = [8, 64], strides = [1, 1]} : vector<8x128xf32> to vector<8x64xf32>
    %148 = vector.extract_strided_slice %10 {offsets = [5, 0, 0], sizes = [1, 8, 64], strides = [1, 1, 1]} : vector<8x8x64xf32> to vector<1x8x64xf32>
    %149 = vector.shape_cast %148 : vector<1x8x64xf32> to vector<8x64xf32>
    %150 = vector.extract_strided_slice %136 {offsets = [0, 128], sizes = [8, 64], strides = [1, 1]} : vector<8x192xf32> to vector<8x64xf32>
    %151 = arith.addf %150, %14 : vector<8x64xf32>
    %152 = arith.mulf %146, %151 : vector<8x64xf32>
    %153 = arith.addf %149, %152 : vector<8x64xf32>
    %154 = math.tanh %153 : vector<8x64xf32>
    %cst_27 = arith.constant 1.000000e+00 : f32
    %155 = vector.broadcast %cst_27 : f32 to vector<8x64xf32>
    %156 = arith.subf %155, %147 : vector<8x64xf32>
    %157 = arith.mulf %156, %154 : vector<8x64xf32>
    %158 = arith.mulf %147, %135 : vector<8x64xf32>
    %159 = arith.addf %157, %158 : vector<8x64xf32>
    %cst_28 = arith.constant dense<0.000000e+00> : vector<8x192xf32>
    %160 = tpu.matmul %159, %11, %cst_28 {dimension_numbers = #tpu.dot_dimension_numbers<[1], [0], [0], [1], [0, 0, 1, 1], [], []>} : vector<8x64xf32>, vector<64x192xf32>, vector<8x192xf32> -> vector<8x192xf32>
    %161 = vector.extract_strided_slice %9 {offsets = [6, 0, 0], sizes = [1, 8, 128], strides = [1, 1, 1]} : vector<8x8x128xf32> to vector<1x8x128xf32>
    %162 = vector.shape_cast %161 : vector<1x8x128xf32> to vector<8x128xf32>
    %163 = vector.extract_strided_slice %160 {offsets = [0, 0], sizes = [8, 128], strides = [1, 1]} : vector<8x192xf32> to vector<8x128xf32>
    %164 = arith.addf %162, %163 : vector<8x128xf32>
    %165 = arith.negf %164 : vector<8x128xf32>
    %166 = math.exp %165 : vector<8x128xf32>
    %cst_29 = arith.constant 1.000000e+00 : f32
    %167 = vector.broadcast %cst_29 : f32 to vector<8x128xf32>
    %168 = arith.addf %167, %166 : vector<8x128xf32>
    %169 = arith.divf %167, %168 : vector<8x128xf32>
    %170 = vector.extract_strided_slice %169 {offsets = [0, 0], sizes = [8, 64], strides = [1, 1]} : vector<8x128xf32> to vector<8x64xf32>
    %171 = vector.extract_strided_slice %169 {offsets = [0, 64], sizes = [8, 64], strides = [1, 1]} : vector<8x128xf32> to vector<8x64xf32>
    %172 = vector.extract_strided_slice %10 {offsets = [6, 0, 0], sizes = [1, 8, 64], strides = [1, 1, 1]} : vector<8x8x64xf32> to vector<1x8x64xf32>
    %173 = vector.shape_cast %172 : vector<1x8x64xf32> to vector<8x64xf32>
    %174 = vector.extract_strided_slice %160 {offsets = [0, 128], sizes = [8, 64], strides = [1, 1]} : vector<8x192xf32> to vector<8x64xf32>
    %175 = arith.addf %174, %14 : vector<8x64xf32>
    %176 = arith.mulf %170, %175 : vector<8x64xf32>
    %177 = arith.addf %173, %176 : vector<8x64xf32>
    %178 = math.tanh %177 : vector<8x64xf32>
    %cst_30 = arith.constant 1.000000e+00 : f32
    %179 = vector.broadcast %cst_30 : f32 to vector<8x64xf32>
    %180 = arith.subf %179, %171 : vector<8x64xf32>
    %181 = arith.mulf %180, %178 : vector<8x64xf32>
    %182 = arith.mulf %171, %159 : vector<8x64xf32>
    %183 = arith.addf %181, %182 : vector<8x64xf32>
    %cst_31 = arith.constant dense<0.000000e+00> : vector<8x192xf32>
    %184 = tpu.matmul %183, %11, %cst_31 {dimension_numbers = #tpu.dot_dimension_numbers<[1], [0], [0], [1], [0, 0, 1, 1], [], []>} : vector<8x64xf32>, vector<64x192xf32>, vector<8x192xf32> -> vector<8x192xf32>
    %185 = vector.extract_strided_slice %9 {offsets = [7, 0, 0], sizes = [1, 8, 128], strides = [1, 1, 1]} : vector<8x8x128xf32> to vector<1x8x128xf32>
    %186 = vector.shape_cast %185 : vector<1x8x128xf32> to vector<8x128xf32>
    %187 = vector.extract_strided_slice %184 {offsets = [0, 0], sizes = [8, 128], strides = [1, 1]} : vector<8x192xf32> to vector<8x128xf32>
    %188 = arith.addf %186, %187 : vector<8x128xf32>
    %189 = arith.negf %188 : vector<8x128xf32>
    %190 = math.exp %189 : vector<8x128xf32>
    %cst_32 = arith.constant 1.000000e+00 : f32
    %191 = vector.broadcast %cst_32 : f32 to vector<8x128xf32>
    %192 = arith.addf %191, %190 : vector<8x128xf32>
    %193 = arith.divf %191, %192 : vector<8x128xf32>
    %194 = vector.extract_strided_slice %193 {offsets = [0, 0], sizes = [8, 64], strides = [1, 1]} : vector<8x128xf32> to vector<8x64xf32>
    %195 = vector.extract_strided_slice %193 {offsets = [0, 64], sizes = [8, 64], strides = [1, 1]} : vector<8x128xf32> to vector<8x64xf32>
    %196 = vector.extract_strided_slice %10 {offsets = [7, 0, 0], sizes = [1, 8, 64], strides = [1, 1, 1]} : vector<8x8x64xf32> to vector<1x8x64xf32>
    %197 = vector.shape_cast %196 : vector<1x8x64xf32> to vector<8x64xf32>
    %198 = vector.extract_strided_slice %184 {offsets = [0, 128], sizes = [8, 64], strides = [1, 1]} : vector<8x192xf32> to vector<8x64xf32>
    %199 = arith.addf %198, %14 : vector<8x64xf32>
    %200 = arith.mulf %194, %199 : vector<8x64xf32>
    %201 = arith.addf %197, %200 : vector<8x64xf32>
    %202 = math.tanh %201 : vector<8x64xf32>
    %cst_33 = arith.constant 1.000000e+00 : f32
    %203 = vector.broadcast %cst_33 : f32 to vector<8x64xf32>
    %204 = arith.subf %203, %195 : vector<8x64xf32>
    %205 = arith.mulf %204, %202 : vector<8x64xf32>
    %206 = arith.mulf %195, %183 : vector<8x64xf32>
    %207 = arith.addf %205, %206 : vector<8x64xf32>
    %c0_34 = arith.constant 0 : index
    %c0_35 = arith.constant 0 : index
    %208 = vector.load %arg6[%c0_34, %c0_35] : memref<64x192xf32, #tpu.memory_space<vmem>>, vector<64x192xf32>
    %cst_36 = arith.constant dense<0.000000e+00> : vector<8x192xf32>
    %209 = tpu.matmul %207, %208, %cst_36 {dimension_numbers = #tpu.dot_dimension_numbers<[1], [0], [0], [1], [0, 0, 1, 1], [], []>} : vector<8x64xf32>, vector<64x192xf32>, vector<8x192xf32> -> vector<8x192xf32>
    %c0_37 = arith.constant 0 : index
    %c0_38 = arith.constant 0 : index
    %210 = vector.load %arg7[%c0_37, %c0_38] : memref<1x192xf32, #tpu.memory_space<vmem>>, vector<1x192xf32>
    %211 = vector.broadcast %210 : vector<1x192xf32> to vector<8x192xf32>
    %212 = arith.addf %209, %211 : vector<8x192xf32>
    %213 = vector.extract_strided_slice %212 {offsets = [0, 0], sizes = [8, 128], strides = [1, 1]} : vector<8x192xf32> to vector<8x128xf32>
    %214 = vector.extract_strided_slice %212 {offsets = [0, 128], sizes = [8, 64], strides = [1, 1]} : vector<8x192xf32> to vector<8x64xf32>
    %c0_39 = arith.constant 0 : index
    %c0_40 = arith.constant 0 : index
    %215 = vector.load %arg8[%c0_39, %c0_40] : memref<64x192xf32, #tpu.memory_space<vmem>>, vector<64x192xf32>
    %c0_41 = arith.constant 0 : index
    %c0_42 = arith.constant 0 : index
    %216 = vector.load %arg9[%c0_41, %c0_42] : memref<1x64xf32, #tpu.memory_space<vmem>>, vector<1x64xf32>
    %217 = vector.shape_cast %216 : vector<1x64xf32> to vector<1x64xf32>
    %218 = vector.broadcast %217 : vector<1x64xf32> to vector<8x64xf32>
    %cst_43 = arith.constant 0.000000e+00 : f32
    %219 = vector.broadcast %cst_43 : f32 to vector<8x64xf32>
    %cst_44 = arith.constant dense<0.000000e+00> : vector<8x192xf32>
    %220 = tpu.matmul %219, %215, %cst_44 {dimension_numbers = #tpu.dot_dimension_numbers<[1], [0], [0], [1], [0, 0, 1, 1], [], []>} : vector<8x64xf32>, vector<64x192xf32>, vector<8x192xf32> -> vector<8x192xf32>
    %221 = vector.extract_strided_slice %220 {offsets = [0, 0], sizes = [8, 128], strides = [1, 1]} : vector<8x192xf32> to vector<8x128xf32>
    %222 = arith.addf %213, %221 : vector<8x128xf32>
    %223 = arith.negf %222 : vector<8x128xf32>
    %224 = math.exp %223 : vector<8x128xf32>
    %cst_45 = arith.constant 1.000000e+00 : f32
    %225 = vector.broadcast %cst_45 : f32 to vector<8x128xf32>
    %226 = arith.addf %225, %224 : vector<8x128xf32>
    %227 = arith.divf %225, %226 : vector<8x128xf32>
    %228 = vector.extract_strided_slice %227 {offsets = [0, 0], sizes = [8, 64], strides = [1, 1]} : vector<8x128xf32> to vector<8x64xf32>
    %229 = vector.extract_strided_slice %227 {offsets = [0, 64], sizes = [8, 64], strides = [1, 1]} : vector<8x128xf32> to vector<8x64xf32>
    %230 = vector.extract_strided_slice %220 {offsets = [0, 128], sizes = [8, 64], strides = [1, 1]} : vector<8x192xf32> to vector<8x64xf32>
    %231 = arith.addf %230, %218 : vector<8x64xf32>
    %232 = arith.mulf %228, %231 : vector<8x64xf32>
    %233 = arith.addf %214, %232 : vector<8x64xf32>
    %234 = math.tanh %233 : vector<8x64xf32>
    %cst_46 = arith.constant 1.000000e+00 : f32
    %235 = vector.broadcast %cst_46 : f32 to vector<8x64xf32>
    %236 = arith.subf %235, %229 : vector<8x64xf32>
    %237 = arith.mulf %236, %234 : vector<8x64xf32>
    %238 = arith.mulf %229, %219 : vector<8x64xf32>
    %239 = arith.addf %237, %238 : vector<8x64xf32>
    %cst_47 = arith.constant dense<0.000000e+00> : vector<8x192xf32>
    %240 = tpu.matmul %239, %215, %cst_47 {dimension_numbers = #tpu.dot_dimension_numbers<[1], [0], [0], [1], [0, 0, 1, 1], [], []>} : vector<8x64xf32>, vector<64x192xf32>, vector<8x192xf32> -> vector<8x192xf32>
    %241 = vector.extract_strided_slice %240 {offsets = [0, 0], sizes = [8, 128], strides = [1, 1]} : vector<8x192xf32> to vector<8x128xf32>
    %242 = arith.addf %213, %241 : vector<8x128xf32>
    %243 = arith.negf %242 : vector<8x128xf32>
    %244 = math.exp %243 : vector<8x128xf32>
    %cst_48 = arith.constant 1.000000e+00 : f32
    %245 = vector.broadcast %cst_48 : f32 to vector<8x128xf32>
    %246 = arith.addf %245, %244 : vector<8x128xf32>
    %247 = arith.divf %245, %246 : vector<8x128xf32>
    %248 = vector.extract_strided_slice %247 {offsets = [0, 0], sizes = [8, 64], strides = [1, 1]} : vector<8x128xf32> to vector<8x64xf32>
    %249 = vector.extract_strided_slice %247 {offsets = [0, 64], sizes = [8, 64], strides = [1, 1]} : vector<8x128xf32> to vector<8x64xf32>
    %250 = vector.extract_strided_slice %240 {offsets = [0, 128], sizes = [8, 64], strides = [1, 1]} : vector<8x192xf32> to vector<8x64xf32>
    %251 = arith.addf %250, %218 : vector<8x64xf32>
    %252 = arith.mulf %248, %251 : vector<8x64xf32>
    %253 = arith.addf %214, %252 : vector<8x64xf32>
    %254 = math.tanh %253 : vector<8x64xf32>
    %cst_49 = arith.constant 1.000000e+00 : f32
    %255 = vector.broadcast %cst_49 : f32 to vector<8x64xf32>
    %256 = arith.subf %255, %249 : vector<8x64xf32>
    %257 = arith.mulf %256, %254 : vector<8x64xf32>
    %258 = arith.mulf %249, %239 : vector<8x64xf32>
    %259 = arith.addf %257, %258 : vector<8x64xf32>
    %cst_50 = arith.constant dense<0.000000e+00> : vector<8x192xf32>
    %260 = tpu.matmul %259, %215, %cst_50 {dimension_numbers = #tpu.dot_dimension_numbers<[1], [0], [0], [1], [0, 0, 1, 1], [], []>} : vector<8x64xf32>, vector<64x192xf32>, vector<8x192xf32> -> vector<8x192xf32>
    %261 = vector.extract_strided_slice %260 {offsets = [0, 0], sizes = [8, 128], strides = [1, 1]} : vector<8x192xf32> to vector<8x128xf32>
    %262 = arith.addf %213, %261 : vector<8x128xf32>
    %263 = arith.negf %262 : vector<8x128xf32>
    %264 = math.exp %263 : vector<8x128xf32>
    %cst_51 = arith.constant 1.000000e+00 : f32
    %265 = vector.broadcast %cst_51 : f32 to vector<8x128xf32>
    %266 = arith.addf %265, %264 : vector<8x128xf32>
    %267 = arith.divf %265, %266 : vector<8x128xf32>
    %268 = vector.extract_strided_slice %267 {offsets = [0, 0], sizes = [8, 64], strides = [1, 1]} : vector<8x128xf32> to vector<8x64xf32>
    %269 = vector.extract_strided_slice %267 {offsets = [0, 64], sizes = [8, 64], strides = [1, 1]} : vector<8x128xf32> to vector<8x64xf32>
    %270 = vector.extract_strided_slice %260 {offsets = [0, 128], sizes = [8, 64], strides = [1, 1]} : vector<8x192xf32> to vector<8x64xf32>
    %271 = arith.addf %270, %218 : vector<8x64xf32>
    %272 = arith.mulf %268, %271 : vector<8x64xf32>
    %273 = arith.addf %214, %272 : vector<8x64xf32>
    %274 = math.tanh %273 : vector<8x64xf32>
    %cst_52 = arith.constant 1.000000e+00 : f32
    %275 = vector.broadcast %cst_52 : f32 to vector<8x64xf32>
    %276 = arith.subf %275, %269 : vector<8x64xf32>
    %277 = arith.mulf %276, %274 : vector<8x64xf32>
    %278 = arith.mulf %269, %259 : vector<8x64xf32>
    %279 = arith.addf %277, %278 : vector<8x64xf32>
    %cst_53 = arith.constant dense<0.000000e+00> : vector<8x192xf32>
    %280 = tpu.matmul %279, %215, %cst_53 {dimension_numbers = #tpu.dot_dimension_numbers<[1], [0], [0], [1], [0, 0, 1, 1], [], []>} : vector<8x64xf32>, vector<64x192xf32>, vector<8x192xf32> -> vector<8x192xf32>
    %281 = vector.extract_strided_slice %280 {offsets = [0, 0], sizes = [8, 128], strides = [1, 1]} : vector<8x192xf32> to vector<8x128xf32>
    %282 = arith.addf %213, %281 : vector<8x128xf32>
    %283 = arith.negf %282 : vector<8x128xf32>
    %284 = math.exp %283 : vector<8x128xf32>
    %cst_54 = arith.constant 1.000000e+00 : f32
    %285 = vector.broadcast %cst_54 : f32 to vector<8x128xf32>
    %286 = arith.addf %285, %284 : vector<8x128xf32>
    %287 = arith.divf %285, %286 : vector<8x128xf32>
    %288 = vector.extract_strided_slice %287 {offsets = [0, 0], sizes = [8, 64], strides = [1, 1]} : vector<8x128xf32> to vector<8x64xf32>
    %289 = vector.extract_strided_slice %287 {offsets = [0, 64], sizes = [8, 64], strides = [1, 1]} : vector<8x128xf32> to vector<8x64xf32>
    %290 = vector.extract_strided_slice %280 {offsets = [0, 128], sizes = [8, 64], strides = [1, 1]} : vector<8x192xf32> to vector<8x64xf32>
    %291 = arith.addf %290, %218 : vector<8x64xf32>
    %292 = arith.mulf %288, %291 : vector<8x64xf32>
    %293 = arith.addf %214, %292 : vector<8x64xf32>
    %294 = math.tanh %293 : vector<8x64xf32>
    %cst_55 = arith.constant 1.000000e+00 : f32
    %295 = vector.broadcast %cst_55 : f32 to vector<8x64xf32>
    %296 = arith.subf %295, %289 : vector<8x64xf32>
    %297 = arith.mulf %296, %294 : vector<8x64xf32>
    %298 = arith.mulf %289, %279 : vector<8x64xf32>
    %299 = arith.addf %297, %298 : vector<8x64xf32>
    %cst_56 = arith.constant dense<0.000000e+00> : vector<8x192xf32>
    %300 = tpu.matmul %299, %215, %cst_56 {dimension_numbers = #tpu.dot_dimension_numbers<[1], [0], [0], [1], [0, 0, 1, 1], [], []>} : vector<8x64xf32>, vector<64x192xf32>, vector<8x192xf32> -> vector<8x192xf32>
    %301 = vector.extract_strided_slice %300 {offsets = [0, 0], sizes = [8, 128], strides = [1, 1]} : vector<8x192xf32> to vector<8x128xf32>
    %302 = arith.addf %213, %301 : vector<8x128xf32>
    %303 = arith.negf %302 : vector<8x128xf32>
    %304 = math.exp %303 : vector<8x128xf32>
    %cst_57 = arith.constant 1.000000e+00 : f32
    %305 = vector.broadcast %cst_57 : f32 to vector<8x128xf32>
    %306 = arith.addf %305, %304 : vector<8x128xf32>
    %307 = arith.divf %305, %306 : vector<8x128xf32>
    %308 = vector.extract_strided_slice %307 {offsets = [0, 0], sizes = [8, 64], strides = [1, 1]} : vector<8x128xf32> to vector<8x64xf32>
    %309 = vector.extract_strided_slice %307 {offsets = [0, 64], sizes = [8, 64], strides = [1, 1]} : vector<8x128xf32> to vector<8x64xf32>
    %310 = vector.extract_strided_slice %300 {offsets = [0, 128], sizes = [8, 64], strides = [1, 1]} : vector<8x192xf32> to vector<8x64xf32>
    %311 = arith.addf %310, %218 : vector<8x64xf32>
    %312 = arith.mulf %308, %311 : vector<8x64xf32>
    %313 = arith.addf %214, %312 : vector<8x64xf32>
    %314 = math.tanh %313 : vector<8x64xf32>
    %cst_58 = arith.constant 1.000000e+00 : f32
    %315 = vector.broadcast %cst_58 : f32 to vector<8x64xf32>
    %316 = arith.subf %315, %309 : vector<8x64xf32>
    %317 = arith.mulf %316, %314 : vector<8x64xf32>
    %318 = arith.mulf %309, %299 : vector<8x64xf32>
    %319 = arith.addf %317, %318 : vector<8x64xf32>
    %cst_59 = arith.constant dense<0.000000e+00> : vector<8x192xf32>
    %320 = tpu.matmul %319, %215, %cst_59 {dimension_numbers = #tpu.dot_dimension_numbers<[1], [0], [0], [1], [0, 0, 1, 1], [], []>} : vector<8x64xf32>, vector<64x192xf32>, vector<8x192xf32> -> vector<8x192xf32>
    %321 = vector.extract_strided_slice %320 {offsets = [0, 0], sizes = [8, 128], strides = [1, 1]} : vector<8x192xf32> to vector<8x128xf32>
    %322 = arith.addf %213, %321 : vector<8x128xf32>
    %323 = arith.negf %322 : vector<8x128xf32>
    %324 = math.exp %323 : vector<8x128xf32>
    %cst_60 = arith.constant 1.000000e+00 : f32
    %325 = vector.broadcast %cst_60 : f32 to vector<8x128xf32>
    %326 = arith.addf %325, %324 : vector<8x128xf32>
    %327 = arith.divf %325, %326 : vector<8x128xf32>
    %328 = vector.extract_strided_slice %327 {offsets = [0, 0], sizes = [8, 64], strides = [1, 1]} : vector<8x128xf32> to vector<8x64xf32>
    %329 = vector.extract_strided_slice %327 {offsets = [0, 64], sizes = [8, 64], strides = [1, 1]} : vector<8x128xf32> to vector<8x64xf32>
    %330 = vector.extract_strided_slice %320 {offsets = [0, 128], sizes = [8, 64], strides = [1, 1]} : vector<8x192xf32> to vector<8x64xf32>
    %331 = arith.addf %330, %218 : vector<8x64xf32>
    %332 = arith.mulf %328, %331 : vector<8x64xf32>
    %333 = arith.addf %214, %332 : vector<8x64xf32>
    %334 = math.tanh %333 : vector<8x64xf32>
    %cst_61 = arith.constant 1.000000e+00 : f32
    %335 = vector.broadcast %cst_61 : f32 to vector<8x64xf32>
    %336 = arith.subf %335, %329 : vector<8x64xf32>
    %337 = arith.mulf %336, %334 : vector<8x64xf32>
    %338 = arith.mulf %329, %319 : vector<8x64xf32>
    %339 = arith.addf %337, %338 : vector<8x64xf32>
    %cst_62 = arith.constant dense<0.000000e+00> : vector<8x192xf32>
    %340 = tpu.matmul %339, %215, %cst_62 {dimension_numbers = #tpu.dot_dimension_numbers<[1], [0], [0], [1], [0, 0, 1, 1], [], []>} : vector<8x64xf32>, vector<64x192xf32>, vector<8x192xf32> -> vector<8x192xf32>
    %341 = vector.extract_strided_slice %340 {offsets = [0, 0], sizes = [8, 128], strides = [1, 1]} : vector<8x192xf32> to vector<8x128xf32>
    %342 = arith.addf %213, %341 : vector<8x128xf32>
    %343 = arith.negf %342 : vector<8x128xf32>
    %344 = math.exp %343 : vector<8x128xf32>
    %cst_63 = arith.constant 1.000000e+00 : f32
    %345 = vector.broadcast %cst_63 : f32 to vector<8x128xf32>
    %346 = arith.addf %345, %344 : vector<8x128xf32>
    %347 = arith.divf %345, %346 : vector<8x128xf32>
    %348 = vector.extract_strided_slice %347 {offsets = [0, 0], sizes = [8, 64], strides = [1, 1]} : vector<8x128xf32> to vector<8x64xf32>
    %349 = vector.extract_strided_slice %347 {offsets = [0, 64], sizes = [8, 64], strides = [1, 1]} : vector<8x128xf32> to vector<8x64xf32>
    %350 = vector.extract_strided_slice %340 {offsets = [0, 128], sizes = [8, 64], strides = [1, 1]} : vector<8x192xf32> to vector<8x64xf32>
    %351 = arith.addf %350, %218 : vector<8x64xf32>
    %352 = arith.mulf %348, %351 : vector<8x64xf32>
    %353 = arith.addf %214, %352 : vector<8x64xf32>
    %354 = math.tanh %353 : vector<8x64xf32>
    %cst_64 = arith.constant 1.000000e+00 : f32
    %355 = vector.broadcast %cst_64 : f32 to vector<8x64xf32>
    %356 = arith.subf %355, %349 : vector<8x64xf32>
    %357 = arith.mulf %356, %354 : vector<8x64xf32>
    %358 = arith.mulf %349, %339 : vector<8x64xf32>
    %359 = arith.addf %357, %358 : vector<8x64xf32>
    %cst_65 = arith.constant dense<0.000000e+00> : vector<8x192xf32>
    %360 = tpu.matmul %359, %215, %cst_65 {dimension_numbers = #tpu.dot_dimension_numbers<[1], [0], [0], [1], [0, 0, 1, 1], [], []>} : vector<8x64xf32>, vector<64x192xf32>, vector<8x192xf32> -> vector<8x192xf32>
    %361 = vector.extract_strided_slice %360 {offsets = [0, 0], sizes = [8, 128], strides = [1, 1]} : vector<8x192xf32> to vector<8x128xf32>
    %362 = arith.addf %213, %361 : vector<8x128xf32>
    %363 = arith.negf %362 : vector<8x128xf32>
    %364 = math.exp %363 : vector<8x128xf32>
    %cst_66 = arith.constant 1.000000e+00 : f32
    %365 = vector.broadcast %cst_66 : f32 to vector<8x128xf32>
    %366 = arith.addf %365, %364 : vector<8x128xf32>
    %367 = arith.divf %365, %366 : vector<8x128xf32>
    %368 = vector.extract_strided_slice %367 {offsets = [0, 0], sizes = [8, 64], strides = [1, 1]} : vector<8x128xf32> to vector<8x64xf32>
    %369 = vector.extract_strided_slice %367 {offsets = [0, 64], sizes = [8, 64], strides = [1, 1]} : vector<8x128xf32> to vector<8x64xf32>
    %370 = vector.extract_strided_slice %360 {offsets = [0, 128], sizes = [8, 64], strides = [1, 1]} : vector<8x192xf32> to vector<8x64xf32>
    %371 = arith.addf %370, %218 : vector<8x64xf32>
    %372 = arith.mulf %368, %371 : vector<8x64xf32>
    %373 = arith.addf %214, %372 : vector<8x64xf32>
    %374 = math.tanh %373 : vector<8x64xf32>
    %cst_67 = arith.constant 1.000000e+00 : f32
    %375 = vector.broadcast %cst_67 : f32 to vector<8x64xf32>
    %376 = arith.subf %375, %369 : vector<8x64xf32>
    %377 = arith.mulf %376, %374 : vector<8x64xf32>
    %378 = arith.mulf %369, %359 : vector<8x64xf32>
    %379 = arith.addf %377, %378 : vector<8x64xf32>
    %c0_68 = arith.constant 0 : index
    %c0_69 = arith.constant 0 : index
    %c0_70 = arith.constant 0 : index
    %380 = vector.load %arg10[%c0_68, %c0_69, %c0_70] : memref<4x64x64xf32, #tpu.memory_space<vmem>>, vector<1x64x64xf32>
    %381 = vector.shape_cast %380 : vector<1x64x64xf32> to vector<64x64xf32>
    %cst_71 = arith.constant dense<0.000000e+00> : vector<8x64xf32>
    %382 = tpu.matmul %207, %381, %cst_71 {dimension_numbers = #tpu.dot_dimension_numbers<[1], [0], [0], [1], [0, 0, 1, 1], [], []>} : vector<8x64xf32>, vector<64x64xf32>, vector<8x64xf32> -> vector<8x64xf32>
    %c1 = arith.constant 1 : index
    %c0_72 = arith.constant 0 : index
    %c0_73 = arith.constant 0 : index
    %383 = vector.load %arg10[%c1, %c0_72, %c0_73] : memref<4x64x64xf32, #tpu.memory_space<vmem>>, vector<1x64x64xf32>
    %384 = vector.shape_cast %383 : vector<1x64x64xf32> to vector<64x64xf32>
    %cst_74 = arith.constant dense<0.000000e+00> : vector<8x64xf32>
    %385 = tpu.matmul %379, %384, %cst_74 {dimension_numbers = #tpu.dot_dimension_numbers<[1], [0], [0], [1], [0, 0, 1, 1], [], []>} : vector<8x64xf32>, vector<64x64xf32>, vector<8x64xf32> -> vector<8x64xf32>
    %386 = arith.addf %382, %385 : vector<8x64xf32>
    %387 = arith.mulf %207, %379 : vector<8x64xf32>
    %c2 = arith.constant 2 : index
    %c0_75 = arith.constant 0 : index
    %c0_76 = arith.constant 0 : index
    %388 = vector.load %arg10[%c2, %c0_75, %c0_76] : memref<4x64x64xf32, #tpu.memory_space<vmem>>, vector<1x64x64xf32>
    %389 = vector.shape_cast %388 : vector<1x64x64xf32> to vector<64x64xf32>
    %cst_77 = arith.constant dense<0.000000e+00> : vector<8x64xf32>
    %390 = tpu.matmul %387, %389, %cst_77 {dimension_numbers = #tpu.dot_dimension_numbers<[1], [0], [0], [1], [0, 0, 1, 1], [], []>} : vector<8x64xf32>, vector<64x64xf32>, vector<8x64xf32> -> vector<8x64xf32>
    %391 = arith.addf %386, %390 : vector<8x64xf32>
    %392 = arith.subf %207, %379 : vector<8x64xf32>
    %393 = math.absf %392 : vector<8x64xf32>
    %c3 = arith.constant 3 : index
    %c0_78 = arith.constant 0 : index
    %c0_79 = arith.constant 0 : index
    %394 = vector.load %arg10[%c3, %c0_78, %c0_79] : memref<4x64x64xf32, #tpu.memory_space<vmem>>, vector<1x64x64xf32>
    %395 = vector.shape_cast %394 : vector<1x64x64xf32> to vector<64x64xf32>
    %cst_80 = arith.constant dense<0.000000e+00> : vector<8x64xf32>
    %396 = tpu.matmul %393, %395, %cst_80 {dimension_numbers = #tpu.dot_dimension_numbers<[1], [0], [0], [1], [0, 0, 1, 1], [], []>} : vector<8x64xf32>, vector<64x64xf32>, vector<8x64xf32> -> vector<8x64xf32>
    %397 = arith.addf %391, %396 : vector<8x64xf32>
    %c0_81 = arith.constant 0 : index
    %c0_82 = arith.constant 0 : index
    %398 = vector.load %arg11[%c0_81, %c0_82] : memref<1x64xf32, #tpu.memory_space<vmem>>, vector<1x64xf32>
    %399 = vector.broadcast %398 : vector<1x64xf32> to vector<8x64xf32>
    %400 = arith.addf %397, %399 : vector<8x64xf32>
    %cst_83 = arith.constant 0.000000e+00 : f32
    %401 = vector.broadcast %cst_83 : f32 to vector<8x64xf32>
    %402 = arith.cmpf ogt, %400, %401 : vector<8x64xf32>
    %cst_84 = arith.constant 0.000000e+00 : f32
    %403 = vector.broadcast %cst_84 : f32 to vector<8x64xf32>
    %404 = arith.minimumf %400, %403 : vector<8x64xf32>
    %405 = math.exp %404 : vector<8x64xf32>
    %cst_85 = arith.constant 1.000000e+00 : f32
    %406 = vector.broadcast %cst_85 : f32 to vector<8x64xf32>
    %407 = arith.subf %405, %406 : vector<8x64xf32>
    %cst_86 = arith.constant 1.67326319 : f32
    %408 = vector.broadcast %cst_86 : f32 to vector<8x64xf32>
    %409 = arith.mulf %408, %407 : vector<8x64xf32>
    %410 = arith.select %402, %400, %409 : vector<8x64xi1>, vector<8x64xf32>
    %cst_87 = arith.constant 1.05070102 : f32
    %411 = vector.broadcast %cst_87 : f32 to vector<8x64xf32>
    %412 = arith.mulf %411, %410 : vector<8x64xf32>
    %c0_88 = arith.constant 0 : index
    %c0_89 = arith.constant 0 : index
    %413 = vector.load %arg12[%c0_88, %c0_89] : memref<64x4xf32, #tpu.memory_space<vmem>>, vector<64x4xf32>
    %cst_90 = arith.constant dense<0.000000e+00> : vector<8x4xf32>
    %414 = tpu.matmul %412, %413, %cst_90 {dimension_numbers = #tpu.dot_dimension_numbers<[1], [0], [0], [1], [0, 0, 1, 1], [], []>} : vector<8x64xf32>, vector<64x4xf32>, vector<8x4xf32> -> vector<8x4xf32>
    %c0_91 = arith.constant 0 : index
    %c0_92 = arith.constant 0 : index
    %415 = vector.load %arg13[%c0_91, %c0_92] : memref<1x4xf32, #tpu.memory_space<vmem>>, vector<1x4xf32>
    %416 = vector.broadcast %415 : vector<1x4xf32> to vector<8x4xf32>
    %417 = arith.addf %414, %416 : vector<8x4xf32>
    %cst_93 = arith.constant 0.000000e+00 : f32
    %418 = vector.broadcast %cst_93 : f32 to vector<8x4xf32>
    %419 = arith.cmpf ogt, %417, %418 : vector<8x4xf32>
    %cst_94 = arith.constant 0.000000e+00 : f32
    %420 = vector.broadcast %cst_94 : f32 to vector<8x4xf32>
    %421 = arith.minimumf %417, %420 : vector<8x4xf32>
    %422 = math.exp %421 : vector<8x4xf32>
    %cst_95 = arith.constant 1.000000e+00 : f32
    %423 = vector.broadcast %cst_95 : f32 to vector<8x4xf32>
    %424 = arith.subf %422, %423 : vector<8x4xf32>
    %cst_96 = arith.constant 1.67326319 : f32
    %425 = vector.broadcast %cst_96 : f32 to vector<8x4xf32>
    %426 = arith.mulf %425, %424 : vector<8x4xf32>
    %427 = arith.select %419, %417, %426 : vector<8x4xi1>, vector<8x4xf32>
    %cst_97 = arith.constant 1.05070102 : f32
    %428 = vector.broadcast %cst_97 : f32 to vector<8x4xf32>
    %429 = arith.mulf %428, %427 : vector<8x4xf32>
    %c0_98 = arith.constant 0 : index
    %c0_99 = arith.constant 0 : index
    %430 = vector.load %arg14[%c0_98, %c0_99] : memref<8x4xf32, #tpu.memory_space<vmem>>, vector<8x4xf32>
    tpu.vector_store %arg14[%c0_98, %c0_99], %429 {strides = array<i32>} : memref<8x4xf32, #tpu.memory_space<vmem>>, vector<8x4xf32>,
    return
  }
  func.func @transform_0(%arg0: i32) -> (i32, i32, i32) {
    %c0_i32 = arith.constant 0 : i32
    %c0_i32_0 = arith.constant 0 : i32
    %c0_i32_1 = arith.constant 0 : i32
    return %c0_i32, %arg0, %c0_i32_0 : i32, i32, i32
  }
  func.func @transform_1(%arg0: i32) -> (i32, i32) {
    %c0_i32 = arith.constant 0 : i32
    %c0_i32_0 = arith.constant 0 : i32
    %c0_i32_1 = arith.constant 0 : i32
    return %c0_i32, %c0_i32_0 : i32, i32
  }
  func.func @transform_2(%arg0: i32) -> (i32, i32) {
    %c0_i32 = arith.constant 0 : i32
    %c0_i32_0 = arith.constant 0 : i32
    %c0_i32_1 = arith.constant 0 : i32
    return %c0_i32, %c0_i32_0 : i32, i32
  }
  func.func @transform_3(%arg0: i32) -> (i32, i32) {
    %c0_i32 = arith.constant 0 : i32
    %c0_i32_0 = arith.constant 0 : i32
    %c0_i32_1 = arith.constant 0 : i32
    return %c0_i32, %c0_i32_0 : i32, i32
  }
  func.func @transform_4(%arg0: i32) -> (i32, i32) {
    %c0_i32 = arith.constant 0 : i32
    %c0_i32_0 = arith.constant 0 : i32
    %c0_i32_1 = arith.constant 0 : i32
    return %c0_i32, %c0_i32_0 : i32, i32
  }
  func.func @transform_5(%arg0: i32) -> (i32, i32) {
    %c0_i32 = arith.constant 0 : i32
    %c0_i32_0 = arith.constant 0 : i32
    %c0_i32_1 = arith.constant 0 : i32
    return %c0_i32, %c0_i32_0 : i32, i32
  }
  func.func @transform_6(%arg0: i32) -> (i32, i32) {
    %c0_i32 = arith.constant 0 : i32
    %c0_i32_0 = arith.constant 0 : i32
    %c0_i32_1 = arith.constant 0 : i32
    return %c0_i32, %c0_i32_0 : i32, i32
  }
  func.func @transform_7(%arg0: i32) -> (i32, i32) {
    %c0_i32 = arith.constant 0 : i32
    %c0_i32_0 = arith.constant 0 : i32
    %c0_i32_1 = arith.constant 0 : i32
    return %c0_i32, %c0_i32_0 : i32, i32
  }
  func.func @transform_8(%arg0: i32) -> (i32, i32) {
    %c0_i32 = arith.constant 0 : i32
    %c0_i32_0 = arith.constant 0 : i32
    %c0_i32_1 = arith.constant 0 : i32
    return %c0_i32, %c0_i32_0 : i32, i32
  }
  func.func @transform_9(%arg0: i32) -> (i32, i32, i32) {
    %c0_i32 = arith.constant 0 : i32
    %c0_i32_0 = arith.constant 0 : i32
    %c0_i32_1 = arith.constant 0 : i32
    %c0_i32_2 = arith.constant 0 : i32
    return %c0_i32, %c0_i32_0, %c0_i32_1 : i32, i32, i32
  }
  func.func @transform_10(%arg0: i32) -> (i32, i32) {
    %c0_i32 = arith.constant 0 : i32
    %c0_i32_0 = arith.constant 0 : i32
    %c0_i32_1 = arith.constant 0 : i32
    return %c0_i32, %c0_i32_0 : i32, i32
  }
  func.func @transform_11(%arg0: i32) -> (i32, i32) {
    %c0_i32 = arith.constant 0 : i32
    %c0_i32_0 = arith.constant 0 : i32
    %c0_i32_1 = arith.constant 0 : i32
    return %c0_i32, %c0_i32_0 : i32, i32
  }
  func.func @transform_12(%arg0: i32) -> (i32, i32) {
    %c0_i32 = arith.constant 0 : i32
    %c0_i32_0 = arith.constant 0 : i32
    %c0_i32_1 = arith.constant 0 : i32
    return %c0_i32, %c0_i32_0 : i32, i32
  }
  func.func @transform_13(%arg0: i32) -> (i32, i32) {
    %c0_i32 = arith.constant 0 : i32
    %c0_i32_0 = arith.constant 0 : i32
    return %arg0, %c0_i32 : i32, i32
  }
}

</mosaic_0001>

<llo_original>
// kernel: tile.7
$region0: #{tile.7}
  %s0 = inlined_call_operand.vmem [shape: f32[8,8,3,64], index: 0, kind: input, shape index: {}]
  %s1 = inlined_call_operand.vmem [shape: f32[8,8,192], index: 1, kind: output, shape index: {}]
  $region1: #{tile.7} parent=0
    #allocation0 [shape = 'u8[262144]{0}', space=vmem, size = 0x40000, scoped, tag = 'scoped mem for input reshape']
    %s3 = sshll.u32 1, 4
    %s4 = ssub.s32 %s3, 1
    %s5 = smul.addr 4, 63
    %s6 = scalar_lea.vmem %s0, %s5
    %v7 = vld [vmem:[%s6] sm:%s4]
    %s8 = scalar_lea.vmem [#allocation0], 504
    %9 = vst [vmem:[%s8] sm:%s4] %v7
    %s10 = smul.addr 4, 62
    %s11 = scalar_lea.vmem %s0, %s10
    %v12 = vld [vmem:[%s11] sm:%s4]
    %s13 = scalar_lea.vmem [#allocation0], 496
    %14 = vst [vmem:[%s13] sm:%s4] %v12
    %s15 = smul.addr 4, 61
    %s16 = scalar_lea.vmem %s0, %s15
    %v17 = vld [vmem:[%s16] sm:%s4]
    %s18 = scalar_lea.vmem [#allocation0], 488
    %19 = vst [vmem:[%s18] sm:%s4] %v17
    %s20 = smul.addr 4, 60
    %s21 = scalar_lea.vmem %s0, %s20
    %v22 = vld [vmem:[%s21] sm:%s4]
    %s23 = scalar_lea.vmem [#allocation0], 480
    %24 = vst [vmem:[%s23] sm:%s4] %v22
    %s25 = smul.addr 4, 59
    %s26 = scalar_lea.vmem %s0, %s25
    %v27 = vld [vmem:[%s26] sm:%s4]
    %s28 = scalar_lea.vmem [#allocation0], 472
    %29 = vst [vmem:[%s28] sm:%s4] %v27
    %s30 = smul.addr 4, 58
    %s31 = scalar_lea.vmem %s0, %s30
    %v32 = vld [vmem:[%s31] sm:%s4]
    %s33 = scalar_lea.vmem [#allocation0], 464
    %34 = vst [vmem:[%s33] sm:%s4] %v32
    %s35 = smul.addr 4, 57
    %s36 = scalar_lea.vmem %s0, %s35
    %v37 = vld [vmem:[%s36] sm:%s4]
    %s38 = scalar_lea.vmem [#allocation0], 456
    %39 = vst [vmem:[%s38] sm:%s4] %v37
    %s40 = smul.addr 4, 56
    %s41 = scalar_lea.vmem %s0, %s40
    %v42 = vld [vmem:[%s41] sm:%s4]
    %s43 = scalar_lea.vmem [#allocation0], 448
    %44 = vst [vmem:[%s43] sm:%s4] %v42
    %s45 = smul.addr 4, 55
    %s46 = scalar_lea.vmem %s0, %s45
    %v47 = vld [vmem:[%s46] sm:%s4]
    %s48 = scalar_lea.vmem [#allocation0], 440
    %49 = vst [vmem:[%s48] sm:%s4] %v47
    %s50 = smul.addr 4, 54
    %s51 = scalar_lea.vmem %s0, %s50
    %v52 = vld [vmem:[%s51] sm:%s4]
    %s53 = scalar_lea.vmem [#allocation0], 432
    %54 = vst [vmem:[%s53] sm:%s4] %v52
    %s55 = smul.addr 4, 53
    %s56 = scalar_lea.vmem %s0, %s55
    %v57 = vld [vmem:[%s56] sm:%s4]
    %s58 = scalar_lea.vmem [#allocation0], 424
    %59 = vst [vmem:[%s58] sm:%s4] %v57
    %s60 = smul.addr 4, 52
    %s61 = scalar_lea.vmem %s0, %s60
    %v62 = vld [vmem:[%s61] sm:%s4]
    %s63 = scalar_lea.vmem [#allocation0], 416
    %64 = vst [vmem:[%s63] sm:%s4] %v62
    %s65 = smul.addr 4, 51
    %s66 = scalar_lea.vmem %s0, %s65
    %v67 = vld [vmem:[%s66] sm:%s4]
    %s68 = scalar_lea.vmem [#allocation0], 408
    %69 = vst [vmem:[%s68] sm:%s4] %v67
    %s70 = smul.addr 4, 50
    %s71 = scalar_lea.vmem %s0, %s70
    %v72 = vld [vmem:[%s71] sm:%s4]
    %s73 = scalar_lea.vmem [#allocation0], 400
    %74 = vst [vmem:[%s73] sm:%s4] %v72
    %s75 = smul.addr 4, 49
    %s76 = scalar_lea.vmem %s0, %s75
    %v77 = vld [vmem:[%s76] sm:%s4]
    %s78 = scalar_lea.vmem [#allocation0], 392
    %79 = vst [vmem:[%s78] sm:%s4] %v77
    %s80 = smul.addr 4, 48
    %s81 = scalar_lea.vmem %s0, %s80
    %v82 = vld [vmem:[%s81] sm:%s4]
    %s83 = scalar_lea.vmem [#allocation0], 384
    %84 = vst [vmem:[%s83] sm:%s4] %v82
    %s85 = smul.addr 4, 47
    %s86 = scalar_lea.vmem %s0, %s85
    %v87 = vld [vmem:[%s86] sm:%s4]
    %s88 = scalar_lea.vmem [#allocation0], 376
    %89 = vst [vmem:[%s88] sm:%s4] %v87
    %s90 = smul.addr 4, 46
    %s91 = scalar_lea.vmem %s0, %s90
    %v92 = vld [vmem:[%s91] sm:%s4]
    %s93 = scalar_lea.vmem [#allocation0], 368
    %94 = vst [vmem:[%s93] sm:%s4] %v92
    %s95 = smul.addr 4, 45
    %s96 = scalar_lea.vmem %s0, %s95
    %v97 = vld [vmem:[%s96] sm:%s4]
    %s98 = scalar_lea.vmem [#allocation0], 360
    %99 = vst [vmem:[%s98] sm:%s4] %v97
    %s100 = smul.addr 4, 44
    %s101 = scalar_lea.vmem %s0, %s100
    %v102 = vld [vmem:[%s101] sm:%s4]
    %s103 = scalar_lea.vmem [#allocation0], 352
    %104 = vst [vmem:[%s103] sm:%s4] %v102
    %s105 = smul.addr 4, 43
    %s106 = scalar_lea.vmem %s0, %s105
    %v107 = vld [vmem:[%s106] sm:%s4]
    %s108 = scalar_lea.vmem [#allocation0], 344
    %109 = vst [vmem:[%s108] sm:%s4] %v107
    %s110 = smul.addr 4, 42
    %s111 = scalar_lea.vmem %s0, %s110
    %v112 = vld [vmem:[%s111] sm:%s4]
    %s113 = scalar_lea.vmem [#allocation0], 336
    %114 = vst [vmem:[%s113] sm:%s4] %v112
    %s115 = smul.addr 4, 41
    %s116 = scalar_lea.vmem %s0, %s115
    %v117 = vld [vmem:[%s116] sm:%s4]
    %s118 = scalar_lea.vmem [#allocation0], 328
    %119 = vst [vmem:[%s118] sm:%s4] %v117
    %s120 = smul.addr 4, 40
    %s121 = scalar_lea.vmem %s0, %s120
    %v122 = vld [vmem:[%s121] sm:%s4]
    %s123 = scalar_lea.vmem [#allocation0], 320
    %124 = vst [vmem:[%s123] sm:%s4] %v122
    %s125 = smul.addr 4, 39
    %s126 = scalar_lea.vmem %s0, %s125
    %v127 = vld [vmem:[%s126] sm:%s4]
    %s128 = scalar_lea.vmem [#allocation0], 312
    %129 = vst [vmem:[%s128] sm:%s4] %v127
    %s130 = smul.addr 4, 38
    %s131 = scalar_lea.vmem %s0, %s130
    %v132 = vld [vmem:[%s131] sm:%s4]
    %s133 = scalar_lea.vmem [#allocation0], 304
    %134 = vst [vmem:[%s133] sm:%s4] %v132
    %s135 = smul.addr 4, 37
    %s136 = scalar_lea.vmem %s0, %s135
    %v137 = vld [vmem:[%s136] sm:%s4]
    %s138 = scalar_lea.vmem [#allocation0], 296
    %139 = vst [vmem:[%s138] sm:%s4] %v137
    %s140 = smul.addr 4, 36
    %s141 = scalar_lea.vmem %s0, %s140
    %v142 = vld [vmem:[%s141] sm:%s4]
    %s143 = scalar_lea.vmem [#allocation0], 288
    %144 = vst [vmem:[%s143] sm:%s4] %v142
    %s145 = smul.addr 4, 35
    %s146 = scalar_lea.vmem %s0, %s145
    %v147 = vld [vmem:[%s146] sm:%s4]
    %s148 = scalar_lea.vmem [#allocation0], 280
    %149 = vst [vmem:[%s148] sm:%s4] %v147
    %s150 = smul.addr 4, 34
    %s151 = scalar_lea.vmem %s0, %s150
    %v152 = vld [vmem:[%s151] sm:%s4]
    %s153 = scalar_lea.vmem [#allocation0], 272
    %154 = vst [vmem:[%s153] sm:%s4] %v152
    %s155 = smul.addr 4, 33
    %s156 = scalar_lea.vmem %s0, %s155
    %v157 = vld [vmem:[%s156] sm:%s4]
    %s158 = scalar_lea.vmem [#allocation0], 264
    %159 = vst [vmem:[%s158] sm:%s4] %v157
    %s160 = smul.addr 4, 32
    %s161 = scalar_lea.vmem %s0, %s160
    %v162 = vld [vmem:[%s161] sm:%s4]
    %s163 = scalar_lea.vmem [#allocation0], 256
    %164 = vst [vmem:[%s163] sm:%s4] %v162
    %s165 = smul.addr 4, 31
    %s166 = scalar_lea.vmem %s0, %s165
    %v167 = vld [vmem:[%s166] sm:%s4]
    %s168 = scalar_lea.vmem [#allocation0], 248
    %169 = vst [vmem:[%s168] sm:%s4] %v167
    %s170 = smul.addr 4, 30
    %s171 = scalar_lea.vmem %s0, %s170
    %v172 = vld [vmem:[%s171] sm:%s4]
    %s173 = scalar_lea.vmem [#allocation0], 240
    %174 = vst [vmem:[%s173] sm:%s4] %v172
    %s175 = smul.addr 4, 29
    %s176 = scalar_lea.vmem %s0, %s175
    %v177 = vld [vmem:[%s176] sm:%s4]
    %s178 = scalar_lea.vmem [#allocation0], 232
    %179 = vst [vmem:[%s178] sm:%s4] %v177
    %s180 = smul.addr 4, 28
    %s181 = scalar_lea.vmem %s0, %s180
    %v182 = vld [vmem:[%s181] sm:%s4]
    %s183 = scalar_lea.vmem [#allocation0], 224
    %184 = vst [vmem:[%s183] sm:%s4] %v182
    %s185 = smul.addr 4, 27
    %s186 = scalar_lea.vmem %s0, %s185
    %v187 = vld [vmem:[%s186] sm:%s4]
    %s188 = scalar_lea.vmem [#allocation0], 216
    %189 = vst [vmem:[%s188] sm:%s4] %v187
    %s190 = smul.addr 4, 26
    %s191 = scalar_lea.vmem %s0, %s190
    %v192 = vld [vmem:[%s191] sm:%s4]
    %s193 = scalar_lea.vmem [#allocation0], 208
    %194 = vst [vmem:[%s193] sm:%s4] %v192
    %s195 = smul.addr 4, 25
    %s196 = scalar_lea.vmem %s0, %s195
    %v197 = vld [vmem:[%s196] sm:%s4]
    %s198 = scalar_lea.vmem [#allocation0], 200
    %199 = vst [vmem:[%s198] sm:%s4] %v197
    %s200 = smul.addr 4, 24
    %s201 = scalar_lea.vmem %s0, %s200
    %v202 = vld [vmem:[%s201] sm:%s4]
    %s203 = scalar_lea.vmem [#allocation0], 192
    %204 = vst [vmem:[%s203] sm:%s4] %v202
    %s205 = smul.addr 4, 23
    %s206 = scalar_lea.vmem %s0, %s205
    %v207 = vld [vmem:[%s206] sm:%s4]
    %s208 = scalar_lea.vmem [#allocation0], 184
    %209 = vst [vmem:[%s208] sm:%s4] %v207
    %s210 = smul.addr 4, 22
    %s211 = scalar_lea.vmem %s0, %s210
    %v212 = vld [vmem:[%s211] sm:%s4]
    %s213 = scalar_lea.vmem [#allocation0], 176
    %214 = vst [vmem:[%s213] sm:%s4] %v212
    %s215 = smul.addr 4, 21
    %s216 = scalar_lea.vmem %s0, %s215
    %v217 = vld [vmem:[%s216] sm:%s4]
    %s218 = scalar_lea.vmem [#allocation0], 168
    %219 = vst [vmem:[%s218] sm:%s4] %v217
    %s220 = smul.addr 4, 20
    %s221 = scalar_lea.vmem %s0, %s220
    %v222 = vld [vmem:[%s221] sm:%s4]
    %s223 = scalar_lea.vmem [#allocation0], 160
    %224 = vst [vmem:[%s223] sm:%s4] %v222
    %s225 = smul.addr 4, 19
    %s226 = scalar_lea.vmem %s0, %s225
    %v227 = vld [vmem:[%s226] sm:%s4]
    %s228 = scalar_lea.vmem [#allocation0], 152
    %229 = vst [vmem:[%s228] sm:%s4] %v227
    %s230 = smul.addr 4, 18
    %s231 = scalar_lea.vmem %s0, %s230
    %v232 = vld [vmem:[%s231] sm:%s4]
    %s233 = scalar_lea.vmem [#allocation0], 144
    %234 = vst [vmem:[%s233] sm:%s4] %v232
    %s235 = smul.addr 4, 17
    %s236 = scalar_lea.vmem %s0, %s235
    %v237 = vld [vmem:[%s236] sm:%s4]
    %s238 = scalar_lea.vmem [#allocation0], 136
    %239 = vst [vmem:[%s238] sm:%s4] %v237
    %s240 = smul.addr 4, 16
    %s241 = scalar_lea.vmem %s0, %s240
    %v242 = vld [vmem:[%s241] sm:%s4]
    %s243 = scalar_lea.vmem [#allocation0], 128
    %244 = vst [vmem:[%s243] sm:%s4] %v242
    %s245 = smul.addr 4, 15
    %s246 = scalar_lea.vmem %s0, %s245
    %v247 = vld [vmem:[%s246] sm:%s4]
    %s248 = scalar_lea.vmem [#allocation0], 120
    %249 = vst [vmem:[%s248] sm:%s4] %v247
    %s250 = smul.addr 4, 14
    %s251 = scalar_lea.vmem %s0, %s250
    %v252 = vld [vmem:[%s251] sm:%s4]
    %s253 = scalar_lea.vmem [#allocation0], 112
    %254 = vst [vmem:[%s253] sm:%s4] %v252
    %s255 = smul.addr 4, 13
    %s256 = scalar_lea.vmem %s0, %s255
    %v257 = vld [vmem:[%s256] sm:%s4]
    %s258 = scalar_lea.vmem [#allocation0], 104
    %259 = vst [vmem:[%s258] sm:%s4] %v257
    %s260 = smul.addr 4, 12
    %s261 = scalar_lea.vmem %s0, %s260
    %v262 = vld [vmem:[%s261] sm:%s4]
    %s263 = scalar_lea.vmem [#allocation0], 96
    %264 = vst [vmem:[%s263] sm:%s4] %v262
    %s265 = smul.addr 4, 11
    %s266 = scalar_lea.vmem %s0, %s265
    %v267 = vld [vmem:[%s266] sm:%s4]
    %s268 = scalar_lea.vmem [#allocation0], 88
    %269 = vst [vmem:[%s268] sm:%s4] %v267
    %s270 = smul.addr 4, 10
    %s271 = scalar_lea.vmem %s0, %s270
    %v272 = vld [vmem:[%s271] sm:%s4]
    %s273 = scalar_lea.vmem [#allocation0], 80
    %274 = vst [vmem:[%s273] sm:%s4] %v272
    %s275 = smul.addr 4, 9
    %s276 = scalar_lea.vmem %s0, %s275
    %v277 = vld [vmem:[%s276] sm:%s4]
    %s278 = scalar_lea.vmem [#allocation0], 72
    %279 = vst [vmem:[%s278] sm:%s4] %v277
    %s280 = smul.addr 4, 8
    %s281 = scalar_lea.vmem %s0, %s280
    %v282 = vld [vmem:[%s281] sm:%s4]
    %s283 = scalar_lea.vmem [#allocation0], 64
    %284 = vst [vmem:[%s283] sm:%s4] %v282
    %s285 = smul.addr 4, 7
    %s286 = scalar_lea.vmem %s0, %s285
    %v287 = vld [vmem:[%s286] sm:%s4]
    %s288 = scalar_lea.vmem [#allocation0], 56
    %289 = vst [vmem:[%s288] sm:%s4] %v287
    %s290 = smul.addr 4, 6
    %s291 = scalar_lea.vmem %s0, %s290
    %v292 = vld [vmem:[%s291] sm:%s4]
    %s293 = scalar_lea.vmem [#allocation0], 48
    %294 = vst [vmem:[%s293] sm:%s4] %v292
    %s295 = smul.addr 4, 5
    %s296 = scalar_lea.vmem %s0, %s295
    %v297 = vld [vmem:[%s296] sm:%s4]
    %s298 = scalar_lea.vmem [#allocation0], 40
    %299 = vst [vmem:[%s298] sm:%s4] %v297
    %s300 = smul.addr 4, 4
    %s301 = scalar_lea.vmem %s0, %s300
    %v302 = vld [vmem:[%s301] sm:%s4]
    %s303 = scalar_lea.vmem [#allocation0], 32
    %304 = vst [vmem:[%s303] sm:%s4] %v302
    %s305 = smul.addr 4, 3
    %s306 = scalar_lea.vmem %s0, %s305
    %v307 = vld [vmem:[%s306] sm:%s4]
    %s308 = scalar_lea.vmem [#allocation0], 24
    %309 = vst [vmem:[%s308] sm:%s4] %v307
    %s310 = smul.addr 4, 2
    %s311 = scalar_lea.vmem %s0, %s310
    %v312 = vld [vmem:[%s311] sm:%s4]
    %s313 = scalar_lea.vmem [#allocation0], 16
    %314 = vst [vmem:[%s313] sm:%s4] %v312
    %s315 = scalar_lea.vmem %s0, 4
    %v316 = vld [vmem:[%s315] sm:%s4]
    %s317 = scalar_lea.vmem [#allocation0], 8
    %318 = vst [vmem:[%s317] sm:%s4] %v316
    %v319 = vld [vmem:[%s0] sm:%s4]
    %320 = vst [vmem:[#allocation0] sm:%s4] %v319
    %s321 = smov 3
    %v322 = vld [vmem:[#allocation0] ss:$2 sm:%s321]
    %vm323 = vcmask 523264
    %324 = vst.msk [vmem:[%s1] ss:$8 sm:$0x3] %vm323, %v322
    %s325 = scalar_lea.vmem [#allocation0], 8
    %s326 = smov 3
    %v327 = vld [vmem:[%s325] ss:$2 sm:%s326]
    %vm328 = vcmask 523264
    %s329 = scalar_lea.vmem %s1, 1
    %330 = vst.msk [vmem:[%s329] ss:$8 sm:$0x3] %vm328, %v327
    %s331 = scalar_lea.vmem [#allocation0], 16
    %s332 = smov 3
    %v333 = vld [vmem:[%s331] ss:$2 sm:%s332]
    %vm334 = vcmask 523264
    %s335 = scalar_lea.vmem %s1, 2
    %336 = vst.msk [vmem:[%s335] ss:$8 sm:$0x3] %vm334, %v333
    %s337 = scalar_lea.vmem [#allocation0], 24
    %s338 = smov 3
    %v339 = vld [vmem:[%s337] ss:$2 sm:%s338]
    %vm340 = vcmask 523264
    %s341 = scalar_lea.vmem %s1, 3
    %342 = vst.msk [vmem:[%s341] ss:$8 sm:$0x3] %vm340, %v339
    %s343 = scalar_lea.vmem [#allocation0], 32
    %s344 = smov 3
    %v345 = vld [vmem:[%s343] ss:$2 sm:%s344]
    %vm346 = vcmask 523264
    %s347 = scalar_lea.vmem %s1, 4
    %348 = vst.msk [vmem:[%s347] ss:$8 sm:$0x3] %vm346, %v345
    %s349 = scalar_lea.vmem [#allocation0], 40
    %s350 = smov 3
    %v351 = vld [vmem:[%s349] ss:$2 sm:%s350]
    %vm352 = vcmask 523264
    %s353 = scalar_lea.vmem %s1, 5
    %354 = vst.msk [vmem:[%s353] ss:$8 sm:$0x3] %vm352, %v351
    %s355 = scalar_lea.vmem [#allocation0], 48
    %s356 = smov 3
    %v357 = vld [vmem:[%s355] ss:$2 sm:%s356]
    %vm358 = vcmask 523264
    %s359 = scalar_lea.vmem %s1, 6
    %360 = vst.msk [vmem:[%s359] ss:$8 sm:$0x3] %vm358, %v357
    %s361 = scalar_lea.vmem [#allocation0], 56
    %s362 = smov 3
    %v363 = vld [vmem:[%s361] ss:$2 sm:%s362]
    %vm364 = vcmask 523264
    %s365 = scalar_lea.vmem %s1, 7
    %366 = vst.msk [vmem:[%s365] ss:$8 sm:$0x3] %vm364, %v363
    %s367 = scalar_lea.vmem [#allocation0], 64
    %s368 = smov 3
    %v369 = vld [vmem:[%s367] ss:$2 sm:%s368]
    %vm370 = vcmask 523264
    %s371 = scalar_lea.vmem %s1, 16
    %372 = vst.msk [vmem:[%s371] ss:$8 sm:$0x3] %vm370, %v369
    %s373 = scalar_lea.vmem [#allocation0], 72
    %s374 = smov 3
    %v375 = vld [vmem:[%s373] ss:$2 sm:%s374]
    %vm376 = vcmask 523264
    %s377 = scalar_lea.vmem %s1, 17
    %378 = vst.msk [vmem:[%s377] ss:$8 sm:$0x3] %vm376, %v375
    %s379 = scalar_lea.vmem [#allocation0], 80
    %s380 = smov 3
    %v381 = vld [vmem:[%s379] ss:$2 sm:%s380]
    %vm382 = vcmask 523264
    %s383 = scalar_lea.vmem %s1, 18
    %384 = vst.msk [vmem:[%s383] ss:$8 sm:$0x3] %vm382, %v381
    %s385 = scalar_lea.vmem [#allocation0], 88
    %s386 = smov 3
    %v387 = vld [vmem:[%s385] ss:$2 sm:%s386]
    %vm388 = vcmask 523264
    %s389 = scalar_lea.vmem %s1, 19
    %390 = vst.msk [vmem:[%s389] ss:$8 sm:$0x3] %vm388, %v387
    %s391 = scalar_lea.vmem [#allocation0], 96
    %s392 = smov 3
    %v393 = vld [vmem:[%s391] ss:$2 sm:%s392]
    %vm394 = vcmask 523264
    %s395 = scalar_lea.vmem %s1, 20
    %396 = vst.msk [vmem:[%s395] ss:$8 sm:$0x3] %vm394, %v393
    %s397 = scalar_lea.vmem [#allocation0], 104
    %s398 = smov 3
    %v399 = vld [vmem:[%s397] ss:$2 sm:%s398]
    %vm400 = vcmask 523264
    %s401 = scalar_lea.vmem %s1, 21
    %402 = vst.msk [vmem:[%s401] ss:$8 sm:$0x3] %vm400, %v399
    %s403 = scalar_lea.vmem [#allocation0], 112
    %s404 = smov 3
    %v405 = vld [vmem:[%s403] ss:$2 sm:%s404]
    %vm406 = vcmask 523264
    %s407 = scalar_lea.vmem %s1, 22
    %408 = vst.msk [vmem:[%s407] ss:$8 sm:$0x3] %vm406, %v405
    %s409 = scalar_lea.vmem [#allocation0], 120
    %s410 = smov 3
    %v411 = vld [vmem:[%s409] ss:$2 sm:%s410]
    %vm412 = vcmask 523264
    %s413 = scalar_lea.vmem %s1, 23
    %414 = vst.msk [vmem:[%s413] ss:$8 sm:$0x3] %vm412, %v411
    %s415 = scalar_lea.vmem [#allocation0], 128
    %s416 = smov 3
    %v417 = vld [vmem:[%s415] ss:$2 sm:%s416]
    %vm418 = vcmask 523264
    %s419 = scalar_lea.vmem %s1, 32
    %420 = vst.msk [vmem:[%s419] ss:$8 sm:$0x3] %vm418, %v417
    %s421 = scalar_lea.vmem [#allocation0], 136
    %s422 = smov 3
    %v423 = vld [vmem:[%s421] ss:$2 sm:%s422]
    %vm424 = vcmask 523264
    %s425 = scalar_lea.vmem %s1, 33
    %426 = vst.msk [vmem:[%s425] ss:$8 sm:$0x3] %vm424, %v423
    %s427 = scalar_lea.vmem [#allocation0], 144
    %s428 = smov 3
    %v429 = vld [vmem:[%s427] ss:$2 sm:%s428]
    %vm430 = vcmask 523264
    %s431 = scalar_lea.vmem %s1, 34
    %432 = vst.msk [vmem:[%s431] ss:$8 sm:$0x3] %vm430, %v429
    %s433 = scalar_lea.vmem [#allocation0], 152
    %s434 = smov 3
    %v435 = vld [vmem:[%s433] ss:$2 sm:%s434]
    %vm436 = vcmask 523264
    %s437 = scalar_lea.vmem %s1, 35
    %438 = vst.msk [vmem:[%s437] ss:$8 sm:$0x3] %vm436, %v435
    %s439 = scalar_lea.vmem [#allocation0], 160
    %s440 = smov 3
    %v441 = vld [vmem:[%s439] ss:$2 sm:%s440]
    %vm442 = vcmask 523264
    %s443 = scalar_lea.vmem %s1, 36
    %444 = vst.msk [vmem:[%s443] ss:$8 sm:$0x3] %vm442, %v441
    %s445 = scalar_lea.vmem [#allocation0], 168
    %s446 = smov 3
    %v447 = vld [vmem:[%s445] ss:$2 sm:%s446]
    %vm448 = vcmask 523264
    %s449 = scalar_lea.vmem %s1, 37
    %450 = vst.msk [vmem:[%s449] ss:$8 sm:$0x3] %vm448, %v447
    %s451 = scalar_lea.vmem [#allocation0], 176
    %s452 = smov 3
    %v453 = vld [vmem:[%s451] ss:$2 sm:%s452]
    %vm454 = vcmask 523264
    %s455 = scalar_lea.vmem %s1, 38
    %456 = vst.msk [vmem:[%s455] ss:$8 sm:$0x3] %vm454, %v453
    %s457 = scalar_lea.vmem [#allocation0], 184
    %s458 = smov 3
    %v459 = vld [vmem:[%s457] ss:$2 sm:%s458]
    %vm460 = vcmask 523264
    %s461 = scalar_lea.vmem %s1, 39
    %462 = vst.msk [vmem:[%s461] ss:$8 sm:$0x3] %vm460, %v459
    %s463 = scalar_lea.vmem [#allocation0], 192
    %s464 = smov 3
    %v465 = vld [vmem:[%s463] ss:$2 sm:%s464]
    %vm466 = vcmask 523264
    %s467 = scalar_lea.vmem %s1, 48
    %468 = vst.msk [vmem:[%s467] ss:$8 sm:$0x3] %vm466, %v465
    %s469 = scalar_lea.vmem [#allocation0], 200
    %s470 = smov 3
    %v471 = vld [vmem:[%s469] ss:$2 sm:%s470]
    %vm472 = vcmask 523264
    %s473 = scalar_lea.vmem %s1, 49
    %474 = vst.msk [vmem:[%s473] ss:$8 sm:$0x3] %vm472, %v471
    %s475 = scalar_lea.vmem [#allocation0], 208
    %s476 = smov 3
    %v477 = vld [vmem:[%s475] ss:$2 sm:%s476]
    %vm478 = vcmask 523264
    %s479 = scalar_lea.vmem %s1, 50
    %480 = vst.msk [vmem:[%s479] ss:$8 sm:$0x3] %vm478, %v477
    %s481 = scalar_lea.vmem [#allocation0], 216
    %s482 = smov 3
    %v483 = vld [vmem:[%s481] ss:$2 sm:%s482]
    %vm484 = vcmask 523264
    %s485 = scalar_lea.vmem %s1, 51
    %486 = vst.msk [vmem:[%s485] ss:$8 sm:$0x3] %vm484, %v483
    %s487 = scalar_lea.vmem [#allocation0], 224
    %s488 = smov 3
    %v489 = vld [vmem:[%s487] ss:$2 sm:%s488]
    %vm490 = vcmask 523264
    %s491 = scalar_lea.vmem %s1, 52
    %492 = vst.msk [vmem:[%s491] ss:$8 sm:$0x3] %vm490, %v489
    %s493 = scalar_lea.vmem [#allocation0], 232
    %s494 = smov 3
    %v495 = vld [vmem:[%s493] ss:$2 sm:%s494]
    %vm496 = vcmask 523264
    %s497 = scalar_lea.vmem %s1, 53
    %498 = vst.msk [vmem:[%s497] ss:$8 sm:$0x3] %vm496, %v495
    %s499 = scalar_lea.vmem [#allocation0], 240
    %s500 = smov 3
    %v501 = vld [vmem:[%s499] ss:$2 sm:%s500]
    %vm502 = vcmask 523264
    %s503 = scalar_lea.vmem %s1, 54
    %504 = vst.msk [vmem:[%s503] ss:$8 sm:$0x3] %vm502, %v501
    %s505 = scalar_lea.vmem [#allocation0], 248
    %s506 = smov 3
    %v507 = vld [vmem:[%s505] ss:$2 sm:%s506]
    %vm508 = vcmask 523264
    %s509 = scalar_lea.vmem %s1, 55
    %510 = vst.msk [vmem:[%s509] ss:$8 sm:$0x3] %vm508, %v507
    %s511 = scalar_lea.vmem [#allocation0], 256
    %s512 = smov 3
    %v513 = vld [vmem:[%s511] ss:$2 sm:%s512]
    %vm514 = vcmask 523264
    %s515 = scalar_lea.vmem %s1, 64
    %516 = vst.msk [vmem:[%s515] ss:$8 sm:$0x3] %vm514, %v513
    %s517 = scalar_lea.vmem [#allocation0], 264
    %s518 = smov 3
    %v519 = vld [vmem:[%s517] ss:$2 sm:%s518]
    %vm520 = vcmask 523264
    %s521 = scalar_lea.vmem %s1, 65
    %522 = vst.msk [vmem:[%s521] ss:$8 sm:$0x3] %vm520, %v519
    %s523 = scalar_lea.vmem [#allocation0], 272
    %s524 = smov 3
    %v525 = vld [vmem:[%s523] ss:$2 sm:%s524]
    %vm526 = vcmask 523264
    %s527 = scalar_lea.vmem %s1, 66
    %528 = vst.msk [vmem:[%s527] ss:$8 sm:$0x3] %vm526, %v525
    %s529 = scalar_lea.vmem [#allocation0], 280
    %s530 = smov 3
    %v531 = vld [vmem:[%s529] ss:$2 sm:%s530]
    %vm532 = vcmask 523264
    %s533 = scalar_lea.vmem %s1, 67
    %534 = vst.msk [vmem:[%s533] ss:$8 sm:$0x3] %vm532, %v531
    %s535 = scalar_lea.vmem [#allocation0], 288
    %s536 = smov 3
    %v537 = vld [vmem:[%s535] ss:$2 sm:%s536]
    %vm538 = vcmask 523264
    %s539 = scalar_lea.vmem %s1, 68
    %540 = vst.msk [vmem:[%s539] ss:$8 sm:$0x3] %vm538, %v537
    %s541 = scalar_lea.vmem [#allocation0], 296
    %s542 = smov 3
    %v543 = vld [vmem:[%s541] ss:$2 sm:%s542]
    %vm544 = vcmask 523264
    %s545 = scalar_lea.vmem %s1, 69
    %546 = vst.msk [vmem:[%s545] ss:$8 sm:$0x3] %vm544, %v543
    %s547 = scalar_lea.vmem [#allocation0], 304
    %s548 = smov 3
    %v549 = vld [vmem:[%s547] ss:$2 sm:%s548]
    %vm550 = vcmask 523264
    %s551 = scalar_lea.vmem %s1, 70
    %552 = vst.msk [vmem:[%s551] ss:$8 sm:$0x3] %vm550, %v549
    %s553 = scalar_lea.vmem [#allocation0], 312
    %s554 = smov 3
    %v555 = vld [vmem:[%s553] ss:$2 sm:%s554]
    %vm556 = vcmask 523264
    %s557 = scalar_lea.vmem %s1, 71
    %558 = vst.msk [vmem:[%s557] ss:$8 sm:$0x3] %vm556, %v555
    %s559 = scalar_lea.vmem [#allocation0], 320
    %s560 = smov 3
    %v561 = vld [vmem:[%s559] ss:$2 sm:%s560]
    %vm562 = vcmask 523264
    %s563 = scalar_lea.vmem %s1, 80
    %564 = vst.msk [vmem:[%s563] ss:$8 sm:$0x3] %vm562, %v561
    %s565 = scalar_lea.vmem [#allocation0], 328
    %s566 = smov 3
    %v567 = vld [vmem:[%s565] ss:$2 sm:%s566]
    %vm568 = vcmask 523264
    %s569 = scalar_lea.vmem %s1, 81
    %570 = vst.msk [vmem:[%s569] ss:$8 sm:$0x3] %vm568, %v567
    %s571 = scalar_lea.vmem [#allocation0], 336
    %s572 = smov 3
    %v573 = vld [vmem:[%s571] ss:$2 sm:%s572]
    %vm574 = vcmask 523264
    %s575 = scalar_lea.vmem %s1, 82
    %576 = vst.msk [vmem:[%s575] ss:$8 sm:$0x3] %vm574, %v573
    %s577 = scalar_lea.vmem [#allocation0], 344
    %s578 = smov 3
    %v579 = vld [vmem:[%s577] ss:$2 sm:%s578]
    %vm580 = vcmask 523264
    %s581 = scalar_lea.vmem %s1, 83
    %582 = vst.msk [vmem:[%s581] ss:$8 sm:$0x3] %vm580, %v579
    %s583 = scalar_lea.vmem [#allocation0], 352
    %s584 = smov 3
    %v585 = vld [vmem:[%s583] ss:$2 sm:%s584]
    %vm586 = vcmask 523264
    %s587 = scalar_lea.vmem %s1, 84
    %588 = vst.msk [vmem:[%s587] ss:$8 sm:$0x3] %vm586, %v585
    %s589 = scalar_lea.vmem [#allocation0], 360
    %s590 = smov 3
    %v591 = vld [vmem:[%s589] ss:$2 sm:%s590]
    %vm592 = vcmask 523264
    %s593 = scalar_lea.vmem %s1, 85
    %594 = vst.msk [vmem:[%s593] ss:$8 sm:$0x3] %vm592, %v591
    %s595 = scalar_lea.vmem [#allocation0], 368
    %s596 = smov 3
    %v597 = vld [vmem:[%s595] ss:$2 sm:%s596]
    %vm598 = vcmask 523264
    %s599 = scalar_lea.vmem %s1, 86
    %600 = vst.msk [vmem:[%s599] ss:$8 sm:$0x3] %vm598, %v597
    %s601 = scalar_lea.vmem [#allocation0], 376
    %s602 = smov 3
    %v603 = vld [vmem:[%s601] ss:$2 sm:%s602]
    %vm604 = vcmask 523264
    %s605 = scalar_lea.vmem %s1, 87
    %606 = vst.msk [vmem:[%s605] ss:$8 sm:$0x3] %vm604, %v603
    %s607 = scalar_lea.vmem [#allocation0], 384
    %s608 = smov 3
    %v609 = vld [vmem:[%s607] ss:$2 sm:%s608]
    %vm610 = vcmask 523264
    %s611 = scalar_lea.vmem %s1, 96
    %612 = vst.msk [vmem:[%s611] ss:$8 sm:$0x3] %vm610, %v609
    %s613 = scalar_lea.vmem [#allocation0], 392
    %s614 = smov 3
    %v615 = vld [vmem:[%s613] ss:$2 sm:%s614]
    %vm616 = vcmask 523264
    %s617 = scalar_lea.vmem %s1, 97
    %618 = vst.msk [vmem:[%s617] ss:$8 sm:$0x3] %vm616, %v615
    %s619 = scalar_lea.vmem [#allocation0], 400
    %s620 = smov 3
    %v621 = vld [vmem:[%s619] ss:$2 sm:%s620]
    %vm622 = vcmask 523264
    %s623 = scalar_lea.vmem %s1, 98
    %624 = vst.msk [vmem:[%s623] ss:$8 sm:$0x3] %vm622, %v621
    %s625 = scalar_lea.vmem [#allocation0], 408
    %s626 = smov 3
    %v627 = vld [vmem:[%s625] ss:$2 sm:%s626]
    %vm628 = vcmask 523264
    %s629 = scalar_lea.vmem %s1, 99
    %630 = vst.msk [vmem:[%s629] ss:$8 sm:$0x3] %vm628, %v627
    %s631 = scalar_lea.vmem [#allocation0], 416
    %s632 = smov 3
    %v633 = vld [vmem:[%s631] ss:$2 sm:%s632]
    %vm634 = vcmask 523264
    %s635 = scalar_lea.vmem %s1, 100
    %636 = vst.msk [vmem:[%s635] ss:$8 sm:$0x3] %vm634, %v633
    %s637 = scalar_lea.vmem [#allocation0], 424
    %s638 = smov 3
    %v639 = vld [vmem:[%s637] ss:$2 sm:%s638]
    %vm640 = vcmask 523264
    %s641 = scalar_lea.vmem %s1, 101
    %642 = vst.msk [vmem:[%s641] ss:$8 sm:$0x3] %vm640, %v639
    %s643 = scalar_lea.vmem [#allocation0], 432
    %s644 = smov 3
    %v645 = vld [vmem:[%s643] ss:$2 sm:%s644]
    %vm646 = vcmask 523264
    %s647 = scalar_lea.vmem %s1, 102
    %648 = vst.msk [vmem:[%s647] ss:$8 sm:$0x3] %vm646, %v645
    %s649 = scalar_lea.vmem [#allocation0], 440
    %s650 = smov 3
    %v651 = vld [vmem:[%s649] ss:$2 sm:%s650]
    %vm652 = vcmask 523264
    %s653 = scalar_lea.vmem %s1, 103
    %654 = vst.msk [vmem:[%s653] ss:$8 sm:$0x3] %vm652, %v651
    %s655 = scalar_lea.vmem [#allocation0], 448
    %s656 = smov 3
    %v657 = vld [vmem:[%s655] ss:$2 sm:%s656]
    %vm658 = vcmask 523264
    %s659 = scalar_lea.vmem %s1, 112
    %660 = vst.msk [vmem:[%s659] ss:$8 sm:$0x3] %vm658, %v657
    %s661 = scalar_lea.vmem [#allocation0], 456
    %s662 = smov 3
    %v663 = vld [vmem:[%s661] ss:$2 sm:%s662]
    %vm664 = vcmask 523264
    %s665 = scalar_lea.vmem %s1, 113
    %666 = vst.msk [vmem:[%s665] ss:$8 sm:$0x3] %vm664, %v663
    %s667 = scalar_lea.vmem [#allocation0], 464
    %s668 = smov 3
    %v669 = vld [vmem:[%s667] ss:$2 sm:%s668]
    %vm670 = vcmask 523264
    %s671 = scalar_lea.vmem %s1, 114
    %672 = vst.msk [vmem:[%s671] ss:$8 sm:$0x3] %vm670, %v669
    %s673 = scalar_lea.vmem [#allocation0], 472
    %s674 = smov 3
    %v675 = vld [vmem:[%s673] ss:$2 sm:%s674]
    %vm676 = vcmask 523264
    %s677 = scalar_lea.vmem %s1, 115
    %678 = vst.msk [vmem:[%s677] ss:$8 sm:$0x3] %vm676, %v675
    %s679 = scalar_lea.vmem [#allocation0], 480
    %s680 = smov 3
    %v681 = vld [vmem:[%s679] ss:$2 sm:%s680]
    %vm682 = vcmask 523264
    %s683 = scalar_lea.vmem %s1, 116
    %684 = vst.msk [vmem:[%s683] ss:$8 sm:$0x3] %vm682, %v681
    %s685 = scalar_lea.vmem [#allocation0], 488
    %s686 = smov 3
    %v687 = vld [vmem:[%s685] ss:$2 sm:%s686]
    %vm688 = vcmask 523264
    %s689 = scalar_lea.vmem %s1, 117
    %690 = vst.msk [vmem:[%s689] ss:$8 sm:$0x3] %vm688, %v687
    %s691 = scalar_lea.vmem [#allocation0], 496
    %s692 = smov 3
    %v693 = vld [vmem:[%s691] ss:$2 sm:%s692]
    %vm694 = vcmask 523264
    %s695 = scalar_lea.vmem %s1, 118
    %696 = vst.msk [vmem:[%s695] ss:$8 sm:$0x3] %vm694, %v693
    %s697 = scalar_lea.vmem [#allocation0], 504
    %s698 = smov 3
    %v699 = vld [vmem:[%s697] ss:$2 sm:%s698]
    %vm700 = vcmask 523264
    %s701 = scalar_lea.vmem %s1, 119
    %702 = vst.msk [vmem:[%s701] ss:$8 sm:$0x3] %vm700, %v699
    %s703 = scalar_lea.vmem [#allocation0], 1
    %v704 = vld [vmem:[%s703] ss:$8 sm:$0xf]
    %s705 = scalar_lea.vmem [#allocation0], 1
    %v706 = vld [vmem:[%s705] ss:$8 sm:$0xf0]
    %vm707 = vcmask 1047556
    %v708 = vsel %vm707, %v706, %v704
    %709 = vrot.lane.b32.xlu0 %v708, 64
    %v710 = vpop.permute.xlu0 %709
    %vm711 = vcmask 1048064
    %712 = vst.msk [vmem:[%s1] sm:$0xff] %vm711, %v710
    %s713 = scalar_lea.vmem [#allocation0], 129
    %v714 = vld [vmem:[%s713] ss:$8 sm:$0xf]
    %s715 = scalar_lea.vmem [#allocation0], 129
    %v716 = vld [vmem:[%s715] ss:$8 sm:$0xf0]
    %vm717 = vcmask 1047556
    %v718 = vsel %vm717, %v716, %v714
    %719 = vrot.lane.b32.xlu0 %v718, 64
    %v720 = vpop.permute.xlu0 %719
    %vm721 = vcmask 1048064
    %s722 = scalar_lea.vmem %s1, 32
    %723 = vst.msk [vmem:[%s722] sm:$0xff] %vm721, %v720
    %s724 = scalar_lea.vmem [#allocation0], 257
    %v725 = vld [vmem:[%s724] ss:$8 sm:$0xf]
    %s726 = scalar_lea.vmem [#allocation0], 257
    %v727 = vld [vmem:[%s726] ss:$8 sm:$0xf0]
    %vm728 = vcmask 1047556
    %v729 = vsel %vm728, %v727, %v725
    %730 = vrot.lane.b32.xlu0 %v729, 64
    %v731 = vpop.permute.xlu0 %730
    %vm732 = vcmask 1048064
    %s733 = scalar_lea.vmem %s1, 64
    %734 = vst.msk [vmem:[%s733] sm:$0xff] %vm732, %v731
    %s735 = scalar_lea.vmem [#allocation0], 385
    %v736 = vld [vmem:[%s735] ss:$8 sm:$0xf]
    %s737 = scalar_lea.vmem [#allocation0], 385
    %v738 = vld [vmem:[%s737] ss:$8 sm:$0xf0]
    %vm739 = vcmask 1047556
    %v740 = vsel %vm739, %v738, %v736
    %741 = vrot.lane.b32.xlu0 %v740, 64
    %v742 = vpop.permute.xlu0 %741
    %vm743 = vcmask 1048064
    %s744 = scalar_lea.vmem %s1, 96
    %745 = vst.msk [vmem:[%s744] sm:$0xff] %vm743, %v742
    %s746 = scalar_lea.vmem [#allocation0], 65
    %v747 = vld [vmem:[%s746] ss:$8 sm:$0xf]
    %s748 = scalar_lea.vmem [#allocation0], 65
    %v749 = vld [vmem:[%s748] ss:$8 sm:$0xf0]
    %vm750 = vcmask 1047556
    %v751 = vsel %vm750, %v749, %v747
    %752 = vrot.lane.b32.xlu0 %v751, 64
    %v753 = vpop.permute.xlu0 %752
    %vm754 = vcmask 1048064
    %s755 = scalar_lea.vmem %s1, 16
    %756 = vst.msk [vmem:[%s755] sm:$0xff] %vm754, %v753
    %s757 = scalar_lea.vmem [#allocation0], 193
    %v758 = vld [vmem:[%s757] ss:$8 sm:$0xf]
    %s759 = scalar_lea.vmem [#allocation0], 193
    %v760 = vld [vmem:[%s759] ss:$8 sm:$0xf0]
    %vm761 = vcmask 1047556
    %v762 = vsel %vm761, %v760, %v758
    %763 = vrot.lane.b32.xlu0 %v762, 64
    %v764 = vpop.permute.xlu0 %763
    %vm765 = vcmask 1048064
    %s766 = scalar_lea.vmem %s1, 48
    %767 = vst.msk [vmem:[%s766] sm:$0xff] %vm765, %v764
    %s768 = scalar_lea.vmem [#allocation0], 321
    %v769 = vld [vmem:[%s768] ss:$8 sm:$0xf]
    %s770 = scalar_lea.vmem [#allocation0], 321
    %v771 = vld [vmem:[%s770] ss:$8 sm:$0xf0]
    %vm772 = vcmask 1047556
    %v773 = vsel %vm772, %v771, %v769
    %774 = vrot.lane.b32.xlu0 %v773, 64
    %v775 = vpop.permute.xlu0 %774
    %vm776 = vcmask 1048064
    %s777 = scalar_lea.vmem %s1, 80
    %778 = vst.msk [vmem:[%s777] sm:$0xff] %vm776, %v775
    %s779 = scalar_lea.vmem [#allocation0], 449
    %v780 = vld [vmem:[%s779] ss:$8 sm:$0xf]
    %s781 = scalar_lea.vmem [#allocation0], 449
    %v782 = vld [vmem:[%s781] ss:$8 sm:$0xf0]
    %vm783 = vcmask 1047556
    %v784 = vsel %vm783, %v782, %v780
    %785 = vrot.lane.b32.xlu0 %v784, 64
    %v786 = vpop.permute.xlu0 %785
    %vm787 = vcmask 1048064
    %s788 = scalar_lea.vmem %s1, 112
    %789 = vst.msk [vmem:[%s788] sm:$0xff] %vm787, %v786

// kernel: _lambda_.1
$region0: #{_lambda_.1}
  #allocation0 [shape = 'u32[]', space=smem, size = 0x4, offset = 0x4, fixed_abs, tag = 'smem constant byte address 0x4 - core index']
  #allocation1 [shape = 'u32[144,128]{1,0:T(1,128)}', space=vmem, size = 0x12000, scoped, tag = 'internal scratch']
  %s0 = inlined_call_operand.vmem [shape: f32[8,8,192], index: 0, kind: input, shape index: {}]
  %s1 = inlined_call_operand.vmem [shape: f32[1,192], index: 1, kind: input, shape index: {}]
  %s2 = inlined_call_operand.vmem [shape: f32[1,192], index: 2, kind: input, shape index: {}]
  %s3 = inlined_call_operand.vmem [shape: f32[64,192], index: 3, kind: input, shape index: {}]
  %s4 = inlined_call_operand.vmem [shape: f32[1,64], index: 4, kind: input, shape index: {}]
  %s5 = inlined_call_operand.vmem [shape: f32[64,192], index: 5, kind: input, shape index: {}]
  %s6 = inlined_call_operand.vmem [shape: f32[1,192], index: 6, kind: input, shape index: {}]
  %s7 = inlined_call_operand.vmem [shape: f32[64,192], index: 7, kind: input, shape index: {}]
  %s8 = inlined_call_operand.vmem [shape: f32[1,64], index: 8, kind: input, shape index: {}]
  %s9 = inlined_call_operand.vmem [shape: f32[4,64,64], index: 9, kind: input, shape index: {}]
  %s10 = inlined_call_operand.vmem [shape: f32[1,64], index: 10, kind: input, shape index: {}]
  %s11 = inlined_call_operand.vmem [shape: f32[64,4], index: 11, kind: input, shape index: {}]
  %s12 = inlined_call_operand.vmem [shape: f32[1,4], index: 12, kind: input, shape index: {}]
  %s13 = inlined_call_operand.vmem [shape: f32[8,4], index: 13, kind: output, shape index: {}]
  %s14 = sld [smem:[#allocation0]]
  $region62: #{_lambda_.1} parent=0
    _
  %s16 = ssub.s32 1, %s14
  %s17 = scalar_select 0, %s16, %s14
  // Predicated region
  $region2: #{_lambda_.1} parent=0 // pred_check
    _
  $region3: #{_lambda_.1} parent=0 // pred_check_branch
    %19 = sbr.rel (0) target = $region5
  $region4: #{_lambda_.1} parent=0 // pred_region
    _
  $region5: #{_lambda_.1} parent=0 // pred_fallthru
    _
  // Predicated region
  $region6: #{_lambda_.1} parent=0 // pred_check
    _
  $region7: #{_lambda_.1} parent=0 // pred_check_branch
    %21 = sbr.rel (0) target = $region9
  $region8: #{_lambda_.1} parent=0 // pred_region
    _
  $region9: #{_lambda_.1} parent=0 // pred_fallthru
    _
  // Predicated region
  $region10: #{_lambda_.1} parent=0 // pred_check
    _
  $region11: #{_lambda_.1} parent=0 // pred_check_branch
    %23 = sbr.rel (0) target = $region13
  $region12: #{_lambda_.1} parent=0 // pred_region
    _
  $region13: #{_lambda_.1} parent=0 // pred_fallthru
    _
  // Predicated region
  $region14: #{_lambda_.1} parent=0 // pred_check
    _
  $region15: #{_lambda_.1} parent=0 // pred_check_branch
    %25 = sbr.rel (0) target = $region17
  $region16: #{_lambda_.1} parent=0 // pred_region
    _
  $region17: #{_lambda_.1} parent=0 // pred_fallthru
    _
  // Predicated region
  $region18: #{_lambda_.1} parent=0 // pred_check
    _
  $region19: #{_lambda_.1} parent=0 // pred_check_branch
    %27 = sbr.rel (0) target = $region21
  $region20: #{_lambda_.1} parent=0 // pred_region
    _
  $region21: #{_lambda_.1} parent=0 // pred_fallthru
    _
  // Predicated region
  $region22: #{_lambda_.1} parent=0 // pred_check
    _
  $region23: #{_lambda_.1} parent=0 // pred_check_branch
    %29 = sbr.rel (0) target = $region25
  $region24: #{_lambda_.1} parent=0 // pred_region
    _
  $region25: #{_lambda_.1} parent=0 // pred_fallthru
    _
  // Predicated region
  $region26: #{_lambda_.1} parent=0 // pred_check
    _
  $region27: #{_lambda_.1} parent=0 // pred_check_branch
    %31 = sbr.rel (0) target = $region29
  $region28: #{_lambda_.1} parent=0 // pred_region
    _
  $region29: #{_lambda_.1} parent=0 // pred_fallthru
    _
  // Predicated region
  $region30: #{_lambda_.1} parent=0 // pred_check
    _
  $region31: #{_lambda_.1} parent=0 // pred_check_branch
    %33 = sbr.rel (0) target = $region33
  $region32: #{_lambda_.1} parent=0 // pred_region
    _
  $region33: #{_lambda_.1} parent=0 // pred_fallthru
    _
  // Predicated region
  $region34: #{_lambda_.1} parent=0 // pred_check
    _
  $region35: #{_lambda_.1} parent=0 // pred_check_branch
    %35 = sbr.rel (0) target = $region37
  $region36: #{_lambda_.1} parent=0 // pred_region
    _
  $region37: #{_lambda_.1} parent=0 // pred_fallthru
    _
  // Predicated region
  $region38: #{_lambda_.1} parent=0 // pred_check
    _
  $region39: #{_lambda_.1} parent=0 // pred_check_branch
    %37 = sbr.rel (0) target = $region41
  $region40: #{_lambda_.1} parent=0 // pred_region
    _
  $region41: #{_lambda_.1} parent=0 // pred_fallthru
    _
  // Predicated region
  $region42: #{_lambda_.1} parent=0 // pred_check
    _
  $region43: #{_lambda_.1} parent=0 // pred_check_branch
    %39 = sbr.rel (0) target = $region45
  $region44: #{_lambda_.1} parent=0 // pred_region
    _
  $region45: #{_lambda_.1} parent=0 // pred_fallthru
    _
  // Predicated region
  $region46: #{_lambda_.1} parent=0 // pred_check
    _
  $region47: #{_lambda_.1} parent=0 // pred_check_branch
    %41 = sbr.rel (0) target = $region49
  $region48: #{_lambda_.1} parent=0 // pred_region
    _
  $region49: #{_lambda_.1} parent=0 // pred_fallthru
    _
  // Predicated region
  $region50: #{_lambda_.1} parent=0 // pred_check
    _
  $region51: #{_lambda_.1} parent=0 // pred_check_branch
    %43 = sbr.rel (0) target = $region53
  $region52: #{_lambda_.1} parent=0 // pred_region
    _
  $region53: #{_lambda_.1} parent=0 // pred_fallthru
    _
  %v44 = vld [vmem:[%s0] sm:$0xff]
  %v45 = vld [vmem:[%s0 + $0x8] sm:$0xff]
  %v46 = vld [vmem:[%s0 + $0x10] sm:$0xff]
  %v47 = vld [vmem:[%s0 + $0x18] sm:$0xff]
  %v48 = vld [vmem:[%s0 + $0x20] sm:$0xff]
  %v49 = vld [vmem:[%s0 + $0x28] sm:$0xff]
  %v50 = vld [vmem:[%s0 + $0x30] sm:$0xff]
  %v51 = vld [vmem:[%s0 + $0x38] sm:$0xff]
  %v52 = vld [vmem:[%s0 + $0x40] sm:$0xff]
  %v53 = vld [vmem:[%s0 + $0x48] sm:$0xff]
  %v54 = vld [vmem:[%s0 + $0x50] sm:$0xff]
  %v55 = vld [vmem:[%s0 + $0x58] sm:$0xff]
  %v56 = vld [vmem:[%s0 + $0x60] sm:$0xff]
  %v57 = vld [vmem:[%s0 + $0x68] sm:$0xff]
  %v58 = vld [vmem:[%s0 + $0x70] sm:$0xff]
  %v59 = vld [vmem:[%s0 + $0x78] sm:$0xff]
  %v60 = vld [vmem:[%s1] sm:$0x3]
  %v62 = vlaneseq
  %v63 = vshrl.u32 %v62, 7
  %v64 = vsub.s32 0, %v63
  %v65 = vrot.slane %v60, %v64
  %v66 = vlaneseq
  %v67 = vshrl.u32 %v66, 7
  %v68 = vsub.s32 1, %v67
  %v69 = vrot.slane %v60, %v68
  %v72 = vmul.f32 %v44, %v65
  %v73 = vmul.f32 %v45, %v69
  %v74 = vmul.f32 %v46, %v65
  %v75 = vmul.f32 %v47, %v69
  %v76 = vmul.f32 %v48, %v65
  %v77 = vmul.f32 %v49, %v69
  %v78 = vmul.f32 %v50, %v65
  %v79 = vmul.f32 %v51, %v69
  %v80 = vmul.f32 %v52, %v65
  %v81 = vmul.f32 %v53, %v69
  %v82 = vmul.f32 %v54, %v65
  %v83 = vmul.f32 %v55, %v69
  %v84 = vmul.f32 %v56, %v65
  %v85 = vmul.f32 %v57, %v69
  %v86 = vmul.f32 %v58, %v65
  %v87 = vmul.f32 %v59, %v69
  %v88 = vld [vmem:[%s2] sm:$0x3]
  %v90 = vlaneseq
  %v91 = vshrl.u32 %v90, 7
  %v92 = vsub.s32 0, %v91
  %v93 = vrot.slane %v88, %v92
  %v94 = vlaneseq
  %v95 = vshrl.u32 %v94, 7
  %v96 = vsub.s32 1, %v95
  %v97 = vrot.slane %v88, %v96
  %v100 = vadd.f32 %v72, %v93
  %v101 = vadd.f32 %v73, %v97
  %v102 = vadd.f32 %v74, %v93
  %v103 = vadd.f32 %v75, %v97
  %v104 = vadd.f32 %v76, %v93
  %v105 = vadd.f32 %v77, %v97
  %v106 = vadd.f32 %v78, %v93
  %v107 = vadd.f32 %v79, %v97
  %v108 = vadd.f32 %v80, %v93
  %v109 = vadd.f32 %v81, %v97
  %v110 = vadd.f32 %v82, %v93
  %v111 = vadd.f32 %v83, %v97
  %v112 = vadd.f32 %v84, %v93
  %v113 = vadd.f32 %v85, %v97
  %v114 = vadd.f32 %v86, %v93
  %v115 = vadd.f32 %v87, %v97
  %v116 = vld [vmem:[%s3] sm:$0xff]
  %v117 = vld [vmem:[%s3 + $0x8] sm:$0xff]
  %v118 = vld [vmem:[%s3 + $0x10] sm:$0xff]
  %v119 = vld [vmem:[%s3 + $0x18] sm:$0xff]
  %v120 = vld [vmem:[%s3 + $0x20] sm:$0xff]
  %v121 = vld [vmem:[%s3 + $0x28] sm:$0xff]
  %v122 = vld [vmem:[%s3 + $0x30] sm:$0xff]
  %v123 = vld [vmem:[%s3 + $0x38] sm:$0xff]
  %v124 = vld [vmem:[%s3 + $0x40] sm:$0xff]
  %v125 = vld [vmem:[%s3 + $0x48] sm:$0xff]
  %v126 = vld [vmem:[%s3 + $0x50] sm:$0xff]
  %v127 = vld [vmem:[%s3 + $0x58] sm:$0xff]
  %v128 = vld [vmem:[%s3 + $0x60] sm:$0xff]
  %v129 = vld [vmem:[%s3 + $0x68] sm:$0xff]
  %v130 = vld [vmem:[%s3 + $0x70] sm:$0xff]
  %v131 = vld [vmem:[%s3 + $0x78] sm:$0xff]
  %v132 = vld [vmem:[%s4] sm:$0x1]
  %v134 = vlaneseq
  %v135 = vshrl.u32 %v134, 7
  %v136 = vsub.s32 0, %v135
  %v137 = vrot.slane %v132, %v136
  %vm139 = vcmask 523264
  %v141 = vsel %vm139, 0.0, 0
  %143 = vmatprep.subr.mxu0 0.0
  %144 = vmatpush1.msra.mxu0 0.0
  %145 = vmatprep.subr.mxu0 0.0
  %146 = vmatpush1.msra.mxu0 0.0
  %147 = vmatprep.subr.mxu0 0.0
  %148 = vmatpush1.msra.mxu0 0.0
  %149 = vmatprep.subr.mxu0 0.0
  %150 = vmatpush1.msra.mxu0 0.0
  %151 = vmatprep.subr.mxu0 0.0
  %152 = vmatpush1.msra.mxu0 0.0
  %153 = vmatprep.subr.mxu0 0.0
  %154 = vmatpush1.msra.mxu0 0.0
  %155 = vmatprep.subr.mxu0 0.0
  %156 = vmatpush1.msra.mxu0 0.0
  %157 = vmatprep.subr.mxu0 0.0
  %158 = vmatpush1.msra.mxu0 0.0
  %159 = vmatprep.subr.mxu0 %v131
  %160 = vmatpush1.msra.mxu0 %v130
  %161 = vmatprep.subr.mxu0 %v129
  %162 = vmatpush1.msra.mxu0 %v128
  %163 = vmatprep.subr.mxu0 %v127
  %164 = vmatpush1.msra.mxu0 %v126
  %165 = vmatprep.subr.mxu0 %v125
  %166 = vmatpush1.msra.mxu0 %v124
  %167 = vmatprep.subr.mxu0 %v123
  %168 = vmatpush1.msra.mxu0 %v122
  %169 = vmatprep.subr.mxu0 %v121
  %170 = vmatpush1.msra.mxu0 %v120
  %171 = vmatprep.subr.mxu0 %v119
  %172 = vmatpush1.msra.mxu0 %v118
  %173 = vmatprep.subr.mxu0 %v117
  %174 = vmatpush1.msra.mxu0 %v116
  %175 = vmatprep.subr.mxu0 0.0
  %176 = vmatpush2.msra.mxu0 0.0
  %177 = vmatprep.subr.mxu0 0.0
  %178 = vmatpush2.msra.mxu0 0.0
  %179 = vmatprep.subr.mxu0 0.0
  %180 = vmatpush2.msra.mxu0 0.0
  %181 = vmatprep.subr.mxu0 0.0
  %182 = vmatpush2.msra.mxu0 0.0
  %183 = vmatprep.subr.mxu0 0.0
  %184 = vmatpush2.msra.mxu0 0.0
  %185 = vmatprep.subr.mxu0 0.0
  %186 = vmatpush2.msra.mxu0 0.0
  %187 = vmatprep.subr.mxu0 0.0
  %188 = vmatpush2.msra.mxu0 0.0
  %189 = vmatprep.subr.mxu0 0.0
  %190 = vmatpush2.msra.mxu0 0.0
  %191 = vmatprep.subr.mxu0 0.0
  %192 = vmatpush2.msra.mxu0 0.0
  %193 = vmatprep.subr.mxu0 0.0
  %194 = vmatpush2.msra.mxu0 0.0
  %195 = vmatprep.subr.mxu0 0.0
  %196 = vmatpush2.msra.mxu0 0.0
  %197 = vmatprep.subr.mxu0 0.0
  %198 = vmatpush2.msra.mxu0 0.0
  %199 = vmatprep.subr.mxu0 0.0
  %200 = vmatpush2.msra.mxu0 0.0
  %201 = vmatprep.subr.mxu0 0.0
  %202 = vmatpush2.msra.mxu0 0.0
  %203 = vmatprep.subr.mxu0 0.0
  %204 = vmatpush2.msra.mxu0 0.0
  %205 = vmatprep.subr.mxu0 0.0
  %206 = vmatpush2.msra.mxu0 0.0
  %207 = vmatprep.mubr.f32.mxu0 0.0
  %208 = vmatmul.mubr.f32.gmra.mxu0 %v141
  %v209 = vpop.f32.mrf.mxu0
  %v210 = vadd.f32 0.0, %v209
  %v211 = vpop.f32.mrf.mxu0
  %v212 = vadd.f32 0.0, %v211
  %213 = vdwg.mxu0
  %v214 = vadd.f32 %v100, %v210
  %v215 = vxor.u32 %v214, 2147483648
  %v216 = vmul.f32 %v215, 1.442695
  %v217 = vpow.pop %v216
  %v218 = vadd.f32 %v217, 1.0
  %v219 = vrcp.pop %v218
  %v220 = vmul.f32 1.0, %v219
  %v221 = vadd.f32 %v212, %v137
  %v222 = vmul.f32 %v220, %v221
  %v223 = vadd.f32 %v101, %v222
  %v224 = vtanh.pop %v223
  %v225 = vsub.f32 1.0, %v220
  %227 = vrot.lane.b32.xlu0 %v224, 64
  %v228 = vpop.permute.xlu0 %227
  %v230 = vmul.f32 %v225, %v228
  %v231 = vmul.f32 %v220, 0.0
  %v232 = vadd.f32 %v230, %v231
  %234 = vrot.lane.b32.xlu0 %v232, 64
  %v235 = vpop.permute.xlu0 %234
  %v236 = vsel %vm139, %v235, 0
  %238 = vmatprep.subr.mxu0 0.0
  %239 = vmatpush1.msra.mxu0 0.0
  %240 = vmatprep.subr.mxu0 0.0
  %241 = vmatpush1.msra.mxu0 0.0
  %242 = vmatprep.subr.mxu0 0.0
  %243 = vmatpush1.msra.mxu0 0.0
  %244 = vmatprep.subr.mxu0 0.0
  %245 = vmatpush1.msra.mxu0 0.0
  %246 = vmatprep.subr.mxu0 0.0
  %247 = vmatpush1.msra.mxu0 0.0
  %248 = vmatprep.subr.mxu0 0.0
  %249 = vmatpush1.msra.mxu0 0.0
  %250 = vmatprep.subr.mxu0 0.0
  %251 = vmatpush1.msra.mxu0 0.0
  %252 = vmatprep.subr.mxu0 0.0
  %253 = vmatpush1.msra.mxu0 0.0
  %254 = vmatprep.subr.mxu0 %v131
  %255 = vmatpush1.msra.mxu0 %v130
  %256 = vmatprep.subr.mxu0 %v129
  %257 = vmatpush1.msra.mxu0 %v128
  %258 = vmatprep.subr.mxu0 %v127
  %259 = vmatpush1.msra.mxu0 %v126
  %260 = vmatprep.subr.mxu0 %v125
  %261 = vmatpush1.msra.mxu0 %v124
  %262 = vmatprep.subr.mxu0 %v123
  %263 = vmatpush1.msra.mxu0 %v122
  %264 = vmatprep.subr.mxu0 %v121
  %265 = vmatpush1.msra.mxu0 %v120
  %266 = vmatprep.subr.mxu0 %v119
  %267 = vmatpush1.msra.mxu0 %v118
  %268 = vmatprep.subr.mxu0 %v117
  %269 = vmatpush1.msra.mxu0 %v116
  %270 = vmatprep.subr.mxu0 0.0
  %271 = vmatpush2.msra.mxu0 0.0
  %272 = vmatprep.subr.mxu0 0.0
  %273 = vmatpush2.msra.mxu0 0.0
  %274 = vmatprep.subr.mxu0 0.0
  %275 = vmatpush2.msra.mxu0 0.0
  %276 = vmatprep.subr.mxu0 0.0
  %277 = vmatpush2.msra.mxu0 0.0
  %278 = vmatprep.subr.mxu0 0.0
  %279 = vmatpush2.msra.mxu0 0.0
  %280 = vmatprep.subr.mxu0 0.0
  %281 = vmatpush2.msra.mxu0 0.0
  %282 = vmatprep.subr.mxu0 0.0
  %283 = vmatpush2.msra.mxu0 0.0
  %284 = vmatprep.subr.mxu0 0.0
  %285 = vmatpush2.msra.mxu0 0.0
  %286 = vmatprep.subr.mxu0 0.0
  %287 = vmatpush2.msra.mxu0 0.0
  %288 = vmatprep.subr.mxu0 0.0
  %289 = vmatpush2.msra.mxu0 0.0
  %290 = vmatprep.subr.mxu0 0.0
  %291 = vmatpush2.msra.mxu0 0.0
  %292 = vmatprep.subr.mxu0 0.0
  %293 = vmatpush2.msra.mxu0 0.0
  %294 = vmatprep.subr.mxu0 0.0
  %295 = vmatpush2.msra.mxu0 0.0
  %296 = vmatprep.subr.mxu0 0.0
  %297 = vmatpush2.msra.mxu0 0.0
  %298 = vmatprep.subr.mxu0 0.0
  %299 = vmatpush2.msra.mxu0 0.0
  %300 = vmatprep.subr.mxu0 0.0
  %301 = vmatpush2.msra.mxu0 0.0
  %302 = vmatprep.mubr.f32.mxu0 0.0
  %303 = vmatmul.mubr.f32.gmra.mxu0 %v236
  %v304 = vpop.f32.mrf.mxu0
  %v305 = vadd.f32 0.0, %v304
  %v306 = vpop.f32.mrf.mxu0
  %v307 = vadd.f32 0.0, %v306
  %308 = vdwg.mxu0
  %v309 = vadd.f32 %v102, %v305
  %v310 = vxor.u32 %v309, 2147483648
  %v311 = vmul.f32 %v310, 1.442695
  %v312 = vpow.pop %v311
  %v313 = vadd.f32 %v312, 1.0
  %v314 = vrcp.pop %v313
  %v315 = vmul.f32 1.0, %v314
  %v316 = vadd.f32 %v307, %v137
  %v317 = vmul.f32 %v315, %v316
  %v318 = vadd.f32 %v103, %v317
  %v319 = vtanh.pop %v318
  %v320 = vsub.f32 1.0, %v315
  %322 = vrot.lane.b32.xlu0 %v319, 64
  %v323 = vpop.permute.xlu0 %322
  %v325 = vmul.f32 %v320, %v323
  %v326 = vmul.f32 %v315, %v232
  %v327 = vadd.f32 %v325, %v326
  %329 = vrot.lane.b32.xlu0 %v327, 64
  %v330 = vpop.permute.xlu0 %329
  %v331 = vsel %vm139, %v330, 0
  %333 = vmatprep.subr.mxu0 0.0
  %334 = vmatpush1.msra.mxu0 0.0
  %335 = vmatprep.subr.mxu0 0.0
  %336 = vmatpush1.msra.mxu0 0.0
  %337 = vmatprep.subr.mxu0 0.0
  %338 = vmatpush1.msra.mxu0 0.0
  %339 = vmatprep.subr.mxu0 0.0
  %340 = vmatpush1.msra.mxu0 0.0
  %341 = vmatprep.subr.mxu0 0.0
  %342 = vmatpush1.msra.mxu0 0.0
  %343 = vmatprep.subr.mxu0 0.0
  %344 = vmatpush1.msra.mxu0 0.0
  %345 = vmatprep.subr.mxu0 0.0
  %346 = vmatpush1.msra.mxu0 0.0
  %347 = vmatprep.subr.mxu0 0.0
  %348 = vmatpush1.msra.mxu0 0.0
  %349 = vmatprep.subr.mxu0 %v131
  %350 = vmatpush1.msra.mxu0 %v130
  %351 = vmatprep.subr.mxu0 %v129
  %352 = vmatpush1.msra.mxu0 %v128
  %353 = vmatprep.subr.mxu0 %v127
  %354 = vmatpush1.msra.mxu0 %v126
  %355 = vmatprep.subr.mxu0 %v125
  %356 = vmatpush1.msra.mxu0 %v124
  %357 = vmatprep.subr.mxu0 %v123
  %358 = vmatpush1.msra.mxu0 %v122
  %359 = vmatprep.subr.mxu0 %v121
  %360 = vmatpush1.msra.mxu0 %v120
  %361 = vmatprep.subr.mxu0 %v119
  %362 = vmatpush1.msra.mxu0 %v118
  %363 = vmatprep.subr.mxu0 %v117
  %364 = vmatpush1.msra.mxu0 %v116
  %365 = vmatprep.subr.mxu0 0.0
  %366 = vmatpush2.msra.mxu0 0.0
  %367 = vmatprep.subr.mxu0 0.0
  %368 = vmatpush2.msra.mxu0 0.0
  %369 = vmatprep.subr.mxu0 0.0
  %370 = vmatpush2.msra.mxu0 0.0
  %371 = vmatprep.subr.mxu0 0.0
  %372 = vmatpush2.msra.mxu0 0.0
  %373 = vmatprep.subr.mxu0 0.0
  %374 = vmatpush2.msra.mxu0 0.0
  %375 = vmatprep.subr.mxu0 0.0
  %376 = vmatpush2.msra.mxu0 0.0
  %377 = vmatprep.subr.mxu0 0.0
  %378 = vmatpush2.msra.mxu0 0.0
  %379 = vmatprep.subr.mxu0 0.0
  %380 = vmatpush2.msra.mxu0 0.0
  %381 = vmatprep.subr.mxu0 0.0
  %382 = vmatpush2.msra.mxu0 0.0
  %383 = vmatprep.subr.mxu0 0.0
  %384 = vmatpush2.msra.mxu0 0.0
  %385 = vmatprep.subr.mxu0 0.0
  %386 = vmatpush2.msra.mxu0 0.0
  %387 = vmatprep.subr.mxu0 0.0
  %388 = vmatpush2.msra.mxu0 0.0
  %389 = vmatprep.subr.mxu0 0.0
  %390 = vmatpush2.msra.mxu0 0.0
  %391 = vmatprep.subr.mxu0 0.0
  %392 = vmatpush2.msra.mxu0 0.0
  %393 = vmatprep.subr.mxu0 0.0
  %394 = vmatpush2.msra.mxu0 0.0
  %395 = vmatprep.subr.mxu0 0.0
  %396 = vmatpush2.msra.mxu0 0.0
  %397 = vmatprep.mubr.f32.mxu0 0.0
  %398 = vmatmul.mubr.f32.gmra.mxu0 %v331
  %v399 = vpop.f32.mrf.mxu0
  %v400 = vadd.f32 0.0, %v399
  %v401 = vpop.f32.mrf.mxu0
  %v402 = vadd.f32 0.0, %v401
  %403 = vdwg.mxu0
  %v404 = vadd.f32 %v104, %v400
  %v405 = vxor.u32 %v404, 2147483648
  %v406 = vmul.f32 %v405, 1.442695
  %v407 = vpow.pop %v406
  %v408 = vadd.f32 %v407, 1.0
  %v409 = vrcp.pop %v408
  %v410 = vmul.f32 1.0, %v409
  %v411 = vadd.f32 %v402, %v137
  %v412 = vmul.f32 %v410, %v411
  %v413 = vadd.f32 %v105, %v412
  %v414 = vtanh.pop %v413
  %v415 = vsub.f32 1.0, %v410
  %417 = vrot.lane.b32.xlu0 %v414, 64
  %v418 = vpop.permute.xlu0 %417
  %v420 = vmul.f32 %v415, %v418
  %v421 = vmul.f32 %v410, %v327
  %v422 = vadd.f32 %v420, %v421
  %424 = vrot.lane.b32.xlu0 %v422, 64
  %v425 = vpop.permute.xlu0 %424
  %v426 = vsel %vm139, %v425, 0
  %428 = vmatprep.subr.mxu0 0.0
  %429 = vmatpush1.msra.mxu0 0.0
  %430 = vmatprep.subr.mxu0 0.0
  %431 = vmatpush1.msra.mxu0 0.0
  %432 = vmatprep.subr.mxu0 0.0
  %433 = vmatpush1.msra.mxu0 0.0
  %434 = vmatprep.subr.mxu0 0.0
  %435 = vmatpush1.msra.mxu0 0.0
  %436 = vmatprep.subr.mxu0 0.0
  %437 = vmatpush1.msra.mxu0 0.0
  %438 = vmatprep.subr.mxu0 0.0
  %439 = vmatpush1.msra.mxu0 0.0
  %440 = vmatprep.subr.mxu0 0.0
  %441 = vmatpush1.msra.mxu0 0.0
  %442 = vmatprep.subr.mxu0 0.0
  %443 = vmatpush1.msra.mxu0 0.0
  %444 = vmatprep.subr.mxu0 %v131
  %445 = vmatpush1.msra.mxu0 %v130
  %446 = vmatprep.subr.mxu0 %v129
  %447 = vmatpush1.msra.mxu0 %v128
  %448 = vmatprep.subr.mxu0 %v127
  %449 = vmatpush1.msra.mxu0 %v126
  %450 = vmatprep.subr.mxu0 %v125
  %451 = vmatpush1.msra.mxu0 %v124
  %452 = vmatprep.subr.mxu0 %v123
  %453 = vmatpush1.msra.mxu0 %v122
  %454 = vmatprep.subr.mxu0 %v121
  %455 = vmatpush1.msra.mxu0 %v120
  %456 = vmatprep.subr.mxu0 %v119
  %457 = vmatpush1.msra.mxu0 %v118
  %458 = vmatprep.subr.mxu0 %v117
  %459 = vmatpush1.msra.mxu0 %v116
  %460 = vmatprep.subr.mxu0 0.0
  %461 = vmatpush2.msra.mxu0 0.0
  %462 = vmatprep.subr.mxu0 0.0
  %463 = vmatpush2.msra.mxu0 0.0
  %464 = vmatprep.subr.mxu0 0.0
  %465 = vmatpush2.msra.mxu0 0.0
  %466 = vmatprep.subr.mxu0 0.0
  %467 = vmatpush2.msra.mxu0 0.0
  %468 = vmatprep.subr.mxu0 0.0
  %469 = vmatpush2.msra.mxu0 0.0
  %470 = vmatprep.subr.mxu0 0.0
  %471 = vmatpush2.msra.mxu0 0.0
  %472 = vmatprep.subr.mxu0 0.0
  %473 = vmatpush2.msra.mxu0 0.0
  %474 = vmatprep.subr.mxu0 0.0
  %475 = vmatpush2.msra.mxu0 0.0
  %476 = vmatprep.subr.mxu0 0.0
  %477 = vmatpush2.msra.mxu0 0.0
  %478 = vmatprep.subr.mxu0 0.0
  %479 = vmatpush2.msra.mxu0 0.0
  %480 = vmatprep.subr.mxu0 0.0
  %481 = vmatpush2.msra.mxu0 0.0
  %482 = vmatprep.subr.mxu0 0.0
  %483 = vmatpush2.msra.mxu0 0.0
  %484 = vmatprep.subr.mxu0 0.0
  %485 = vmatpush2.msra.mxu0 0.0
  %486 = vmatprep.subr.mxu0 0.0
  %487 = vmatpush2.msra.mxu0 0.0
  %488 = vmatprep.subr.mxu0 0.0
  %489 = vmatpush2.msra.mxu0 0.0
  %490 = vmatprep.subr.mxu0 0.0
  %491 = vmatpush2.msra.mxu0 0.0
  %492 = vmatprep.mubr.f32.mxu0 0.0
  %493 = vmatmul.mubr.f32.gmra.mxu0 %v426
  %v494 = vpop.f32.mrf.mxu0
  %v495 = vadd.f32 0.0, %v494
  %v496 = vpop.f32.mrf.mxu0
  %v497 = vadd.f32 0.0, %v496
  %498 = vdwg.mxu0
  %v499 = vadd.f32 %v106, %v495
  %v500 = vxor.u32 %v499, 2147483648
  %v501 = vmul.f32 %v500, 1.442695
  %v502 = vpow.pop %v501
  %v503 = vadd.f32 %v502, 1.0
  %v504 = vrcp.pop %v503
  %v505 = vmul.f32 1.0, %v504
  %v506 = vadd.f32 %v497, %v137
  %v507 = vmul.f32 %v505, %v506
  %v508 = vadd.f32 %v107, %v507
  %v509 = vtanh.pop %v508
  %v510 = vsub.f32 1.0, %v505
  %512 = vrot.lane.b32.xlu0 %v509, 64
  %v513 = vpop.permute.xlu0 %512
  %v515 = vmul.f32 %v510, %v513
  %v516 = vmul.f32 %v505, %v422
  %v517 = vadd.f32 %v515, %v516
  %519 = vrot.lane.b32.xlu0 %v517, 64
  %v520 = vpop.permute.xlu0 %519
  %v521 = vsel %vm139, %v520, 0
  %523 = vmatprep.subr.mxu0 0.0
  %524 = vmatpush1.msra.mxu0 0.0
  %525 = vmatprep.subr.mxu0 0.0
  %526 = vmatpush1.msra.mxu0 0.0
  %527 = vmatprep.subr.mxu0 0.0
  %528 = vmatpush1.msra.mxu0 0.0
  %529 = vmatprep.subr.mxu0 0.0
  %530 = vmatpush1.msra.mxu0 0.0
  %531 = vmatprep.subr.mxu0 0.0
  %532 = vmatpush1.msra.mxu0 0.0
  %533 = vmatprep.subr.mxu0 0.0
  %534 = vmatpush1.msra.mxu0 0.0
  %535 = vmatprep.subr.mxu0 0.0
  %536 = vmatpush1.msra.mxu0 0.0
  %537 = vmatprep.subr.mxu0 0.0
  %538 = vmatpush1.msra.mxu0 0.0
  %539 = vmatprep.subr.mxu0 %v131
  %540 = vmatpush1.msra.mxu0 %v130
  %541 = vmatprep.subr.mxu0 %v129
  %542 = vmatpush1.msra.mxu0 %v128
  %543 = vmatprep.subr.mxu0 %v127
  %544 = vmatpush1.msra.mxu0 %v126
  %545 = vmatprep.subr.mxu0 %v125
  %546 = vmatpush1.msra.mxu0 %v124
  %547 = vmatprep.subr.mxu0 %v123
  %548 = vmatpush1.msra.mxu0 %v122
  %549 = vmatprep.subr.mxu0 %v121
  %550 = vmatpush1.msra.mxu0 %v120
  %551 = vmatprep.subr.mxu0 %v119
  %552 = vmatpush1.msra.mxu0 %v118
  %553 = vmatprep.subr.mxu0 %v117
  %554 = vmatpush1.msra.mxu0 %v116
  %555 = vmatprep.subr.mxu0 0.0
  %556 = vmatpush2.msra.mxu0 0.0
  %557 = vmatprep.subr.mxu0 0.0
  %558 = vmatpush2.msra.mxu0 0.0
  %559 = vmatprep.subr.mxu0 0.0
  %560 = vmatpush2.msra.mxu0 0.0
  %561 = vmatprep.subr.mxu0 0.0
  %562 = vmatpush2.msra.mxu0 0.0
  %563 = vmatprep.subr.mxu0 0.0
  %564 = vmatpush2.msra.mxu0 0.0
  %565 = vmatprep.subr.mxu0 0.0
  %566 = vmatpush2.msra.mxu0 0.0
  %567 = vmatprep.subr.mxu0 0.0
  %568 = vmatpush2.msra.mxu0 0.0
  %569 = vmatprep.subr.mxu0 0.0
  %570 = vmatpush2.msra.mxu0 0.0
  %571 = vmatprep.subr.mxu0 0.0
  %572 = vmatpush2.msra.mxu0 0.0
  %573 = vmatprep.subr.mxu0 0.0
  %574 = vmatpush2.msra.mxu0 0.0
  %575 = vmatprep.subr.mxu0 0.0
  %576 = vmatpush2.msra.mxu0 0.0
  %577 = vmatprep.subr.mxu0 0.0
  %578 = vmatpush2.msra.mxu0 0.0
  %579 = vmatprep.subr.mxu0 0.0
  %580 = vmatpush2.msra.mxu0 0.0
  %581 = vmatprep.subr.mxu0 0.0
  %582 = vmatpush2.msra.mxu0 0.0
  %583 = vmatprep.subr.mxu0 0.0
  %584 = vmatpush2.msra.mxu0 0.0
  %585 = vmatprep.subr.mxu0 0.0
  %586 = vmatpush2.msra.mxu0 0.0
  %587 = vmatprep.mubr.f32.mxu0 0.0
  %588 = vmatmul.mubr.f32.gmra.mxu0 %v521
  %v589 = vpop.f32.mrf.mxu0
  %v590 = vadd.f32 0.0, %v589
  %v591 = vpop.f32.mrf.mxu0
  %v592 = vadd.f32 0.0, %v591
  %593 = vdwg.mxu0
  %v594 = vadd.f32 %v108, %v590
  %v595 = vxor.u32 %v594, 2147483648
  %v596 = vmul.f32 %v595, 1.442695
  %v597 = vpow.pop %v596
  %v598 = vadd.f32 %v597, 1.0
  %v599 = vrcp.pop %v598
  %v600 = vmul.f32 1.0, %v599
  %v601 = vadd.f32 %v592, %v137
  %v602 = vmul.f32 %v600, %v601
  %v603 = vadd.f32 %v109, %v602
  %v604 = vtanh.pop %v603
  %v605 = vsub.f32 1.0, %v600
  %607 = vrot.lane.b32.xlu0 %v604, 64
  %v608 = vpop.permute.xlu0 %607
  %v610 = vmul.f32 %v605, %v608
  %v611 = vmul.f32 %v600, %v517
  %v612 = vadd.f32 %v610, %v611
  %614 = vrot.lane.b32.xlu0 %v612, 64
  %v615 = vpop.permute.xlu0 %614
  %v616 = vsel %vm139, %v615, 0
  %618 = vmatprep.subr.mxu0 0.0
  %619 = vmatpush1.msra.mxu0 0.0
  %620 = vmatprep.subr.mxu0 0.0
  %621 = vmatpush1.msra.mxu0 0.0
  %622 = vmatprep.subr.mxu0 0.0
  %623 = vmatpush1.msra.mxu0 0.0
  %624 = vmatprep.subr.mxu0 0.0
  %625 = vmatpush1.msra.mxu0 0.0
  %626 = vmatprep.subr.mxu0 0.0
  %627 = vmatpush1.msra.mxu0 0.0
  %628 = vmatprep.subr.mxu0 0.0
  %629 = vmatpush1.msra.mxu0 0.0
  %630 = vmatprep.subr.mxu0 0.0
  %631 = vmatpush1.msra.mxu0 0.0
  %632 = vmatprep.subr.mxu0 0.0
  %633 = vmatpush1.msra.mxu0 0.0
  %634 = vmatprep.subr.mxu0 %v131
  %635 = vmatpush1.msra.mxu0 %v130
  %636 = vmatprep.subr.mxu0 %v129
  %637 = vmatpush1.msra.mxu0 %v128
  %638 = vmatprep.subr.mxu0 %v127
  %639 = vmatpush1.msra.mxu0 %v126
  %640 = vmatprep.subr.mxu0 %v125
  %641 = vmatpush1.msra.mxu0 %v124
  %642 = vmatprep.subr.mxu0 %v123
  %643 = vmatpush1.msra.mxu0 %v122
  %644 = vmatprep.subr.mxu0 %v121
  %645 = vmatpush1.msra.mxu0 %v120
  %646 = vmatprep.subr.mxu0 %v119
  %647 = vmatpush1.msra.mxu0 %v118
  %648 = vmatprep.subr.mxu0 %v117
  %649 = vmatpush1.msra.mxu0 %v116
  %650 = vmatprep.subr.mxu0 0.0
  %651 = vmatpush2.msra.mxu0 0.0
  %652 = vmatprep.subr.mxu0 0.0
  %653 = vmatpush2.msra.mxu0 0.0
  %654 = vmatprep.subr.mxu0 0.0
  %655 = vmatpush2.msra.mxu0 0.0
  %656 = vmatprep.subr.mxu0 0.0
  %657 = vmatpush2.msra.mxu0 0.0
  %658 = vmatprep.subr.mxu0 0.0
  %659 = vmatpush2.msra.mxu0 0.0
  %660 = vmatprep.subr.mxu0 0.0
  %661 = vmatpush2.msra.mxu0 0.0
  %662 = vmatprep.subr.mxu0 0.0
  %663 = vmatpush2.msra.mxu0 0.0
  %664 = vmatprep.subr.mxu0 0.0
  %665 = vmatpush2.msra.mxu0 0.0
  %666 = vmatprep.subr.mxu0 0.0
  %667 = vmatpush2.msra.mxu0 0.0
  %668 = vmatprep.subr.mxu0 0.0
  %669 = vmatpush2.msra.mxu0 0.0
  %670 = vmatprep.subr.mxu0 0.0
  %671 = vmatpush2.msra.mxu0 0.0
  %672 = vmatprep.subr.mxu0 0.0
  %673 = vmatpush2.msra.mxu0 0.0
  %674 = vmatprep.subr.mxu0 0.0
  %675 = vmatpush2.msra.mxu0 0.0
  %676 = vmatprep.subr.mxu0 0.0
  %677 = vmatpush2.msra.mxu0 0.0
  %678 = vmatprep.subr.mxu0 0.0
  %679 = vmatpush2.msra.mxu0 0.0
  %680 = vmatprep.subr.mxu0 0.0
  %681 = vmatpush2.msra.mxu0 0.0
  %682 = vmatprep.mubr.f32.mxu0 0.0
  %683 = vmatmul.mubr.f32.gmra.mxu0 %v616
  %v684 = vpop.f32.mrf.mxu0
  %v685 = vadd.f32 0.0, %v684
  %v686 = vpop.f32.mrf.mxu0
  %v687 = vadd.f32 0.0, %v686
  %688 = vdwg.mxu0
  %v689 = vadd.f32 %v110, %v685
  %v690 = vxor.u32 %v689, 2147483648
  %v691 = vmul.f32 %v690, 1.442695
  %v692 = vpow.pop %v691
  %v693 = vadd.f32 %v692, 1.0
  %v694 = vrcp.pop %v693
  %v695 = vmul.f32 1.0, %v694
  %v696 = vadd.f32 %v687, %v137
  %v697 = vmul.f32 %v695, %v696
  %v698 = vadd.f32 %v111, %v697
  %v699 = vtanh.pop %v698
  %v700 = vsub.f32 1.0, %v695
  %702 = vrot.lane.b32.xlu0 %v699, 64
  %v703 = vpop.permute.xlu0 %702
  %v705 = vmul.f32 %v700, %v703
  %v706 = vmul.f32 %v695, %v612
  %v707 = vadd.f32 %v705, %v706
  %709 = vrot.lane.b32.xlu0 %v707, 64
  %v710 = vpop.permute.xlu0 %709
  %v711 = vsel %vm139, %v710, 0
  %713 = vmatprep.subr.mxu0 0.0
  %714 = vmatpush1.msra.mxu0 0.0
  %715 = vmatprep.subr.mxu0 0.0
  %716 = vmatpush1.msra.mxu0 0.0
  %717 = vmatprep.subr.mxu0 0.0
  %718 = vmatpush1.msra.mxu0 0.0
  %719 = vmatprep.subr.mxu0 0.0
  %720 = vmatpush1.msra.mxu0 0.0
  %721 = vmatprep.subr.mxu0 0.0
  %722 = vmatpush1.msra.mxu0 0.0
  %723 = vmatprep.subr.mxu0 0.0
  %724 = vmatpush1.msra.mxu0 0.0
  %725 = vmatprep.subr.mxu0 0.0
  %726 = vmatpush1.msra.mxu0 0.0
  %727 = vmatprep.subr.mxu0 0.0
  %728 = vmatpush1.msra.mxu0 0.0
  %729 = vmatprep.subr.mxu0 %v131
  %730 = vmatpush1.msra.mxu0 %v130
  %731 = vmatprep.subr.mxu0 %v129
  %732 = vmatpush1.msra.mxu0 %v128
  %733 = vmatprep.subr.mxu0 %v127
  %734 = vmatpush1.msra.mxu0 %v126
  %735 = vmatprep.subr.mxu0 %v125
  %736 = vmatpush1.msra.mxu0 %v124
  %737 = vmatprep.subr.mxu0 %v123
  %738 = vmatpush1.msra.mxu0 %v122
  %739 = vmatprep.subr.mxu0 %v121
  %740 = vmatpush1.msra.mxu0 %v120
  %741 = vmatprep.subr.mxu0 %v119
  %742 = vmatpush1.msra.mxu0 %v118
  %743 = vmatprep.subr.mxu0 %v117
  %744 = vmatpush1.msra.mxu0 %v116
  %745 = vmatprep.subr.mxu0 0.0
  %746 = vmatpush2.msra.mxu0 0.0
  %747 = vmatprep.subr.mxu0 0.0
  %748 = vmatpush2.msra.mxu0 0.0
  %749 = vmatprep.subr.mxu0 0.0
  %750 = vmatpush2.msra.mxu0 0.0
  %751 = vmatprep.subr.mxu0 0.0
  %752 = vmatpush2.msra.mxu0 0.0
  %753 = vmatprep.subr.mxu0 0.0
  %754 = vmatpush2.msra.mxu0 0.0
  %755 = vmatprep.subr.mxu0 0.0
  %756 = vmatpush2.msra.mxu0 0.0
  %757 = vmatprep.subr.mxu0 0.0
  %758 = vmatpush2.msra.mxu0 0.0
  %759 = vmatprep.subr.mxu0 0.0
  %760 = vmatpush2.msra.mxu0 0.0
  %761 = vmatprep.subr.mxu0 0.0
  %762 = vmatpush2.msra.mxu0 0.0
  %763 = vmatprep.subr.mxu0 0.0
  %764 = vmatpush2.msra.mxu0 0.0
  %765 = vmatprep.subr.mxu0 0.0
  %766 = vmatpush2.msra.mxu0 0.0
  %767 = vmatprep.subr.mxu0 0.0
  %768 = vmatpush2.msra.mxu0 0.0
  %769 = vmatprep.subr.mxu0 0.0
  %770 = vmatpush2.msra.mxu0 0.0
  %771 = vmatprep.subr.mxu0 0.0
  %772 = vmatpush2.msra.mxu0 0.0
  %773 = vmatprep.subr.mxu0 0.0
  %774 = vmatpush2.msra.mxu0 0.0
  %775 = vmatprep.subr.mxu0 0.0
  %776 = vmatpush2.msra.mxu0 0.0
  %777 = vmatprep.mubr.f32.mxu0 0.0
  %778 = vmatmul.mubr.f32.gmra.mxu0 %v711
  %v779 = vpop.f32.mrf.mxu0
  %v780 = vadd.f32 0.0, %v779
  %v781 = vpop.f32.mrf.mxu0
  %v782 = vadd.f32 0.0, %v781
  %783 = vdwg.mxu0
  %v784 = vadd.f32 %v112, %v780
  %v785 = vxor.u32 %v784, 2147483648
  %v786 = vmul.f32 %v785, 1.442695
  %v787 = vpow.pop %v786
  %v788 = vadd.f32 %v787, 1.0
  %v789 = vrcp.pop %v788
  %v790 = vmul.f32 1.0, %v789
  %v791 = vadd.f32 %v782, %v137
  %v792 = vmul.f32 %v790, %v791
  %v793 = vadd.f32 %v113, %v792
  %v794 = vtanh.pop %v793
  %v795 = vsub.f32 1.0, %v790
  %797 = vrot.lane.b32.xlu0 %v794, 64
  %v798 = vpop.permute.xlu0 %797
  %v800 = vmul.f32 %v795, %v798
  %v801 = vmul.f32 %v790, %v707
  %v802 = vadd.f32 %v800, %v801
  %804 = vrot.lane.b32.xlu0 %v802, 64
  %v805 = vpop.permute.xlu0 %804
  %v806 = vsel %vm139, %v805, 0
  %808 = vmatprep.subr.mxu0 0.0
  %809 = vmatpush1.msra.mxu0 0.0
  %810 = vmatprep.subr.mxu0 0.0
  %811 = vmatpush1.msra.mxu0 0.0
  %812 = vmatprep.subr.mxu0 0.0
  %813 = vmatpush1.msra.mxu0 0.0
  %814 = vmatprep.subr.mxu0 0.0
  %815 = vmatpush1.msra.mxu0 0.0
  %816 = vmatprep.subr.mxu0 0.0
  %817 = vmatpush1.msra.mxu0 0.0
  %818 = vmatprep.subr.mxu0 0.0
  %819 = vmatpush1.msra.mxu0 0.0
  %820 = vmatprep.subr.mxu0 0.0
  %821 = vmatpush1.msra.mxu0 0.0
  %822 = vmatprep.subr.mxu0 0.0
  %823 = vmatpush1.msra.mxu0 0.0
  %824 = vmatprep.subr.mxu0 %v131
  %825 = vmatpush1.msra.mxu0 %v130
  %826 = vmatprep.subr.mxu0 %v129
  %827 = vmatpush1.msra.mxu0 %v128
  %828 = vmatprep.subr.mxu0 %v127
  %829 = vmatpush1.msra.mxu0 %v126
  %830 = vmatprep.subr.mxu0 %v125
  %831 = vmatpush1.msra.mxu0 %v124
  %832 = vmatprep.subr.mxu0 %v123
  %833 = vmatpush1.msra.mxu0 %v122
  %834 = vmatprep.subr.mxu0 %v121
  %835 = vmatpush1.msra.mxu0 %v120
  %836 = vmatprep.subr.mxu0 %v119
  %837 = vmatpush1.msra.mxu0 %v118
  %838 = vmatprep.subr.mxu0 %v117
  %839 = vmatpush1.msra.mxu0 %v116
  %840 = vmatprep.subr.mxu0 0.0
  %841 = vmatpush2.msra.mxu0 0.0
  %842 = vmatprep.subr.mxu0 0.0
  %843 = vmatpush2.msra.mxu0 0.0
  %844 = vmatprep.subr.mxu0 0.0
  %845 = vmatpush2.msra.mxu0 0.0
  %846 = vmatprep.subr.mxu0 0.0
  %847 = vmatpush2.msra.mxu0 0.0
  %848 = vmatprep.subr.mxu0 0.0
  %849 = vmatpush2.msra.mxu0 0.0
  %850 = vmatprep.subr.mxu0 0.0
  %851 = vmatpush2.msra.mxu0 0.0
  %852 = vmatprep.subr.mxu0 0.0
  %853 = vmatpush2.msra.mxu0 0.0
  %854 = vmatprep.subr.mxu0 0.0
  %855 = vmatpush2.msra.mxu0 0.0
  %856 = vmatprep.subr.mxu0 0.0
  %857 = vmatpush2.msra.mxu0 0.0
  %858 = vmatprep.subr.mxu0 0.0
  %859 = vmatpush2.msra.mxu0 0.0
  %860 = vmatprep.subr.mxu0 0.0
  %861 = vmatpush2.msra.mxu0 0.0
  %862 = vmatprep.subr.mxu0 0.0
  %863 = vmatpush2.msra.mxu0 0.0
  %864 = vmatprep.subr.mxu0 0.0
  %865 = vmatpush2.msra.mxu0 0.0
  %866 = vmatprep.subr.mxu0 0.0
  %867 = vmatpush2.msra.mxu0 0.0
  %868 = vmatprep.subr.mxu0 0.0
  %869 = vmatpush2.msra.mxu0 0.0
  %870 = vmatprep.subr.mxu0 0.0
  %871 = vmatpush2.msra.mxu0 0.0
  %872 = vmatprep.mubr.f32.mxu0 0.0
  %873 = vmatmul.mubr.f32.gmra.mxu0 %v806
  %v874 = vpop.f32.mrf.mxu0
  %v875 = vadd.f32 0.0, %v874
  %v876 = vpop.f32.mrf.mxu0
  %v877 = vadd.f32 0.0, %v876
  %878 = vdwg.mxu0
  %v879 = vadd.f32 %v114, %v875
  %v880 = vxor.u32 %v879, 2147483648
  %v881 = vmul.f32 %v880, 1.442695
  %v882 = vpow.pop %v881
  %v883 = vadd.f32 %v882, 1.0
  %v884 = vrcp.pop %v883
  %v885 = vmul.f32 1.0, %v884
  %v886 = vadd.f32 %v877, %v137
  %v887 = vmul.f32 %v885, %v886
  %v888 = vadd.f32 %v115, %v887
  %v889 = vtanh.pop %v888
  %v890 = vsub.f32 1.0, %v885
  %892 = vrot.lane.b32.xlu0 %v889, 64
  %v893 = vpop.permute.xlu0 %892
  %v895 = vmul.f32 %v890, %v893
  %v896 = vmul.f32 %v885, %v802
  %v897 = vadd.f32 %v895, %v896
  %v898 = vld [vmem:[%s5] sm:$0xff]
  %v899 = vld [vmem:[%s5 + $0x8] sm:$0xff]
  %v900 = vld [vmem:[%s5 + $0x10] sm:$0xff]
  %v901 = vld [vmem:[%s5 + $0x18] sm:$0xff]
  %v902 = vld [vmem:[%s5 + $0x20] sm:$0xff]
  %v903 = vld [vmem:[%s5 + $0x28] sm:$0xff]
  %v904 = vld [vmem:[%s5 + $0x30] sm:$0xff]
  %v905 = vld [vmem:[%s5 + $0x38] sm:$0xff]
  %v906 = vld [vmem:[%s5 + $0x40] sm:$0xff]
  %v907 = vld [vmem:[%s5 + $0x48] sm:$0xff]
  %v908 = vld [vmem:[%s5 + $0x50] sm:$0xff]
  %v909 = vld [vmem:[%s5 + $0x58] sm:$0xff]
  %v910 = vld [vmem:[%s5 + $0x60] sm:$0xff]
  %v911 = vld [vmem:[%s5 + $0x68] sm:$0xff]
  %v912 = vld [vmem:[%s5 + $0x70] sm:$0xff]
  %v913 = vld [vmem:[%s5 + $0x78] sm:$0xff]
  %v914 = vld [vmem:[%s6] sm:$0x3]
  %v916 = vlaneseq
  %v917 = vshrl.u32 %v916, 7
  %v918 = vsub.s32 0, %v917
  %v919 = vrot.slane %v914, %v918
  %v920 = vlaneseq
  %v921 = vshrl.u32 %v920, 7
  %v922 = vsub.s32 1, %v921
  %v923 = vrot.slane %v914, %v922
  %927 = vrot.lane.b32.xlu0 %v897, 64
  %v928 = vpop.permute.xlu0 %927
  %v929 = vsel %vm139, %v928, 0
  %931 = vmatprep.subr.mxu0 0.0
  %932 = vmatpush1.msra.mxu0 0.0
  %933 = vmatprep.subr.mxu0 0.0
  %934 = vmatpush1.msra.mxu0 0.0
  %935 = vmatprep.subr.mxu0 0.0
  %936 = vmatpush1.msra.mxu0 0.0
  %937 = vmatprep.subr.mxu0 0.0
  %938 = vmatpush1.msra.mxu0 0.0
  %939 = vmatprep.subr.mxu0 0.0
  %940 = vmatpush1.msra.mxu0 0.0
  %941 = vmatprep.subr.mxu0 0.0
  %942 = vmatpush1.msra.mxu0 0.0
  %943 = vmatprep.subr.mxu0 0.0
  %944 = vmatpush1.msra.mxu0 0.0
  %945 = vmatprep.subr.mxu0 0.0
  %946 = vmatpush1.msra.mxu0 0.0
  %947 = vmatprep.subr.mxu0 %v913
  %948 = vmatpush1.msra.mxu0 %v912
  %949 = vmatprep.subr.mxu0 %v911
  %950 = vmatpush1.msra.mxu0 %v910
  %951 = vmatprep.subr.mxu0 %v909
  %952 = vmatpush1.msra.mxu0 %v908
  %953 = vmatprep.subr.mxu0 %v907
  %954 = vmatpush1.msra.mxu0 %v906
  %955 = vmatprep.subr.mxu0 %v905
  %956 = vmatpush1.msra.mxu0 %v904
  %957 = vmatprep.subr.mxu0 %v903
  %958 = vmatpush1.msra.mxu0 %v902
  %959 = vmatprep.subr.mxu0 %v901
  %960 = vmatpush1.msra.mxu0 %v900
  %961 = vmatprep.subr.mxu0 %v899
  %962 = vmatpush1.msra.mxu0 %v898
  %963 = vmatprep.subr.mxu0 0.0
  %964 = vmatpush2.msra.mxu0 0.0
  %965 = vmatprep.subr.mxu0 0.0
  %966 = vmatpush2.msra.mxu0 0.0
  %967 = vmatprep.subr.mxu0 0.0
  %968 = vmatpush2.msra.mxu0 0.0
  %969 = vmatprep.subr.mxu0 0.0
  %970 = vmatpush2.msra.mxu0 0.0
  %971 = vmatprep.subr.mxu0 0.0
  %972 = vmatpush2.msra.mxu0 0.0
  %973 = vmatprep.subr.mxu0 0.0
  %974 = vmatpush2.msra.mxu0 0.0
  %975 = vmatprep.subr.mxu0 0.0
  %976 = vmatpush2.msra.mxu0 0.0
  %977 = vmatprep.subr.mxu0 0.0
  %978 = vmatpush2.msra.mxu0 0.0
  %979 = vmatprep.subr.mxu0 0.0
  %980 = vmatpush2.msra.mxu0 0.0
  %981 = vmatprep.subr.mxu0 0.0
  %982 = vmatpush2.msra.mxu0 0.0
  %983 = vmatprep.subr.mxu0 0.0
  %984 = vmatpush2.msra.mxu0 0.0
  %985 = vmatprep.subr.mxu0 0.0
  %986 = vmatpush2.msra.mxu0 0.0
  %987 = vmatprep.subr.mxu0 0.0
  %988 = vmatpush2.msra.mxu0 0.0
  %989 = vmatprep.subr.mxu0 0.0
  %990 = vmatpush2.msra.mxu0 0.0
  %991 = vmatprep.subr.mxu0 0.0
  %992 = vmatpush2.msra.mxu0 0.0
  %993 = vmatprep.subr.mxu0 0.0
  %994 = vmatpush2.msra.mxu0 0.0
  %995 = vmatprep.mubr.f32.mxu0 0.0
  %996 = vmatmul.mubr.f32.gmra.mxu0 %v929
  %v997 = vpop.f32.mrf.mxu0
  %v998 = vadd.f32 %v919, %v997
  %v999 = vpop.f32.mrf.mxu0
  %v1000 = vadd.f32 %v923, %v999
  %1001 = vdwg.mxu0
  %v1002 = vld [vmem:[%s7] sm:$0xff]
  %v1003 = vld [vmem:[%s7 + $0x8] sm:$0xff]
  %v1004 = vld [vmem:[%s7 + $0x10] sm:$0xff]
  %v1005 = vld [vmem:[%s7 + $0x18] sm:$0xff]
  %v1006 = vld [vmem:[%s7 + $0x20] sm:$0xff]
  %v1007 = vld [vmem:[%s7 + $0x28] sm:$0xff]
  %v1008 = vld [vmem:[%s7 + $0x30] sm:$0xff]
  %v1009 = vld [vmem:[%s7 + $0x38] sm:$0xff]
  %v1010 = vld [vmem:[%s7 + $0x40] sm:$0xff]
  %v1011 = vld [vmem:[%s7 + $0x48] sm:$0xff]
  %v1012 = vld [vmem:[%s7 + $0x50] sm:$0xff]
  %v1013 = vld [vmem:[%s7 + $0x58] sm:$0xff]
  %v1014 = vld [vmem:[%s7 + $0x60] sm:$0xff]
  %v1015 = vld [vmem:[%s7 + $0x68] sm:$0xff]
  %v1016 = vld [vmem:[%s7 + $0x70] sm:$0xff]
  %v1017 = vld [vmem:[%s7 + $0x78] sm:$0xff]
  %v1018 = vld [vmem:[%s8] sm:$0x1]
  %v1020 = vlaneseq
  %v1021 = vshrl.u32 %v1020, 7
  %v1022 = vsub.s32 0, %v1021
  %v1023 = vrot.slane %v1018, %v1022
  %1025 = vmatprep.subr.mxu0 0.0
  %1026 = vmatpush1.msra.mxu0 0.0
  %1027 = vmatprep.subr.mxu0 0.0
  %1028 = vmatpush1.msra.mxu0 0.0
  %1029 = vmatprep.subr.mxu0 0.0
  %1030 = vmatpush1.msra.mxu0 0.0
  %1031 = vmatprep.subr.mxu0 0.0
  %1032 = vmatpush1.msra.mxu0 0.0
  %1033 = vmatprep.subr.mxu0 0.0
  %1034 = vmatpush1.msra.mxu0 0.0
  %1035 = vmatprep.subr.mxu0 0.0
  %1036 = vmatpush1.msra.mxu0 0.0
  %1037 = vmatprep.subr.mxu0 0.0
  %1038 = vmatpush1.msra.mxu0 0.0
  %1039 = vmatprep.subr.mxu0 0.0
  %1040 = vmatpush1.msra.mxu0 0.0
  %1041 = vmatprep.subr.mxu0 %v1017
  %1042 = vmatpush1.msra.mxu0 %v1016
  %1043 = vmatprep.subr.mxu0 %v1015
  %1044 = vmatpush1.msra.mxu0 %v1014
  %1045 = vmatprep.subr.mxu0 %v1013
  %1046 = vmatpush1.msra.mxu0 %v1012
  %1047 = vmatprep.subr.mxu0 %v1011
  %1048 = vmatpush1.msra.mxu0 %v1010
  %1049 = vmatprep.subr.mxu0 %v1009
  %1050 = vmatpush1.msra.mxu0 %v1008
  %1051 = vmatprep.subr.mxu0 %v1007
  %1052 = vmatpush1.msra.mxu0 %v1006
  %1053 = vmatprep.subr.mxu0 %v1005
  %1054 = vmatpush1.msra.mxu0 %v1004
  %1055 = vmatprep.subr.mxu0 %v1003
  %1056 = vmatpush1.msra.mxu0 %v1002
  %1057 = vmatprep.subr.mxu0 0.0
  %1058 = vmatpush2.msra.mxu0 0.0
  %1059 = vmatprep.subr.mxu0 0.0
  %1060 = vmatpush2.msra.mxu0 0.0
  %1061 = vmatprep.subr.mxu0 0.0
  %1062 = vmatpush2.msra.mxu0 0.0
  %1063 = vmatprep.subr.mxu0 0.0
  %1064 = vmatpush2.msra.mxu0 0.0
  %1065 = vmatprep.subr.mxu0 0.0
  %1066 = vmatpush2.msra.mxu0 0.0
  %1067 = vmatprep.subr.mxu0 0.0
  %1068 = vmatpush2.msra.mxu0 0.0
  %1069 = vmatprep.subr.mxu0 0.0
  %1070 = vmatpush2.msra.mxu0 0.0
  %1071 = vmatprep.subr.mxu0 0.0
  %1072 = vmatpush2.msra.mxu0 0.0
  %1073 = vmatprep.subr.mxu0 0.0
  %1074 = vmatpush2.msra.mxu0 0.0
  %1075 = vmatprep.subr.mxu0 0.0
  %1076 = vmatpush2.msra.mxu0 0.0
  %1077 = vmatprep.subr.mxu0 0.0
  %1078 = vmatpush2.msra.mxu0 0.0
  %1079 = vmatprep.subr.mxu0 0.0
  %1080 = vmatpush2.msra.mxu0 0.0
  %1081 = vmatprep.subr.mxu0 0.0
  %1082 = vmatpush2.msra.mxu0 0.0
  %1083 = vmatprep.subr.mxu0 0.0
  %1084 = vmatpush2.msra.mxu0 0.0
  %1085 = vmatprep.subr.mxu0 0.0
  %1086 = vmatpush2.msra.mxu0 0.0
  %1087 = vmatprep.subr.mxu0 0.0
  %1088 = vmatpush2.msra.mxu0 0.0
  %1089 = vmatprep.mubr.f32.mxu0 0.0
  %1090 = vmatmul.mubr.f32.gmra.mxu0 %v141
  %v1091 = vpop.f32.mrf.mxu0
  %v1092 = vadd.f32 0.0, %v1091
  %v1093 = vpop.f32.mrf.mxu0
  %v1094 = vadd.f32 0.0, %v1093
  %1095 = vdwg.mxu0
  %v1096 = vadd.f32 %v998, %v1092
  %v1097 = vxor.u32 %v1096, 2147483648
  %v1098 = vmul.f32 %v1097, 1.442695
  %v1099 = vpow.pop %v1098
  %v1100 = vadd.f32 %v1099, 1.0
  %v1101 = vrcp.pop %v1100
  %v1102 = vmul.f32 1.0, %v1101
  %v1103 = vadd.f32 %v1094, %v1023
  %v1104 = vmul.f32 %v1102, %v1103
  %v1105 = vadd.f32 %v1000, %v1104
  %v1106 = vtanh.pop %v1105
  %v1107 = vsub.f32 1.0, %v1102
  %1109 = vrot.lane.b32.xlu0 %v1106, 64
  %v1110 = vpop.permute.xlu0 %1109
  %v1112 = vmul.f32 %v1107, %v1110
  %v1113 = vmul.f32 %v1102, 0.0
  %v1114 = vadd.f32 %v1112, %v1113
  %1116 = vrot.lane.b32.xlu0 %v1114, 64
  %v1117 = vpop.permute.xlu0 %1116
  %v1118 = vsel %vm139, %v1117, 0
  %1120 = vmatprep.subr.mxu0 0.0
  %1121 = vmatpush1.msra.mxu0 0.0
  %1122 = vmatprep.subr.mxu0 0.0
  %1123 = vmatpush1.msra.mxu0 0.0
  %1124 = vmatprep.subr.mxu0 0.0
  %1125 = vmatpush1.msra.mxu0 0.0
  %1126 = vmatprep.subr.mxu0 0.0
  %1127 = vmatpush1.msra.mxu0 0.0
  %1128 = vmatprep.subr.mxu0 0.0
  %1129 = vmatpush1.msra.mxu0 0.0
  %1130 = vmatprep.subr.mxu0 0.0
  %1131 = vmatpush1.msra.mxu0 0.0
  %1132 = vmatprep.subr.mxu0 0.0
  %1133 = vmatpush1.msra.mxu0 0.0
  %1134 = vmatprep.subr.mxu0 0.0
  %1135 = vmatpush1.msra.mxu0 0.0
  %1136 = vmatprep.subr.mxu0 %v1017
  %1137 = vmatpush1.msra.mxu0 %v1016
  %1138 = vmatprep.subr.mxu0 %v1015
  %1139 = vmatpush1.msra.mxu0 %v1014
  %1140 = vmatprep.subr.mxu0 %v1013
  %1141 = vmatpush1.msra.mxu0 %v1012
  %1142 = vmatprep.subr.mxu0 %v1011
  %1143 = vmatpush1.msra.mxu0 %v1010
  %1144 = vmatprep.subr.mxu0 %v1009
  %1145 = vmatpush1.msra.mxu0 %v1008
  %1146 = vmatprep.subr.mxu0 %v1007
  %1147 = vmatpush1.msra.mxu0 %v1006
  %1148 = vmatprep.subr.mxu0 %v1005
  %1149 = vmatpush1.msra.mxu0 %v1004
  %1150 = vmatprep.subr.mxu0 %v1003
  %1151 = vmatpush1.msra.mxu0 %v1002
  %1152 = vmatprep.subr.mxu0 0.0
  %1153 = vmatpush2.msra.mxu0 0.0
  %1154 = vmatprep.subr.mxu0 0.0
  %1155 = vmatpush2.msra.mxu0 0.0
  %1156 = vmatprep.subr.mxu0 0.0
  %1157 = vmatpush2.msra.mxu0 0.0
  %1158 = vmatprep.subr.mxu0 0.0
  %1159 = vmatpush2.msra.mxu0 0.0
  %1160 = vmatprep.subr.mxu0 0.0
  %1161 = vmatpush2.msra.mxu0 0.0
  %1162 = vmatprep.subr.mxu0 0.0
  %1163 = vmatpush2.msra.mxu0 0.0
  %1164 = vmatprep.subr.mxu0 0.0
  %1165 = vmatpush2.msra.mxu0 0.0
  %1166 = vmatprep.subr.mxu0 0.0
  %1167 = vmatpush2.msra.mxu0 0.0
  %1168 = vmatprep.subr.mxu0 0.0
  %1169 = vmatpush2.msra.mxu0 0.0
  %1170 = vmatprep.subr.mxu0 0.0
  %1171 = vmatpush2.msra.mxu0 0.0
  %1172 = vmatprep.subr.mxu0 0.0
  %1173 = vmatpush2.msra.mxu0 0.0
  %1174 = vmatprep.subr.mxu0 0.0
  %1175 = vmatpush2.msra.mxu0 0.0
  %1176 = vmatprep.subr.mxu0 0.0
  %1177 = vmatpush2.msra.mxu0 0.0
  %1178 = vmatprep.subr.mxu0 0.0
  %1179 = vmatpush2.msra.mxu0 0.0
  %1180 = vmatprep.subr.mxu0 0.0
  %1181 = vmatpush2.msra.mxu0 0.0
  %1182 = vmatprep.subr.mxu0 0.0
  %1183 = vmatpush2.msra.mxu0 0.0
  %1184 = vmatprep.mubr.f32.mxu0 0.0
  %1185 = vmatmul.mubr.f32.gmra.mxu0 %v1118
  %v1186 = vpop.f32.mrf.mxu0
  %v1187 = vadd.f32 0.0, %v1186
  %v1188 = vpop.f32.mrf.mxu0
  %v1189 = vadd.f32 0.0, %v1188
  %1190 = vdwg.mxu0
  %v1191 = vadd.f32 %v998, %v1187
  %v1192 = vxor.u32 %v1191, 2147483648
  %v1193 = vmul.f32 %v1192, 1.442695
  %v1194 = vpow.pop %v1193
  %v1195 = vadd.f32 %v1194, 1.0
  %v1196 = vrcp.pop %v1195
  %v1197 = vmul.f32 1.0, %v1196
  %v1198 = vadd.f32 %v1189, %v1023
  %v1199 = vmul.f32 %v1197, %v1198
  %v1200 = vadd.f32 %v1000, %v1199
  %v1201 = vtanh.pop %v1200
  %v1202 = vsub.f32 1.0, %v1197
  %1204 = vrot.lane.b32.xlu0 %v1201, 64
  %v1205 = vpop.permute.xlu0 %1204
  %v1207 = vmul.f32 %v1202, %v1205
  %v1208 = vmul.f32 %v1197, %v1114
  %v1209 = vadd.f32 %v1207, %v1208
  %1211 = vrot.lane.b32.xlu0 %v1209, 64
  %v1212 = vpop.permute.xlu0 %1211
  %v1213 = vsel %vm139, %v1212, 0
  %1215 = vmatprep.subr.mxu0 0.0
  %1216 = vmatpush1.msra.mxu0 0.0
  %1217 = vmatprep.subr.mxu0 0.0
  %1218 = vmatpush1.msra.mxu0 0.0
  %1219 = vmatprep.subr.mxu0 0.0
  %1220 = vmatpush1.msra.mxu0 0.0
  %1221 = vmatprep.subr.mxu0 0.0
  %1222 = vmatpush1.msra.mxu0 0.0
  %1223 = vmatprep.subr.mxu0 0.0
  %1224 = vmatpush1.msra.mxu0 0.0
  %1225 = vmatprep.subr.mxu0 0.0
  %1226 = vmatpush1.msra.mxu0 0.0
  %1227 = vmatprep.subr.mxu0 0.0
  %1228 = vmatpush1.msra.mxu0 0.0
  %1229 = vmatprep.subr.mxu0 0.0
  %1230 = vmatpush1.msra.mxu0 0.0
  %1231 = vmatprep.subr.mxu0 %v1017
  %1232 = vmatpush1.msra.mxu0 %v1016
  %1233 = vmatprep.subr.mxu0 %v1015
  %1234 = vmatpush1.msra.mxu0 %v1014
  %1235 = vmatprep.subr.mxu0 %v1013
  %1236 = vmatpush1.msra.mxu0 %v1012
  %1237 = vmatprep.subr.mxu0 %v1011
  %1238 = vmatpush1.msra.mxu0 %v1010
  %1239 = vmatprep.subr.mxu0 %v1009
  %1240 = vmatpush1.msra.mxu0 %v1008
  %1241 = vmatprep.subr.mxu0 %v1007
  %1242 = vmatpush1.msra.mxu0 %v1006
  %1243 = vmatprep.subr.mxu0 %v1005
  %1244 = vmatpush1.msra.mxu0 %v1004
  %1245 = vmatprep.subr.mxu0 %v1003
  %1246 = vmatpush1.msra.mxu0 %v1002
  %1247 = vmatprep.subr.mxu0 0.0
  %1248 = vmatpush2.msra.mxu0 0.0
  %1249 = vmatprep.subr.mxu0 0.0
  %1250 = vmatpush2.msra.mxu0 0.0
  %1251 = vmatprep.subr.mxu0 0.0
  %1252 = vmatpush2.msra.mxu0 0.0
  %1253 = vmatprep.subr.mxu0 0.0
  %1254 = vmatpush2.msra.mxu0 0.0
  %1255 = vmatprep.subr.mxu0 0.0
  %1256 = vmatpush2.msra.mxu0 0.0
  %1257 = vmatprep.subr.mxu0 0.0
  %1258 = vmatpush2.msra.mxu0 0.0
  %1259 = vmatprep.subr.mxu0 0.0
  %1260 = vmatpush2.msra.mxu0 0.0
  %1261 = vmatprep.subr.mxu0 0.0
  %1262 = vmatpush2.msra.mxu0 0.0
  %1263 = vmatprep.subr.mxu0 0.0
  %1264 = vmatpush2.msra.mxu0 0.0
  %1265 = vmatprep.subr.mxu0 0.0
  %1266 = vmatpush2.msra.mxu0 0.0
  %1267 = vmatprep.subr.mxu0 0.0
  %1268 = vmatpush2.msra.mxu0 0.0
  %1269 = vmatprep.subr.mxu0 0.0
  %1270 = vmatpush2.msra.mxu0 0.0
  %1271 = vmatprep.subr.mxu0 0.0
  %1272 = vmatpush2.msra.mxu0 0.0
  %1273 = vmatprep.subr.mxu0 0.0
  %1274 = vmatpush2.msra.mxu0 0.0
  %1275 = vmatprep.subr.mxu0 0.0
  %1276 = vmatpush2.msra.mxu0 0.0
  %1277 = vmatprep.subr.mxu0 0.0
  %1278 = vmatpush2.msra.mxu0 0.0
  %1279 = vmatprep.mubr.f32.mxu0 0.0
  %1280 = vmatmul.mubr.f32.gmra.mxu0 %v1213
  %v1281 = vpop.f32.mrf.mxu0
  %v1282 = vadd.f32 0.0, %v1281
  %v1283 = vpop.f32.mrf.mxu0
  %v1284 = vadd.f32 0.0, %v1283
  %1285 = vdwg.mxu0
  %v1286 = vadd.f32 %v998, %v1282
  %v1287 = vxor.u32 %v1286, 2147483648
  %v1288 = vmul.f32 %v1287, 1.442695
  %v1289 = vpow.pop %v1288
  %v1290 = vadd.f32 %v1289, 1.0
  %v1291 = vrcp.pop %v1290
  %v1292 = vmul.f32 1.0, %v1291
  %v1293 = vadd.f32 %v1284, %v1023
  %v1294 = vmul.f32 %v1292, %v1293
  %v1295 = vadd.f32 %v1000, %v1294
  %v1296 = vtanh.pop %v1295
  %v1297 = vsub.f32 1.0, %v1292
  %1299 = vrot.lane.b32.xlu0 %v1296, 64
  %v1300 = vpop.permute.xlu0 %1299
  %v1302 = vmul.f32 %v1297, %v1300
  %v1303 = vmul.f32 %v1292, %v1209
  %v1304 = vadd.f32 %v1302, %v1303
  %1306 = vrot.lane.b32.xlu0 %v1304, 64
  %v1307 = vpop.permute.xlu0 %1306
  %v1308 = vsel %vm139, %v1307, 0
  %1310 = vmatprep.subr.mxu0 0.0
  %1311 = vmatpush1.msra.mxu0 0.0
  %1312 = vmatprep.subr.mxu0 0.0
  %1313 = vmatpush1.msra.mxu0 0.0
  %1314 = vmatprep.subr.mxu0 0.0
  %1315 = vmatpush1.msra.mxu0 0.0
  %1316 = vmatprep.subr.mxu0 0.0
  %1317 = vmatpush1.msra.mxu0 0.0
  %1318 = vmatprep.subr.mxu0 0.0
  %1319 = vmatpush1.msra.mxu0 0.0
  %1320 = vmatprep.subr.mxu0 0.0
  %1321 = vmatpush1.msra.mxu0 0.0
  %1322 = vmatprep.subr.mxu0 0.0
  %1323 = vmatpush1.msra.mxu0 0.0
  %1324 = vmatprep.subr.mxu0 0.0
  %1325 = vmatpush1.msra.mxu0 0.0
  %1326 = vmatprep.subr.mxu0 %v1017
  %1327 = vmatpush1.msra.mxu0 %v1016
  %1328 = vmatprep.subr.mxu0 %v1015
  %1329 = vmatpush1.msra.mxu0 %v1014
  %1330 = vmatprep.subr.mxu0 %v1013
  %1331 = vmatpush1.msra.mxu0 %v1012
  %1332 = vmatprep.subr.mxu0 %v1011
  %1333 = vmatpush1.msra.mxu0 %v1010
  %1334 = vmatprep.subr.mxu0 %v1009
  %1335 = vmatpush1.msra.mxu0 %v1008
  %1336 = vmatprep.subr.mxu0 %v1007
  %1337 = vmatpush1.msra.mxu0 %v1006
  %1338 = vmatprep.subr.mxu0 %v1005
  %1339 = vmatpush1.msra.mxu0 %v1004
  %1340 = vmatprep.subr.mxu0 %v1003
  %1341 = vmatpush1.msra.mxu0 %v1002
  %1342 = vmatprep.subr.mxu0 0.0
  %1343 = vmatpush2.msra.mxu0 0.0
  %1344 = vmatprep.subr.mxu0 0.0
  %1345 = vmatpush2.msra.mxu0 0.0
  %1346 = vmatprep.subr.mxu0 0.0
  %1347 = vmatpush2.msra.mxu0 0.0
  %1348 = vmatprep.subr.mxu0 0.0
  %1349 = vmatpush2.msra.mxu0 0.0
  %1350 = vmatprep.subr.mxu0 0.0
  %1351 = vmatpush2.msra.mxu0 0.0
  %1352 = vmatprep.subr.mxu0 0.0
  %1353 = vmatpush2.msra.mxu0 0.0
  %1354 = vmatprep.subr.mxu0 0.0
  %1355 = vmatpush2.msra.mxu0 0.0
  %1356 = vmatprep.subr.mxu0 0.0
  %1357 = vmatpush2.msra.mxu0 0.0
  %1358 = vmatprep.subr.mxu0 0.0
  %1359 = vmatpush2.msra.mxu0 0.0
  %1360 = vmatprep.subr.mxu0 0.0
  %1361 = vmatpush2.msra.mxu0 0.0
  %1362 = vmatprep.subr.mxu0 0.0
  %1363 = vmatpush2.msra.mxu0 0.0
  %1364 = vmatprep.subr.mxu0 0.0
  %1365 = vmatpush2.msra.mxu0 0.0
  %1366 = vmatprep.subr.mxu0 0.0
  %1367 = vmatpush2.msra.mxu0 0.0
  %1368 = vmatprep.subr.mxu0 0.0
  %1369 = vmatpush2.msra.mxu0 0.0
  %1370 = vmatprep.subr.mxu0 0.0
  %1371 = vmatpush2.msra.mxu0 0.0
  %1372 = vmatprep.subr.mxu0 0.0
  %1373 = vmatpush2.msra.mxu0 0.0
  %1374 = vmatprep.mubr.f32.mxu0 0.0
  %1375 = vmatmul.mubr.f32.gmra.mxu0 %v1308
  %v1376 = vpop.f32.mrf.mxu0
  %v1377 = vadd.f32 0.0, %v1376
  %v1378 = vpop.f32.mrf.mxu0
  %v1379 = vadd.f32 0.0, %v1378
  %1380 = vdwg.mxu0
  %v1381 = vadd.f32 %v998, %v1377
  %v1382 = vxor.u32 %v1381, 2147483648
  %v1383 = vmul.f32 %v1382, 1.442695
  %v1384 = vpow.pop %v1383
  %v1385 = vadd.f32 %v1384, 1.0
  %v1386 = vrcp.pop %v1385
  %v1387 = vmul.f32 1.0, %v1386
  %v1388 = vadd.f32 %v1379, %v1023
  %v1389 = vmul.f32 %v1387, %v1388
  %v1390 = vadd.f32 %v1000, %v1389
  %v1391 = vtanh.pop %v1390
  %v1392 = vsub.f32 1.0, %v1387
  %1394 = vrot.lane.b32.xlu0 %v1391, 64
  %v1395 = vpop.permute.xlu0 %1394
  %v1397 = vmul.f32 %v1392, %v1395
  %v1398 = vmul.f32 %v1387, %v1304
  %v1399 = vadd.f32 %v1397, %v1398
  %1401 = vrot.lane.b32.xlu0 %v1399, 64
  %v1402 = vpop.permute.xlu0 %1401
  %v1403 = vsel %vm139, %v1402, 0
  %1405 = vmatprep.subr.mxu0 0.0
  %1406 = vmatpush1.msra.mxu0 0.0
  %1407 = vmatprep.subr.mxu0 0.0
  %1408 = vmatpush1.msra.mxu0 0.0
  %1409 = vmatprep.subr.mxu0 0.0
  %1410 = vmatpush1.msra.mxu0 0.0
  %1411 = vmatprep.subr.mxu0 0.0
  %1412 = vmatpush1.msra.mxu0 0.0
  %1413 = vmatprep.subr.mxu0 0.0
  %1414 = vmatpush1.msra.mxu0 0.0
  %1415 = vmatprep.subr.mxu0 0.0
  %1416 = vmatpush1.msra.mxu0 0.0
  %1417 = vmatprep.subr.mxu0 0.0
  %1418 = vmatpush1.msra.mxu0 0.0
  %1419 = vmatprep.subr.mxu0 0.0
  %1420 = vmatpush1.msra.mxu0 0.0
  %1421 = vmatprep.subr.mxu0 %v1017
  %1422 = vmatpush1.msra.mxu0 %v1016
  %1423 = vmatprep.subr.mxu0 %v1015
  %1424 = vmatpush1.msra.mxu0 %v1014
  %1425 = vmatprep.subr.mxu0 %v1013
  %1426 = vmatpush1.msra.mxu0 %v1012
  %1427 = vmatprep.subr.mxu0 %v1011
  %1428 = vmatpush1.msra.mxu0 %v1010
  %1429 = vmatprep.subr.mxu0 %v1009
  %1430 = vmatpush1.msra.mxu0 %v1008
  %1431 = vmatprep.subr.mxu0 %v1007
  %1432 = vmatpush1.msra.mxu0 %v1006
  %1433 = vmatprep.subr.mxu0 %v1005
  %1434 = vmatpush1.msra.mxu0 %v1004
  %1435 = vmatprep.subr.mxu0 %v1003
  %1436 = vmatpush1.msra.mxu0 %v1002
  %1437 = vmatprep.subr.mxu0 0.0
  %1438 = vmatpush2.msra.mxu0 0.0
  %1439 = vmatprep.subr.mxu0 0.0
  %1440 = vmatpush2.msra.mxu0 0.0
  %1441 = vmatprep.subr.mxu0 0.0
  %1442 = vmatpush2.msra.mxu0 0.0
  %1443 = vmatprep.subr.mxu0 0.0
  %1444 = vmatpush2.msra.mxu0 0.0
  %1445 = vmatprep.subr.mxu0 0.0
  %1446 = vmatpush2.msra.mxu0 0.0
  %1447 = vmatprep.subr.mxu0 0.0
  %1448 = vmatpush2.msra.mxu0 0.0
  %1449 = vmatprep.subr.mxu0 0.0
  %1450 = vmatpush2.msra.mxu0 0.0
  %1451 = vmatprep.subr.mxu0 0.0
  %1452 = vmatpush2.msra.mxu0 0.0
  %1453 = vmatprep.subr.mxu0 0.0
  %1454 = vmatpush2.msra.mxu0 0.0
  %1455 = vmatprep.subr.mxu0 0.0
  %1456 = vmatpush2.msra.mxu0 0.0
  %1457 = vmatprep.subr.mxu0 0.0
  %1458 = vmatpush2.msra.mxu0 0.0
  %1459 = vmatprep.subr.mxu0 0.0
  %1460 = vmatpush2.msra.mxu0 0.0
  %1461 = vmatprep.subr.mxu0 0.0
  %1462 = vmatpush2.msra.mxu0 0.0
  %1463 = vmatprep.subr.mxu0 0.0
  %1464 = vmatpush2.msra.mxu0 0.0
  %1465 = vmatprep.subr.mxu0 0.0
  %1466 = vmatpush2.msra.mxu0 0.0
  %1467 = vmatprep.subr.mxu0 0.0
  %1468 = vmatpush2.msra.mxu0 0.0
  %1469 = vmatprep.mubr.f32.mxu0 0.0
  %1470 = vmatmul.mubr.f32.gmra.mxu0 %v1403
  %v1471 = vpop.f32.mrf.mxu0
  %v1472 = vadd.f32 0.0, %v1471
  %v1473 = vpop.f32.mrf.mxu0
  %v1474 = vadd.f32 0.0, %v1473
  %1475 = vdwg.mxu0
  %v1476 = vadd.f32 %v998, %v1472
  %v1477 = vxor.u32 %v1476, 2147483648
  %v1478 = vmul.f32 %v1477, 1.442695
  %v1479 = vpow.pop %v1478
  %v1480 = vadd.f32 %v1479, 1.0
  %v1481 = vrcp.pop %v1480
  %v1482 = vmul.f32 1.0, %v1481
  %v1483 = vadd.f32 %v1474, %v1023
  %v1484 = vmul.f32 %v1482, %v1483
  %v1485 = vadd.f32 %v1000, %v1484
  %v1486 = vtanh.pop %v1485
  %v1487 = vsub.f32 1.0, %v1482
  %1489 = vrot.lane.b32.xlu0 %v1486, 64
  %v1490 = vpop.permute.xlu0 %1489
  %v1492 = vmul.f32 %v1487, %v1490
  %v1493 = vmul.f32 %v1482, %v1399
  %v1494 = vadd.f32 %v1492, %v1493
  %1496 = vrot.lane.b32.xlu0 %v1494, 64
  %v1497 = vpop.permute.xlu0 %1496
  %v1498 = vsel %vm139, %v1497, 0
  %1500 = vmatprep.subr.mxu0 0.0
  %1501 = vmatpush1.msra.mxu0 0.0
  %1502 = vmatprep.subr.mxu0 0.0
  %1503 = vmatpush1.msra.mxu0 0.0
  %1504 = vmatprep.subr.mxu0 0.0
  %1505 = vmatpush1.msra.mxu0 0.0
  %1506 = vmatprep.subr.mxu0 0.0
  %1507 = vmatpush1.msra.mxu0 0.0
  %1508 = vmatprep.subr.mxu0 0.0
  %1509 = vmatpush1.msra.mxu0 0.0
  %1510 = vmatprep.subr.mxu0 0.0
  %1511 = vmatpush1.msra.mxu0 0.0
  %1512 = vmatprep.subr.mxu0 0.0
  %1513 = vmatpush1.msra.mxu0 0.0
  %1514 = vmatprep.subr.mxu0 0.0
  %1515 = vmatpush1.msra.mxu0 0.0
  %1516 = vmatprep.subr.mxu0 %v1017
  %1517 = vmatpush1.msra.mxu0 %v1016
  %1518 = vmatprep.subr.mxu0 %v1015
  %1519 = vmatpush1.msra.mxu0 %v1014
  %1520 = vmatprep.subr.mxu0 %v1013
  %1521 = vmatpush1.msra.mxu0 %v1012
  %1522 = vmatprep.subr.mxu0 %v1011
  %1523 = vmatpush1.msra.mxu0 %v1010
  %1524 = vmatprep.subr.mxu0 %v1009
  %1525 = vmatpush1.msra.mxu0 %v1008
  %1526 = vmatprep.subr.mxu0 %v1007
  %1527 = vmatpush1.msra.mxu0 %v1006
  %1528 = vmatprep.subr.mxu0 %v1005
  %1529 = vmatpush1.msra.mxu0 %v1004
  %1530 = vmatprep.subr.mxu0 %v1003
  %1531 = vmatpush1.msra.mxu0 %v1002
  %1532 = vmatprep.subr.mxu0 0.0
  %1533 = vmatpush2.msra.mxu0 0.0
  %1534 = vmatprep.subr.mxu0 0.0
  %1535 = vmatpush2.msra.mxu0 0.0
  %1536 = vmatprep.subr.mxu0 0.0
  %1537 = vmatpush2.msra.mxu0 0.0
  %1538 = vmatprep.subr.mxu0 0.0
  %1539 = vmatpush2.msra.mxu0 0.0
  %1540 = vmatprep.subr.mxu0 0.0
  %1541 = vmatpush2.msra.mxu0 0.0
  %1542 = vmatprep.subr.mxu0 0.0
  %1543 = vmatpush2.msra.mxu0 0.0
  %1544 = vmatprep.subr.mxu0 0.0
  %1545 = vmatpush2.msra.mxu0 0.0
  %1546 = vmatprep.subr.mxu0 0.0
  %1547 = vmatpush2.msra.mxu0 0.0
  %1548 = vmatprep.subr.mxu0 0.0
  %1549 = vmatpush2.msra.mxu0 0.0
  %1550 = vmatprep.subr.mxu0 0.0
  %1551 = vmatpush2.msra.mxu0 0.0
  %1552 = vmatprep.subr.mxu0 0.0
  %1553 = vmatpush2.msra.mxu0 0.0
  %1554 = vmatprep.subr.mxu0 0.0
  %1555 = vmatpush2.msra.mxu0 0.0
  %1556 = vmatprep.subr.mxu0 0.0
  %1557 = vmatpush2.msra.mxu0 0.0
  %1558 = vmatprep.subr.mxu0 0.0
  %1559 = vmatpush2.msra.mxu0 0.0
  %1560 = vmatprep.subr.mxu0 0.0
  %1561 = vmatpush2.msra.mxu0 0.0
  %1562 = vmatprep.subr.mxu0 0.0
  %1563 = vmatpush2.msra.mxu0 0.0
  %1564 = vmatprep.mubr.f32.mxu0 0.0
  %1565 = vmatmul.mubr.f32.gmra.mxu0 %v1498
  %v1566 = vpop.f32.mrf.mxu0
  %v1567 = vadd.f32 0.0, %v1566
  %v1568 = vpop.f32.mrf.mxu0
  %v1569 = vadd.f32 0.0, %v1568
  %1570 = vdwg.mxu0
  %v1571 = vadd.f32 %v998, %v1567
  %v1572 = vxor.u32 %v1571, 2147483648
  %v1573 = vmul.f32 %v1572, 1.442695
  %v1574 = vpow.pop %v1573
  %v1575 = vadd.f32 %v1574, 1.0
  %v1576 = vrcp.pop %v1575
  %v1577 = vmul.f32 1.0, %v1576
  %v1578 = vadd.f32 %v1569, %v1023
  %v1579 = vmul.f32 %v1577, %v1578
  %v1580 = vadd.f32 %v1000, %v1579
  %v1581 = vtanh.pop %v1580
  %v1582 = vsub.f32 1.0, %v1577
  %1584 = vrot.lane.b32.xlu0 %v1581, 64
  %v1585 = vpop.permute.xlu0 %1584
  %v1587 = vmul.f32 %v1582, %v1585
  %v1588 = vmul.f32 %v1577, %v1494
  %v1589 = vadd.f32 %v1587, %v1588
  %1591 = vrot.lane.b32.xlu0 %v1589, 64
  %v1592 = vpop.permute.xlu0 %1591
  %v1593 = vsel %vm139, %v1592, 0
  %1595 = vmatprep.subr.mxu0 0.0
  %1596 = vmatpush1.msra.mxu0 0.0
  %1597 = vmatprep.subr.mxu0 0.0
  %1598 = vmatpush1.msra.mxu0 0.0
  %1599 = vmatprep.subr.mxu0 0.0
  %1600 = vmatpush1.msra.mxu0 0.0
  %1601 = vmatprep.subr.mxu0 0.0
  %1602 = vmatpush1.msra.mxu0 0.0
  %1603 = vmatprep.subr.mxu0 0.0
  %1604 = vmatpush1.msra.mxu0 0.0
  %1605 = vmatprep.subr.mxu0 0.0
  %1606 = vmatpush1.msra.mxu0 0.0
  %1607 = vmatprep.subr.mxu0 0.0
  %1608 = vmatpush1.msra.mxu0 0.0
  %1609 = vmatprep.subr.mxu0 0.0
  %1610 = vmatpush1.msra.mxu0 0.0
  %1611 = vmatprep.subr.mxu0 %v1017
  %1612 = vmatpush1.msra.mxu0 %v1016
  %1613 = vmatprep.subr.mxu0 %v1015
  %1614 = vmatpush1.msra.mxu0 %v1014
  %1615 = vmatprep.subr.mxu0 %v1013
  %1616 = vmatpush1.msra.mxu0 %v1012
  %1617 = vmatprep.subr.mxu0 %v1011
  %1618 = vmatpush1.msra.mxu0 %v1010
  %1619 = vmatprep.subr.mxu0 %v1009
  %1620 = vmatpush1.msra.mxu0 %v1008
  %1621 = vmatprep.subr.mxu0 %v1007
  %1622 = vmatpush1.msra.mxu0 %v1006
  %1623 = vmatprep.subr.mxu0 %v1005
  %1624 = vmatpush1.msra.mxu0 %v1004
  %1625 = vmatprep.subr.mxu0 %v1003
  %1626 = vmatpush1.msra.mxu0 %v1002
  %1627 = vmatprep.subr.mxu0 0.0
  %1628 = vmatpush2.msra.mxu0 0.0
  %1629 = vmatprep.subr.mxu0 0.0
  %1630 = vmatpush2.msra.mxu0 0.0
  %1631 = vmatprep.subr.mxu0 0.0
  %1632 = vmatpush2.msra.mxu0 0.0
  %1633 = vmatprep.subr.mxu0 0.0
  %1634 = vmatpush2.msra.mxu0 0.0
  %1635 = vmatprep.subr.mxu0 0.0
  %1636 = vmatpush2.msra.mxu0 0.0
  %1637 = vmatprep.subr.mxu0 0.0
  %1638 = vmatpush2.msra.mxu0 0.0
  %1639 = vmatprep.subr.mxu0 0.0
  %1640 = vmatpush2.msra.mxu0 0.0
  %1641 = vmatprep.subr.mxu0 0.0
  %1642 = vmatpush2.msra.mxu0 0.0
  %1643 = vmatprep.subr.mxu0 0.0
  %1644 = vmatpush2.msra.mxu0 0.0
  %1645 = vmatprep.subr.mxu0 0.0
  %1646 = vmatpush2.msra.mxu0 0.0
  %1647 = vmatprep.subr.mxu0 0.0
  %1648 = vmatpush2.msra.mxu0 0.0
  %1649 = vmatprep.subr.mxu0 0.0
  %1650 = vmatpush2.msra.mxu0 0.0
  %1651 = vmatprep.subr.mxu0 0.0
  %1652 = vmatpush2.msra.mxu0 0.0
  %1653 = vmatprep.subr.mxu0 0.0
  %1654 = vmatpush2.msra.mxu0 0.0
  %1655 = vmatprep.subr.mxu0 0.0
  %1656 = vmatpush2.msra.mxu0 0.0
  %1657 = vmatprep.subr.mxu0 0.0
  %1658 = vmatpush2.msra.mxu0 0.0
  %1659 = vmatprep.mubr.f32.mxu0 0.0
  %1660 = vmatmul.mubr.f32.gmra.mxu0 %v1593
  %v1661 = vpop.f32.mrf.mxu0
  %v1662 = vadd.f32 0.0, %v1661
  %v1663 = vpop.f32.mrf.mxu0
  %v1664 = vadd.f32 0.0, %v1663
  %1665 = vdwg.mxu0
  %v1666 = vadd.f32 %v998, %v1662
  %v1667 = vxor.u32 %v1666, 2147483648
  %v1668 = vmul.f32 %v1667, 1.442695
  %v1669 = vpow.pop %v1668
  %v1670 = vadd.f32 %v1669, 1.0
  %v1671 = vrcp.pop %v1670
  %v1672 = vmul.f32 1.0, %v1671
  %v1673 = vadd.f32 %v1664, %v1023
  %v1674 = vmul.f32 %v1672, %v1673
  %v1675 = vadd.f32 %v1000, %v1674
  %v1676 = vtanh.pop %v1675
  %v1677 = vsub.f32 1.0, %v1672
  %1679 = vrot.lane.b32.xlu0 %v1676, 64
  %v1680 = vpop.permute.xlu0 %1679
  %v1682 = vmul.f32 %v1677, %v1680
  %v1683 = vmul.f32 %v1672, %v1589
  %v1684 = vadd.f32 %v1682, %v1683
  %1686 = vrot.lane.b32.xlu0 %v1684, 64
  %v1687 = vpop.permute.xlu0 %1686
  %v1688 = vsel %vm139, %v1687, 0
  %1690 = vmatprep.subr.mxu0 0.0
  %1691 = vmatpush1.msra.mxu0 0.0
  %1692 = vmatprep.subr.mxu0 0.0
  %1693 = vmatpush1.msra.mxu0 0.0
  %1694 = vmatprep.subr.mxu0 0.0
  %1695 = vmatpush1.msra.mxu0 0.0
  %1696 = vmatprep.subr.mxu0 0.0
  %1697 = vmatpush1.msra.mxu0 0.0
  %1698 = vmatprep.subr.mxu0 0.0
  %1699 = vmatpush1.msra.mxu0 0.0
  %1700 = vmatprep.subr.mxu0 0.0
  %1701 = vmatpush1.msra.mxu0 0.0
  %1702 = vmatprep.subr.mxu0 0.0
  %1703 = vmatpush1.msra.mxu0 0.0
  %1704 = vmatprep.subr.mxu0 0.0
  %1705 = vmatpush1.msra.mxu0 0.0
  %1706 = vmatprep.subr.mxu0 %v1017
  %1707 = vmatpush1.msra.mxu0 %v1016
  %1708 = vmatprep.subr.mxu0 %v1015
  %1709 = vmatpush1.msra.mxu0 %v1014
  %1710 = vmatprep.subr.mxu0 %v1013
  %1711 = vmatpush1.msra.mxu0 %v1012
  %1712 = vmatprep.subr.mxu0 %v1011
  %1713 = vmatpush1.msra.mxu0 %v1010
  %1714 = vmatprep.subr.mxu0 %v1009
  %1715 = vmatpush1.msra.mxu0 %v1008
  %1716 = vmatprep.subr.mxu0 %v1007
  %1717 = vmatpush1.msra.mxu0 %v1006
  %1718 = vmatprep.subr.mxu0 %v1005
  %1719 = vmatpush1.msra.mxu0 %v1004
  %1720 = vmatprep.subr.mxu0 %v1003
  %1721 = vmatpush1.msra.mxu0 %v1002
  %1722 = vmatprep.subr.mxu0 0.0
  %1723 = vmatpush2.msra.mxu0 0.0
  %1724 = vmatprep.subr.mxu0 0.0
  %1725 = vmatpush2.msra.mxu0 0.0
  %1726 = vmatprep.subr.mxu0 0.0
  %1727 = vmatpush2.msra.mxu0 0.0
  %1728 = vmatprep.subr.mxu0 0.0
  %1729 = vmatpush2.msra.mxu0 0.0
  %1730 = vmatprep.subr.mxu0 0.0
  %1731 = vmatpush2.msra.mxu0 0.0
  %1732 = vmatprep.subr.mxu0 0.0
  %1733 = vmatpush2.msra.mxu0 0.0
  %1734 = vmatprep.subr.mxu0 0.0
  %1735 = vmatpush2.msra.mxu0 0.0
  %1736 = vmatprep.subr.mxu0 0.0
  %1737 = vmatpush2.msra.mxu0 0.0
  %1738 = vmatprep.subr.mxu0 0.0
  %1739 = vmatpush2.msra.mxu0 0.0
  %1740 = vmatprep.subr.mxu0 0.0
  %1741 = vmatpush2.msra.mxu0 0.0
  %1742 = vmatprep.subr.mxu0 0.0
  %1743 = vmatpush2.msra.mxu0 0.0
  %1744 = vmatprep.subr.mxu0 0.0
  %1745 = vmatpush2.msra.mxu0 0.0
  %1746 = vmatprep.subr.mxu0 0.0
  %1747 = vmatpush2.msra.mxu0 0.0
  %1748 = vmatprep.subr.mxu0 0.0
  %1749 = vmatpush2.msra.mxu0 0.0
  %1750 = vmatprep.subr.mxu0 0.0
  %1751 = vmatpush2.msra.mxu0 0.0
  %1752 = vmatprep.subr.mxu0 0.0
  %1753 = vmatpush2.msra.mxu0 0.0
  %1754 = vmatprep.mubr.f32.mxu0 0.0
  %1755 = vmatmul.mubr.f32.gmra.mxu0 %v1688
  %v1756 = vpop.f32.mrf.mxu0
  %v1757 = vadd.f32 0.0, %v1756
  %v1758 = vpop.f32.mrf.mxu0
  %v1759 = vadd.f32 0.0, %v1758
  %1760 = vdwg.mxu0
  %v1761 = vadd.f32 %v998, %v1757
  %v1762 = vxor.u32 %v1761, 2147483648
  %v1763 = vmul.f32 %v1762, 1.442695
  %v1764 = vpow.pop %v1763
  %v1765 = vadd.f32 %v1764, 1.0
  %v1766 = vrcp.pop %v1765
  %v1767 = vmul.f32 1.0, %v1766
  %v1768 = vadd.f32 %v1759, %v1023
  %v1769 = vmul.f32 %v1767, %v1768
  %v1770 = vadd.f32 %v1000, %v1769
  %v1771 = vtanh.pop %v1770
  %v1772 = vsub.f32 1.0, %v1767
  %1774 = vrot.lane.b32.xlu0 %v1771, 64
  %v1775 = vpop.permute.xlu0 %1774
  %v1777 = vmul.f32 %v1772, %v1775
  %v1778 = vmul.f32 %v1767, %v1684
  %v1779 = vadd.f32 %v1777, %v1778
  %v1780 = vld [vmem:[%s9] sm:$0xff]
  %v1781 = vld [vmem:[%s9 + $0x8] sm:$0xff]
  %v1782 = vld [vmem:[%s9 + $0x10] sm:$0xff]
  %v1783 = vld [vmem:[%s9 + $0x18] sm:$0xff]
  %v1784 = vld [vmem:[%s9 + $0x20] sm:$0xff]
  %v1785 = vld [vmem:[%s9 + $0x28] sm:$0xff]
  %v1786 = vld [vmem:[%s9 + $0x30] sm:$0xff]
  %v1787 = vld [vmem:[%s9 + $0x38] sm:$0xff]
  %s1788 = scalar_lea.vmem %s9, 64
  %v1789 = vld [vmem:[%s1788] sm:$0xff]
  %v1790 = vld [vmem:[%s1788 + $0x8] sm:$0xff]
  %v1791 = vld [vmem:[%s1788 + $0x10] sm:$0xff]
  %v1792 = vld [vmem:[%s1788 + $0x18] sm:$0xff]
  %v1793 = vld [vmem:[%s1788 + $0x20] sm:$0xff]
  %v1794 = vld [vmem:[%s1788 + $0x28] sm:$0xff]
  %v1795 = vld [vmem:[%s1788 + $0x30] sm:$0xff]
  %v1796 = vld [vmem:[%s1788 + $0x38] sm:$0xff]
  %1798 = vrot.lane.b32.xlu0 %v1779, 64
  %v1799 = vpop.permute.xlu0 %1798
  %v1800 = vsel %vm139, %v1799, 0
  %1802 = vmatprep.subr.mxu0 0.0
  %1803 = vmatpush1.msra.mxu0 0.0
  %1804 = vmatprep.subr.mxu0 0.0
  %1805 = vmatpush1.msra.mxu0 0.0
  %1806 = vmatprep.subr.mxu0 0.0
  %1807 = vmatpush1.msra.mxu0 0.0
  %1808 = vmatprep.subr.mxu0 0.0
  %1809 = vmatpush1.msra.mxu0 0.0
  %1810 = vmatprep.subr.mxu0 0.0
  %1811 = vmatpush1.msra.mxu0 0.0
  %1812 = vmatprep.subr.mxu0 0.0
  %1813 = vmatpush1.msra.mxu0 0.0
  %1814 = vmatprep.subr.mxu0 0.0
  %1815 = vmatpush1.msra.mxu0 0.0
  %1816 = vmatprep.subr.mxu0 0.0
  %1817 = vmatpush1.msra.mxu0 0.0
  %1818 = vmatprep.subr.mxu0 0.0
  %1819 = vmatpush1.msra.mxu0 %v1796
  %1820 = vmatprep.subr.mxu0 0.0
  %1821 = vmatpush1.msra.mxu0 %v1795
  %1822 = vmatprep.subr.mxu0 0.0
  %1823 = vmatpush1.msra.mxu0 %v1794
  %1824 = vmatprep.subr.mxu0 0.0
  %1825 = vmatpush1.msra.mxu0 %v1793
  %1826 = vmatprep.subr.mxu0 0.0
  %1827 = vmatpush1.msra.mxu0 %v1792
  %1828 = vmatprep.subr.mxu0 0.0
  %1829 = vmatpush1.msra.mxu0 %v1791
  %1830 = vmatprep.subr.mxu0 0.0
  %1831 = vmatpush1.msra.mxu0 %v1790
  %1832 = vmatprep.subr.mxu0 0.0
  %1833 = vmatpush1.msra.mxu0 %v1789
  %1834 = vmatprep.subr.mxu0 0.0
  %1835 = vmatpush2.msra.mxu0 0.0
  %1836 = vmatprep.subr.mxu0 0.0
  %1837 = vmatpush2.msra.mxu0 0.0
  %1838 = vmatprep.subr.mxu0 0.0
  %1839 = vmatpush2.msra.mxu0 0.0
  %1840 = vmatprep.subr.mxu0 0.0
  %1841 = vmatpush2.msra.mxu0 0.0
  %1842 = vmatprep.subr.mxu0 0.0
  %1843 = vmatpush2.msra.mxu0 0.0
  %1844 = vmatprep.subr.mxu0 0.0
  %1845 = vmatpush2.msra.mxu0 0.0
  %1846 = vmatprep.subr.mxu0 0.0
  %1847 = vmatpush2.msra.mxu0 0.0
  %1848 = vmatprep.subr.mxu0 0.0
  %1849 = vmatpush2.msra.mxu0 0.0
  %1850 = vmatprep.subr.mxu0 0.0
  %1851 = vmatpush2.msra.mxu0 0.0
  %1852 = vmatprep.subr.mxu0 0.0
  %1853 = vmatpush2.msra.mxu0 0.0
  %1854 = vmatprep.subr.mxu0 0.0
  %1855 = vmatpush2.msra.mxu0 0.0
  %1856 = vmatprep.subr.mxu0 0.0
  %1857 = vmatpush2.msra.mxu0 0.0
  %1858 = vmatprep.subr.mxu0 0.0
  %1859 = vmatpush2.msra.mxu0 0.0
  %1860 = vmatprep.subr.mxu0 0.0
  %1861 = vmatpush2.msra.mxu0 0.0
  %1862 = vmatprep.subr.mxu0 0.0
  %1863 = vmatpush2.msra.mxu0 0.0
  %1864 = vmatprep.subr.mxu0 0.0
  %1865 = vmatpush2.msra.mxu0 0.0
  %1866 = vmatprep.mubr.f32.mxu0 0.0
  %1867 = vmatmul.mubr.f32.gmra.mxu0 %v1800
  %v1868 = vpop.f32.mrf.mxu0
  %v1869 = vadd.f32 0.0, %v1868
  %v1870 = vpop.f32.mrf.mxu0
  %1871 = vdwg.mxu0
  %1872 = vmatprep.subr.mxu0 0.0
  %1873 = vmatpush1.msra.mxu0 0.0
  %1874 = vmatprep.subr.mxu0 0.0
  %1875 = vmatpush1.msra.mxu0 0.0
  %1876 = vmatprep.subr.mxu0 0.0
  %1877 = vmatpush1.msra.mxu0 0.0
  %1878 = vmatprep.subr.mxu0 0.0
  %1879 = vmatpush1.msra.mxu0 0.0
  %1880 = vmatprep.subr.mxu0 0.0
  %1881 = vmatpush1.msra.mxu0 0.0
  %1882 = vmatprep.subr.mxu0 0.0
  %1883 = vmatpush1.msra.mxu0 0.0
  %1884 = vmatprep.subr.mxu0 0.0
  %1885 = vmatpush1.msra.mxu0 0.0
  %1886 = vmatprep.subr.mxu0 0.0
  %1887 = vmatpush1.msra.mxu0 0.0
  %1888 = vmatprep.subr.mxu0 0.0
  %1889 = vmatpush1.msra.mxu0 %v1787
  %1890 = vmatprep.subr.mxu0 0.0
  %1891 = vmatpush1.msra.mxu0 %v1786
  %1892 = vmatprep.subr.mxu0 0.0
  %1893 = vmatpush1.msra.mxu0 %v1785
  %1894 = vmatprep.subr.mxu0 0.0
  %1895 = vmatpush1.msra.mxu0 %v1784
  %1896 = vmatprep.subr.mxu0 0.0
  %1897 = vmatpush1.msra.mxu0 %v1783
  %1898 = vmatprep.subr.mxu0 0.0
  %1899 = vmatpush1.msra.mxu0 %v1782
  %1900 = vmatprep.subr.mxu0 0.0
  %1901 = vmatpush1.msra.mxu0 %v1781
  %1902 = vmatprep.subr.mxu0 0.0
  %1903 = vmatpush1.msra.mxu0 %v1780
  %1904 = vmatprep.subr.mxu0 0.0
  %1905 = vmatpush2.msra.mxu0 0.0
  %1906 = vmatprep.subr.mxu0 0.0
  %1907 = vmatpush2.msra.mxu0 0.0
  %1908 = vmatprep.subr.mxu0 0.0
  %1909 = vmatpush2.msra.mxu0 0.0
  %1910 = vmatprep.subr.mxu0 0.0
  %1911 = vmatpush2.msra.mxu0 0.0
  %1912 = vmatprep.subr.mxu0 0.0
  %1913 = vmatpush2.msra.mxu0 0.0
  %1914 = vmatprep.subr.mxu0 0.0
  %1915 = vmatpush2.msra.mxu0 0.0
  %1916 = vmatprep.subr.mxu0 0.0
  %1917 = vmatpush2.msra.mxu0 0.0
  %1918 = vmatprep.subr.mxu0 0.0
  %1919 = vmatpush2.msra.mxu0 0.0
  %1920 = vmatprep.subr.mxu0 0.0
  %1921 = vmatpush2.msra.mxu0 0.0
  %1922 = vmatprep.subr.mxu0 0.0
  %1923 = vmatpush2.msra.mxu0 0.0
  %1924 = vmatprep.subr.mxu0 0.0
  %1925 = vmatpush2.msra.mxu0 0.0
  %1926 = vmatprep.subr.mxu0 0.0
  %1927 = vmatpush2.msra.mxu0 0.0
  %1928 = vmatprep.subr.mxu0 0.0
  %1929 = vmatpush2.msra.mxu0 0.0
  %1930 = vmatprep.subr.mxu0 0.0
  %1931 = vmatpush2.msra.mxu0 0.0
  %1932 = vmatprep.subr.mxu0 0.0
  %1933 = vmatpush2.msra.mxu0 0.0
  %1934 = vmatprep.subr.mxu0 0.0
  %1935 = vmatpush2.msra.mxu0 0.0
  %1936 = vmatprep.mubr.f32.mxu0 0.0
  %1937 = vmatmul.mubr.f32.gmra.mxu0 %v929
  %v1938 = vpop.f32.mrf.mxu0
  %v1939 = vadd.f32 %v1869, %v1938
  %v1940 = vpop.f32.mrf.mxu0
  %1941 = vdwg.mxu0
  %v1942 = vmul.f32 %v897, %v1779
  %s1943 = scalar_lea.vmem %s9, 128
  %v1944 = vld [vmem:[%s1943] sm:$0xff]
  %v1945 = vld [vmem:[%s1943 + $0x8] sm:$0xff]
  %v1946 = vld [vmem:[%s1943 + $0x10] sm:$0xff]
  %v1947 = vld [vmem:[%s1943 + $0x18] sm:$0xff]
  %v1948 = vld [vmem:[%s1943 + $0x20] sm:$0xff]
  %v1949 = vld [vmem:[%s1943 + $0x28] sm:$0xff]
  %v1950 = vld [vmem:[%s1943 + $0x30] sm:$0xff]
  %v1951 = vld [vmem:[%s1943 + $0x38] sm:$0xff]
  %1953 = vrot.lane.b32.xlu0 %v1942, 64
  %v1954 = vpop.permute.xlu0 %1953
  %v1955 = vsel %vm139, %v1954, 0
  %1957 = vmatprep.subr.mxu0 0.0
  %1958 = vmatpush1.msra.mxu0 0.0
  %1959 = vmatprep.subr.mxu0 0.0
  %1960 = vmatpush1.msra.mxu0 0.0
  %1961 = vmatprep.subr.mxu0 0.0
  %1962 = vmatpush1.msra.mxu0 0.0
  %1963 = vmatprep.subr.mxu0 0.0
  %1964 = vmatpush1.msra.mxu0 0.0
  %1965 = vmatprep.subr.mxu0 0.0
  %1966 = vmatpush1.msra.mxu0 0.0
  %1967 = vmatprep.subr.mxu0 0.0
  %1968 = vmatpush1.msra.mxu0 0.0
  %1969 = vmatprep.subr.mxu0 0.0
  %1970 = vmatpush1.msra.mxu0 0.0
  %1971 = vmatprep.subr.mxu0 0.0
  %1972 = vmatpush1.msra.mxu0 0.0
  %1973 = vmatprep.subr.mxu0 0.0
  %1974 = vmatpush1.msra.mxu0 %v1951
  %1975 = vmatprep.subr.mxu0 0.0
  %1976 = vmatpush1.msra.mxu0 %v1950
  %1977 = vmatprep.subr.mxu0 0.0
  %1978 = vmatpush1.msra.mxu0 %v1949
  %1979 = vmatprep.subr.mxu0 0.0
  %1980 = vmatpush1.msra.mxu0 %v1948
  %1981 = vmatprep.subr.mxu0 0.0
  %1982 = vmatpush1.msra.mxu0 %v1947
  %1983 = vmatprep.subr.mxu0 0.0
  %1984 = vmatpush1.msra.mxu0 %v1946
  %1985 = vmatprep.subr.mxu0 0.0
  %1986 = vmatpush1.msra.mxu0 %v1945
  %1987 = vmatprep.subr.mxu0 0.0
  %1988 = vmatpush1.msra.mxu0 %v1944
  %1989 = vmatprep.subr.mxu0 0.0
  %1990 = vmatpush2.msra.mxu0 0.0
  %1991 = vmatprep.subr.mxu0 0.0
  %1992 = vmatpush2.msra.mxu0 0.0
  %1993 = vmatprep.subr.mxu0 0.0
  %1994 = vmatpush2.msra.mxu0 0.0
  %1995 = vmatprep.subr.mxu0 0.0
  %1996 = vmatpush2.msra.mxu0 0.0
  %1997 = vmatprep.subr.mxu0 0.0
  %1998 = vmatpush2.msra.mxu0 0.0
  %1999 = vmatprep.subr.mxu0 0.0
  %2000 = vmatpush2.msra.mxu0 0.0
  %2001 = vmatprep.subr.mxu0 0.0
  %2002 = vmatpush2.msra.mxu0 0.0
  %2003 = vmatprep.subr.mxu0 0.0
  %2004 = vmatpush2.msra.mxu0 0.0
  %2005 = vmatprep.subr.mxu0 0.0
  %2006 = vmatpush2.msra.mxu0 0.0
  %2007 = vmatprep.subr.mxu0 0.0
  %2008 = vmatpush2.msra.mxu0 0.0
  %2009 = vmatprep.subr.mxu0 0.0
  %2010 = vmatpush2.msra.mxu0 0.0
  %2011 = vmatprep.subr.mxu0 0.0
  %2012 = vmatpush2.msra.mxu0 0.0
  %2013 = vmatprep.subr.mxu0 0.0
  %2014 = vmatpush2.msra.mxu0 0.0
  %2015 = vmatprep.subr.mxu0 0.0
  %2016 = vmatpush2.msra.mxu0 0.0
  %2017 = vmatprep.subr.mxu0 0.0
  %2018 = vmatpush2.msra.mxu0 0.0
  %2019 = vmatprep.subr.mxu0 0.0
  %2020 = vmatpush2.msra.mxu0 0.0
  %2021 = vmatprep.mubr.f32.mxu0 0.0
  %2022 = vmatmul.mubr.f32.gmra.mxu0 %v1955
  %v2023 = vpop.f32.mrf.mxu0
  %v2024 = vadd.f32 0.0, %v2023
  %v2025 = vpop.f32.mrf.mxu0
  %2026 = vdwg.mxu0
  %v2027 = vadd.f32 %v1939, %v2024
  %v2028 = vsub.f32 %v897, %v1779
  %v2029 = vand.u32 2147483647, %v2028
  %s2030 = scalar_lea.vmem %s9, 192
  %v2031 = vld [vmem:[%s2030] sm:$0xff]
  %v2032 = vld [vmem:[%s2030 + $0x8] sm:$0xff]
  %v2033 = vld [vmem:[%s2030 + $0x10] sm:$0xff]
  %v2034 = vld [vmem:[%s2030 + $0x18] sm:$0xff]
  %v2035 = vld [vmem:[%s2030 + $0x20] sm:$0xff]
  %v2036 = vld [vmem:[%s2030 + $0x28] sm:$0xff]
  %v2037 = vld [vmem:[%s2030 + $0x30] sm:$0xff]
  %v2038 = vld [vmem:[%s2030 + $0x38] sm:$0xff]
  %2040 = vrot.lane.b32.xlu0 %v2029, 64
  %v2041 = vpop.permute.xlu0 %2040
  %v2042 = vsel %vm139, %v2041, 0
  %2044 = vmatprep.subr.mxu0 0.0
  %2045 = vmatpush1.msra.mxu0 0.0
  %2046 = vmatprep.subr.mxu0 0.0
  %2047 = vmatpush1.msra.mxu0 0.0
  %2048 = vmatprep.subr.mxu0 0.0
  %2049 = vmatpush1.msra.mxu0 0.0
  %2050 = vmatprep.subr.mxu0 0.0
  %2051 = vmatpush1.msra.mxu0 0.0
  %2052 = vmatprep.subr.mxu0 0.0
  %2053 = vmatpush1.msra.mxu0 0.0
  %2054 = vmatprep.subr.mxu0 0.0
  %2055 = vmatpush1.msra.mxu0 0.0
  %2056 = vmatprep.subr.mxu0 0.0
  %2057 = vmatpush1.msra.mxu0 0.0
  %2058 = vmatprep.subr.mxu0 0.0
  %2059 = vmatpush1.msra.mxu0 0.0
  %2060 = vmatprep.subr.mxu0 0.0
  %2061 = vmatpush1.msra.mxu0 %v2038
  %2062 = vmatprep.subr.mxu0 0.0
  %2063 = vmatpush1.msra.mxu0 %v2037
  %2064 = vmatprep.subr.mxu0 0.0
  %2065 = vmatpush1.msra.mxu0 %v2036
  %2066 = vmatprep.subr.mxu0 0.0
  %2067 = vmatpush1.msra.mxu0 %v2035
  %2068 = vmatprep.subr.mxu0 0.0
  %2069 = vmatpush1.msra.mxu0 %v2034
  %2070 = vmatprep.subr.mxu0 0.0
  %2071 = vmatpush1.msra.mxu0 %v2033
  %2072 = vmatprep.subr.mxu0 0.0
  %2073 = vmatpush1.msra.mxu0 %v2032
  %2074 = vmatprep.subr.mxu0 0.0
  %2075 = vmatpush1.msra.mxu0 %v2031
  %2076 = vmatprep.subr.mxu0 0.0
  %2077 = vmatpush2.msra.mxu0 0.0
  %2078 = vmatprep.subr.mxu0 0.0
  %2079 = vmatpush2.msra.mxu0 0.0
  %2080 = vmatprep.subr.mxu0 0.0
  %2081 = vmatpush2.msra.mxu0 0.0
  %2082 = vmatprep.subr.mxu0 0.0
  %2083 = vmatpush2.msra.mxu0 0.0
  %2084 = vmatprep.subr.mxu0 0.0
  %2085 = vmatpush2.msra.mxu0 0.0
  %2086 = vmatprep.subr.mxu0 0.0
  %2087 = vmatpush2.msra.mxu0 0.0
  %2088 = vmatprep.subr.mxu0 0.0
  %2089 = vmatpush2.msra.mxu0 0.0
  %2090 = vmatprep.subr.mxu0 0.0
  %2091 = vmatpush2.msra.mxu0 0.0
  %2092 = vmatprep.subr.mxu0 0.0
  %2093 = vmatpush2.msra.mxu0 0.0
  %2094 = vmatprep.subr.mxu0 0.0
  %2095 = vmatpush2.msra.mxu0 0.0
  %2096 = vmatprep.subr.mxu0 0.0
  %2097 = vmatpush2.msra.mxu0 0.0
  %2098 = vmatprep.subr.mxu0 0.0
  %2099 = vmatpush2.msra.mxu0 0.0
  %2100 = vmatprep.subr.mxu0 0.0
  %2101 = vmatpush2.msra.mxu0 0.0
  %2102 = vmatprep.subr.mxu0 0.0
  %2103 = vmatpush2.msra.mxu0 0.0
  %2104 = vmatprep.subr.mxu0 0.0
  %2105 = vmatpush2.msra.mxu0 0.0
  %2106 = vmatprep.subr.mxu0 0.0
  %2107 = vmatpush2.msra.mxu0 0.0
  %2108 = vmatprep.mubr.f32.mxu0 0.0
  %2109 = vmatmul.mubr.f32.gmra.mxu0 %v2042
  %v2110 = vpop.f32.mrf.mxu0
  %v2111 = vadd.f32 0.0, %v2110
  %v2112 = vpop.f32.mrf.mxu0
  %2113 = vdwg.mxu0
  %v2114 = vadd.f32 %v2027, %v2111
  %v2115 = vld [vmem:[%s10] sm:$0x1]
  %v2117 = vlaneseq
  %v2118 = vshrl.u32 %v2117, 7
  %v2119 = vsub.s32 0, %v2118
  %v2120 = vrot.slane %v2115, %v2119
  %v2122 = vadd.f32 %v2114, %v2120
  %vm2123 = vcmp.gt.f32.partialorder %v2122, 0.0
  %v2124 = vmin.f32 %v2122, 0.0
  %v2125 = vmul.f32 %v2124, 1.442695
  %v2126 = vpow.pop %v2125
  %v2127 = vsub.f32 %v2126, 1.0
  %v2128 = vmul.f32 %v2127, 1.6732632
  %v2129 = vsel %vm2123, %v2122, %v2128
  %v2130 = vmul.f32 %v2129, 1.050701
  %v2131 = vld [vmem:[%s11] sm:$0xff]
  %v2132 = vld [vmem:[%s11 + $0x8] sm:$0xff]
  %v2133 = vld [vmem:[%s11 + $0x10] sm:$0xff]
  %v2134 = vld [vmem:[%s11 + $0x18] sm:$0xff]
  %v2135 = vld [vmem:[%s11 + $0x20] sm:$0xff]
  %v2136 = vld [vmem:[%s11 + $0x28] sm:$0xff]
  %v2137 = vld [vmem:[%s11 + $0x30] sm:$0xff]
  %v2138 = vld [vmem:[%s11 + $0x38] sm:$0xff]
  %v2139 = vld [vmem:[%s12] sm:$0x1]
  %v2141 = vlaneseq
  %v2142 = vshrl.u32 %v2141, 7
  %v2143 = vsub.s32 0, %v2142
  %v2144 = vrot.slane %v2139, %v2143
  %v2147 = vsel %vm139, %v2130, 0
  %2149 = vmatprep.subr.mxu0 0.0
  %2150 = vmatpush1.msra.mxu0 0.0
  %2151 = vmatprep.subr.mxu0 0.0
  %2152 = vmatpush1.msra.mxu0 0.0
  %2153 = vmatprep.subr.mxu0 0.0
  %2154 = vmatpush1.msra.mxu0 0.0
  %2155 = vmatprep.subr.mxu0 0.0
  %2156 = vmatpush1.msra.mxu0 0.0
  %2157 = vmatprep.subr.mxu0 0.0
  %2158 = vmatpush1.msra.mxu0 0.0
  %2159 = vmatprep.subr.mxu0 0.0
  %2160 = vmatpush1.msra.mxu0 0.0
  %2161 = vmatprep.subr.mxu0 0.0
  %2162 = vmatpush1.msra.mxu0 0.0
  %2163 = vmatprep.subr.mxu0 0.0
  %2164 = vmatpush1.msra.mxu0 0.0
  %2165 = vmatprep.subr.mxu0 0.0
  %2166 = vmatpush1.msra.mxu0 %v2138
  %2167 = vmatprep.subr.mxu0 0.0
  %2168 = vmatpush1.msra.mxu0 %v2137
  %2169 = vmatprep.subr.mxu0 0.0
  %2170 = vmatpush1.msra.mxu0 %v2136
  %2171 = vmatprep.subr.mxu0 0.0
  %2172 = vmatpush1.msra.mxu0 %v2135
  %2173 = vmatprep.subr.mxu0 0.0
  %2174 = vmatpush1.msra.mxu0 %v2134
  %2175 = vmatprep.subr.mxu0 0.0
  %2176 = vmatpush1.msra.mxu0 %v2133
  %2177 = vmatprep.subr.mxu0 0.0
  %2178 = vmatpush1.msra.mxu0 %v2132
  %2179 = vmatprep.subr.mxu0 0.0
  %2180 = vmatpush1.msra.mxu0 %v2131
  %2181 = vmatprep.subr.mxu0 0.0
  %2182 = vmatpush2.msra.mxu0 0.0
  %2183 = vmatprep.subr.mxu0 0.0
  %2184 = vmatpush2.msra.mxu0 0.0
  %2185 = vmatprep.subr.mxu0 0.0
  %2186 = vmatpush2.msra.mxu0 0.0
  %2187 = vmatprep.subr.mxu0 0.0
  %2188 = vmatpush2.msra.mxu0 0.0
  %2189 = vmatprep.subr.mxu0 0.0
  %2190 = vmatpush2.msra.mxu0 0.0
  %2191 = vmatprep.subr.mxu0 0.0
  %2192 = vmatpush2.msra.mxu0 0.0
  %2193 = vmatprep.subr.mxu0 0.0
  %2194 = vmatpush2.msra.mxu0 0.0
  %2195 = vmatprep.subr.mxu0 0.0
  %2196 = vmatpush2.msra.mxu0 0.0
  %2197 = vmatprep.subr.mxu0 0.0
  %2198 = vmatpush2.msra.mxu0 0.0
  %2199 = vmatprep.subr.mxu0 0.0
  %2200 = vmatpush2.msra.mxu0 0.0
  %2201 = vmatprep.subr.mxu0 0.0
  %2202 = vmatpush2.msra.mxu0 0.0
  %2203 = vmatprep.subr.mxu0 0.0
  %2204 = vmatpush2.msra.mxu0 0.0
  %2205 = vmatprep.subr.mxu0 0.0
  %2206 = vmatpush2.msra.mxu0 0.0
  %2207 = vmatprep.subr.mxu0 0.0
  %2208 = vmatpush2.msra.mxu0 0.0
  %2209 = vmatprep.subr.mxu0 0.0
  %2210 = vmatpush2.msra.mxu0 0.0
  %2211 = vmatprep.subr.mxu0 0.0
  %2212 = vmatpush2.msra.mxu0 0.0
  %2213 = vmatprep.mubr.f32.mxu0 0.0
  %2214 = vmatmul.mubr.f32.gmra.mxu0 %v2147
  %v2215 = vpop.f32.mrf.mxu0
  %v2216 = vadd.f32 %v2144, %v2215
  %v2217 = vpop.f32.mrf.mxu0
  %2218 = vdwg.mxu0
  %vm2219 = vcmp.gt.f32.partialorder %v2216, 0.0
  %v2220 = vmin.f32 %v2216, 0.0
  %v2221 = vmul.f32 %v2220, 1.442695
  %v2222 = vpow.pop %v2221
  %v2223 = vsub.f32 %v2222, 1.0
  %v2224 = vmul.f32 %v2223, 1.6732632
  %v2225 = vsel %vm2219, %v2216, %v2224
  %v2226 = vmul.f32 %v2225, 1.050701
  %vm2227 = vcmask 31744
  %2228 = vst.msk [vmem:[%s13] sm:$0xff] %vm2227, %v2226
  // Predicated region
  $region54: #{_lambda_.1} parent=0 // pred_check
    _
  $region55: #{_lambda_.1} parent=0 // pred_check_branch
    %2230 = sbr.rel (0) target = $region57
  $region56: #{_lambda_.1} parent=0 // pred_region
    _
  $region57: #{_lambda_.1} parent=0 // pred_fallthru
    _
  // Predicated region
  $region58: #{_lambda_.1} parent=0 // pred_check
    _
  $region59: #{_lambda_.1} parent=0 // pred_check_branch
    %2232 = sbr.rel (0) target = $region61
  $region60: #{_lambda_.1} parent=0 // pred_region
    _
  $region61: #{_lambda_.1} parent=0 // pred_fallthru
    _

</llo_original>
